<compile_context>
chip_gen: v5e
topology: v5e:2x2
jax: 0.10.0
libtpu: 0.0.40
codegen_flags: <defaults>
</compile_context>

<pallas_src>
import functools

import jax
import jax.numpy as jnp
import numpy as np
from jax.experimental import pallas as pl
from jax.experimental.pallas import tpu as pltpu

EPS = 1e-5
LANE = 128


# ----------------------------------------------------------------------------
# In-kernel helpers
# ----------------------------------------------------------------------------
def _mxu_dot_f32(p, w_hilo_ref):
    """f32 x f32 matmul via 3 bf16 MXU passes (Precision.HIGH numerics).

    p:          (M, K) f32 value
    w_hilo_ref: (2, K, N) bf16 ref -- [0] = hi(w), [1] = bf16(w - hi(w))
    """
    p_hi = p.astype(jnp.bfloat16)
    p_lo = (p - p_hi.astype(jnp.float32)).astype(jnp.bfloat16)
    w_hi = w_hilo_ref[0]
    w_lo = w_hilo_ref[1]
    acc = jnp.dot(p_hi, w_hi, preferred_element_type=jnp.float32)
    acc = acc + jnp.dot(p_lo, w_hi, preferred_element_type=jnp.float32)
    acc = acc + jnp.dot(p_hi, w_lo, preferred_element_type=jnp.float32)
    return acc


# ----------------------------------------------------------------------------
# Fused Up / DoubleConv kernel
# ----------------------------------------------------------------------------
def up_doubleconv_kernel(x2_ref, x1_ref, w1_ref, w2_ref, bn_ref, o_ref,
                         h1_ref, h2_ref, coef_ref,
                         *, n_batch, H, W, cout, eps):
    """grid = (3 phases, N); phases iterate slowest:

      phase 0: conv1 over the fused channel-concat of (x2, up(x1))  -> h1_ref[n]
      phase 1: BN1 (batch stats) + ReLU, then conv2                 -> h2_ref[n]
      phase 2: BN2 (batch stats) + ReLU                             -> o_ref[n]
    """
    phase = pl.program_id(0)
    n = pl.program_id(1)
    HW = H * W
    cpad = o_ref.shape[-1]

    def im2col_cols(xp):
        # xp: (H+2, W+2, C) f32 value -> list of 9 (H*W, C) columns, ordered
        # (ky, kx, c) to match the (3, 3, Cin, Cout) -> (9*Cin, Cout) weights.
        C = xp.shape[-1]
        return [xp[ky:ky + H, kx:kx + W, :].reshape(HW, C)
                for ky in range(3) for kx in range(3)]

    def batch_scale_shift(raw_ref, gamma, beta):
        # Two-pass batch statistics over the whole VMEM-resident conv output.
        x = raw_ref[...].reshape(n_batch * HW, cpad)
        mean = jnp.mean(x, axis=0, keepdims=True)                        # (1, cpad)
        var = jnp.mean(jnp.square(x - mean), axis=0, keepdims=True)      # biased
        inv = jax.lax.rsqrt(var + eps)
        scale = gamma * inv
        shift = beta - mean * scale
        return scale, shift

    # ---- phase 0: conv1 (concat fused via split inputs / reordered weights) --
    @pl.when(phase == 0)
    def _():
        patch = jnp.concatenate(
            im2col_cols(x2_ref[0]) + im2col_cols(x1_ref[0]), axis=-1)     # (HW, 9*Cin)
        h1_ref[n] = _mxu_dot_f32(patch, w1_ref)                           # (HW, cpad)

    # ---- phase 1: BN1 + ReLU + conv2 -----------------------------------------
    @pl.when(phase == 1)
    def _():
        @pl.when(n == 0)
        def _():
            scale, shift = batch_scale_shift(h1_ref, bn_ref[0:1, :], bn_ref[1:2, :])
            coef_ref[0:1, :] = scale
            coef_ref[1:2, :] = shift

        a = jnp.maximum(h1_ref[n] * coef_ref[0:1, :] + coef_ref[1:2, :], 0.0)
        a = a[:, :cout].reshape(H, W, cout)
        # zero halo for the 'same' 3x3 conv (built with concats, stays in VMEM)
        zw = jnp.zeros((H, 1, cout), jnp.float32)
        a = jnp.concatenate([zw, a, zw], axis=1)                          # (H, W+2, C)
        zh = jnp.zeros((1, W + 2, cout), jnp.float32)
        a = jnp.concatenate([zh, a, zh], axis=0)                          # (H+2, W+2, C)
        patch = jnp.concatenate(im2col_cols(a), axis=-1)                  # (HW, 9*cout)
        h2_ref[n] = _mxu_dot_f32(patch, w2_ref)                           # (HW, cpad)

    # ---- phase 2: BN2 + ReLU -> lane-dense output -----------------------------
    @pl.when(phase == 2)
    def _():
        @pl.when(n == 0)
        def _():
            scale, shift = batch_scale_shift(h2_ref, bn_ref[2:3, :], bn_ref[3:4, :])
            coef_ref[2:3, :] = scale
            coef_ref[3:4, :] = shift

        o_ref[n] = jnp.maximum(h2_ref[n] * coef_ref[2:3, :] + coef_ref[3:4, :], 0.0)


# ----------------------------------------------------------------------------
# Wrapper (glue in plain JAX: upsample, layout, weight repacking)
# ----------------------------------------------------------------------------
def _split_hi_lo(w):
    """(K, N) f32 -> (2, K, N) bf16 hi/lo stack for 3-pass f32 matmuls."""
    hi = w.astype(jnp.bfloat16)
    lo = (w - hi.astype(jnp.float32)).astype(jnp.bfloat16)
    return jnp.stack([hi, lo], axis=0)


def bilinear_upsample_x2(x):
    """nn.Upsample(scale_factor=2, mode='bilinear', align_corners=True), NCHW."""
    N, C, H, W = x.shape
    Ho, Wo = 2 * H, 2 * W
    ys = jnp.arange(Ho, dtype=jnp.float32) * ((H - 1) / (Ho - 1))
    xs = jnp.arange(Wo, dtype=jnp.float32) * ((W - 1) / (Wo - 1))
    y0 = jnp.clip(jnp.floor(ys).astype(jnp.int32), 0, H - 1)
    x0 = jnp.clip(jnp.floor(xs).astype(jnp.int32), 0, W - 1)
    y1 = jnp.clip(y0 + 1, 0, H - 1)
    x1 = jnp.clip(x0 + 1, 0, W - 1)
    wy = (ys - y0.astype(jnp.float32))[None, None, :, None]
    wx = (xs - x0.astype(jnp.float32))[None, None, None, :]
    g = lambda yi, xi: x[:, :, yi, :][:, :, :, xi]
    top = g(y0, x0) * (1 - wx) + g(y0, x1) * wx
    bot = g(y1, x0) * (1 - wx) + g(y1, x1) * wx
    return top * (1 - wy) + bot * wy


def up_forward(x1_nchw, x2_nchw, params):
    """Pallas-backed equivalent of Up.forward(x1, x2) (bilinear=True), NCHW in/out."""
    N, c1, _, _ = x1_nchw.shape
    _, c2, H, W = x2_nchw.shape
    cout = params["w1"].shape[3]
    cin = c1 + c2
    cpad = max(LANE, ((cout + LANE - 1) // LANE) * LANE)
    HW = H * W

    # --- glue: upsample, center pad, NHWC + 1px conv halo (concat stays fused)
    x1u = bilinear_upsample_x2(x1_nchw)
    dy = H - x1u.shape[2]
    dx = W - x1u.shape[3]
    x1u = jnp.pad(x1u, ((0, 0), (0, 0),
                        (dy // 2, dy - dy // 2), (dx // 2, dx - dx // 2)))
    halo = lambda t: jnp.pad(jnp.transpose(t, (0, 2, 3, 1)),
                             ((0, 0), (1, 1), (1, 1), (0, 0)))
    x2p = halo(x2_nchw)          # (N, H+2, W+2, c2)   skip connection
    x1p = halo(x1u)              # (N, H+2, W+2, c1)   upsampled features

    # --- weights -> im2col layout; concat fusion => split/reorder w1 by source
    w1 = params["w1"]            # (3, 3, cin, cout) HWIO; input channels = [x2, x1]
    w1r = jnp.concatenate([w1[:, :, :c2, :].reshape(9 * c2, cout),
                           w1[:, :, c2:, :].reshape(9 * c1, cout)], axis=0)
    w1r = _split_hi_lo(jnp.pad(w1r, ((0, 0), (0, cpad - cout))))          # (2, 9*cin, cpad)
    w2r = _split_hi_lo(jnp.pad(params["w2"].reshape(9 * cout, cout),
                               ((0, 0), (0, cpad - cout))))               # (2, 9*cout, cpad)

    bn = jnp.concatenate([
        jnp.pad(params["g1"], ((0, 0), (0, cpad - cout)), constant_values=1.0),
        jnp.pad(params["b1"], ((0, 0), (0, cpad - cout))),
        jnp.pad(params["g2"], ((0, 0), (0, cpad - cout)), constant_values=1.0),
        jnp.pad(params["b2"], ((0, 0), (0, cpad - cout))),
    ], axis=0).astype(jnp.float32)                                        # (4, cpad)

    kernel = functools.partial(up_doubleconv_kernel,
                               n_batch=N, H=H, W=W, cout=cout, eps=EPS)

    out_pad = pl.pallas_call(
        kernel,
        out_shape=jax.ShapeDtypeStruct((N, HW, cpad), jnp.float32),
        grid=(3, N),   # (phase, batch); phases iterate slowest
        in_specs=[
            pl.BlockSpec((1, H + 2, W + 2, c2), lambda p, n: (n, 0, 0, 0)),
            pl.BlockSpec((1, H + 2, W + 2, c1), lambda p, n: (n, 0, 0, 0)),
            pl.BlockSpec((2, 9 * cin, cpad), lambda p, n: (0, 0, 0)),
            pl.BlockSpec((2, 9 * cout, cpad), lambda p, n: (0, 0, 0)),
            pl.BlockSpec((4, cpad), lambda p, n: (0, 0)),
        ],
        # Whole (small) output block stays VMEM-resident; lane-dense stores.
        out_specs=pl.BlockSpec((N, HW, cpad), lambda p, n: (0, 0, 0)),
        scratch_shapes=[
            pltpu.VMEM((N, HW, cpad), jnp.float32),   # conv1 raw output (resident)
            pltpu.VMEM((N, HW, cpad), jnp.float32),   # conv2 raw output (resident)
            pltpu.VMEM((8, cpad), jnp.float32),       # BN scale/shift for both layers
        ],
        compiler_params=pltpu.CompilerParams(
            dimension_semantics=("arbitrary", "arbitrary"),
            vmem_limit_bytes=32 * 1024 * 1024),
    )(x2p, x1p, w1r, w2r, bn)

    out = out_pad[:, :, :cout].reshape(N, H, W, cout)
    return jnp.transpose(out, (0, 3, 1, 2))           # NHWC -> NCHW


# ----------------------------------------------------------------------------
# Pure-JAX reference (correctness check)
# ----------------------------------------------------------------------------
def _conv_ref(x_nchw, w_hwio):
    w_oihw = jnp.transpose(w_hwio, (3, 2, 0, 1))
    return jax.lax.conv_general_dilated(
        x_nchw, w_oihw, (1, 1), ((1, 1), (1, 1)),
        dimension_numbers=("NCHW", "OIHW", "NCHW"),
        precision=jax.lax.Precision.HIGHEST)


def _bn_relu_ref(y, gamma, beta):
    mean = y.mean(axis=(0, 2, 3), keepdims=True)
    var = y.var(axis=(0, 2, 3), keepdims=True)         # biased, like PyTorch BN
    yn = (y - mean) * jax.lax.rsqrt(var + EPS)
    return jnp.maximum(yn * gamma[None, :, None, None] + beta[None, :, None, None], 0.0)


def up_forward_ref(x1_nchw, x2_nchw, params):
    x1u = bilinear_upsample_x2(x1_nchw)
    dy = x2_nchw.shape[2] - x1u.shape[2]
    dx = x2_nchw.shape[3] - x1u.shape[3]
    x1p = jnp.pad(x1u, ((0, 0), (0, 0),
                        (dy // 2, dy - dy // 2), (dx // 2, dx - dx // 2)))
    x = jnp.concatenate([x2_nchw, x1p], axis=1)
    h = _bn_relu_ref(_conv_ref(x, params["w1"]), params["g1"][0], params["b1"][0])
    h = _bn_relu_ref(_conv_ref(h, params["w2"]), params["g2"][0], params["b2"][0])
    return h


# ----------------------------------------------------------------------------
if __name__ == "__main__":
    key = jax.random.PRNGKey(0)
    k1, k2, k3, k4, k5, k6, k7, k8 = jax.random.split(key, 8)

    in_channels, out_channels = 8, 4        # Up(in_channels=8, out_channels=4, bilinear=True)
    N, H1, W1 = 2, 8, 8                     # x1: low-res features
    H2, W2 = 16, 16                         # x2: skip connection

    x1 = jax.random.normal(k1, (N, in_channels // 2, H1, W1), jnp.float32)
    x2 = jax.random.normal(k2, (N, in_channels // 2, H2, W2), jnp.float32)

    params = {
        # conv weights stored HWIO: (3, 3, Cin, Cout); Conv2d has bias=False.
        "w1": 0.3 * jax.random.normal(k3, (3, 3, in_channels, out_channels), jnp.float32),
        "g1": 1.0 + 0.1 * jax.random.normal(k4, (1, out_channels), jnp.float32),
        "b1": 0.1 * jax.random.normal(k5, (1, out_channels), jnp.float32),
        "w2": 0.3 * jax.random.normal(k6, (3, 3, out_channels, out_channels), jnp.float32),
        "g2": 1.0 + 0.1 * jax.random.normal(k7, (1, out_channels), jnp.float32),
        "b2": 0.1 * jax.random.normal(k8, (1, out_channels), jnp.float32),
    }

    out = jax.block_until_ready(up_forward(x1, x2, params))
    ref = jax.block_until_ready(up_forward_ref(x1, x2, params))

    assert out.shape == (N, out_channels, H2, W2), out.shape
    # Tolerance accounts for 3-pass bf16 (Precision.HIGH-equivalent) matmuls
    # vs. the Precision.HIGHEST f32 reference; observed error is ~1e-4.
    err = float(np.max(np.abs(np.asarray(out) - np.asarray(ref))))
    assert np.allclose(np.asarray(out), np.asarray(ref), rtol=2e-3, atol=2e-3), err

    print("KERNEL_OK")
</pallas_src>

<mosaic_0001>
module attributes {stable_mosaic.version = 11 : i64} {
  func.func @up_doubleconv_kernel(%arg0: i32, %arg1: i32, %arg2: memref<1x18x18x4xf32, #tpu.memory_space<vmem>>, %arg3: memref<1x18x18x4xf32, #tpu.memory_space<vmem>>, %arg4: memref<2x72x128xbf16, #tpu.memory_space<vmem>>, %arg5: memref<2x36x128xbf16, #tpu.memory_space<vmem>>, %arg6: memref<4x128xf32, #tpu.memory_space<vmem>>, %arg7: memref<2x256x128xf32, #tpu.memory_space<vmem>>, %arg8: memref<2x256x128xf32, #tpu.memory_space<vmem>>, %arg9: memref<2x256x128xf32, #tpu.memory_space<vmem>>, %arg10: memref<8x128xf32, #tpu.memory_space<vmem>>) attributes {dimension_semantics = [#tpu.dimension_semantics<arbitrary>, #tpu.dimension_semantics<arbitrary>], iteration_bounds = array<i64: 3, 2>, scalar_prefetch = 0 : i64, scratch_operands = 3 : i64, tpu.core_type = #tpu.core_type<tc>, window_params = [{transform_indices = @transform_0, window_bounds = array<i64: 1, 18, 18, 4>}, {transform_indices = @transform_1, window_bounds = array<i64: 1, 18, 18, 4>}, {pipeline_mode = #tpu.pipeline_mode<synchronous>, transform_indices = @transform_2, window_bounds = array<i64: 2, 72, 128>}, {pipeline_mode = #tpu.pipeline_mode<synchronous>, transform_indices = @transform_3, window_bounds = array<i64: 2, 36, 128>}, {pipeline_mode = #tpu.pipeline_mode<synchronous>, transform_indices = @transform_4, window_bounds = array<i64: 4, 128>}, {pipeline_mode = #tpu.pipeline_mode<synchronous>, transform_indices = @transform_5, window_bounds = array<i64: 2, 256, 128>}]} {
    %c0_i32 = arith.constant 0 : i32
    %0 = arith.cmpi eq, %arg0, %c0_i32 : i32
    %1 = arith.extui %0 : i1 to i32
    %c0_i32_0 = arith.constant 0 : i32
    %2 = arith.cmpi ne, %1, %c0_i32_0 : i32
    scf.if %2 {
      %c0 = arith.constant 0 : index
      %c0_3 = arith.constant 0 : index
      %c0_4 = arith.constant 0 : index
      %c0_5 = arith.constant 0 : index
      %9 = vector.load %arg2[%c0, %c0_3, %c0_4, %c0_5] : memref<1x18x18x4xf32, #tpu.memory_space<vmem>>, vector<1x18x18x4xf32>
      %10 = vector.shape_cast %9 : vector<1x18x18x4xf32> to vector<18x18x4xf32>
      %11 = vector.extract_strided_slice %10 {offsets = [0, 0, 0], sizes = [16, 16, 4], strides = [1, 1, 1]} : vector<18x18x4xf32> to vector<16x16x4xf32>
      %12 = vector.shape_cast %11 : vector<16x16x4xf32> to vector<256x4xf32>
      %13 = vector.extract_strided_slice %10 {offsets = [0, 1, 0], sizes = [16, 16, 4], strides = [1, 1, 1]} : vector<18x18x4xf32> to vector<16x16x4xf32>
      %14 = vector.shape_cast %13 : vector<16x16x4xf32> to vector<256x4xf32>
      %15 = vector.extract_strided_slice %10 {offsets = [0, 2, 0], sizes = [16, 16, 4], strides = [1, 1, 1]} : vector<18x18x4xf32> to vector<16x16x4xf32>
      %16 = vector.shape_cast %15 : vector<16x16x4xf32> to vector<256x4xf32>
      %17 = vector.extract_strided_slice %10 {offsets = [1, 0, 0], sizes = [16, 16, 4], strides = [1, 1, 1]} : vector<18x18x4xf32> to vector<16x16x4xf32>
      %18 = vector.shape_cast %17 : vector<16x16x4xf32> to vector<256x4xf32>
      %19 = vector.extract_strided_slice %10 {offsets = [1, 1, 0], sizes = [16, 16, 4], strides = [1, 1, 1]} : vector<18x18x4xf32> to vector<16x16x4xf32>
      %20 = vector.shape_cast %19 : vector<16x16x4xf32> to vector<256x4xf32>
      %21 = vector.extract_strided_slice %10 {offsets = [1, 2, 0], sizes = [16, 16, 4], strides = [1, 1, 1]} : vector<18x18x4xf32> to vector<16x16x4xf32>
      %22 = vector.shape_cast %21 : vector<16x16x4xf32> to vector<256x4xf32>
      %23 = vector.extract_strided_slice %10 {offsets = [2, 0, 0], sizes = [16, 16, 4], strides = [1, 1, 1]} : vector<18x18x4xf32> to vector<16x16x4xf32>
      %24 = vector.shape_cast %23 : vector<16x16x4xf32> to vector<256x4xf32>
      %25 = vector.extract_strided_slice %10 {offsets = [2, 1, 0], sizes = [16, 16, 4], strides = [1, 1, 1]} : vector<18x18x4xf32> to vector<16x16x4xf32>
      %26 = vector.shape_cast %25 : vector<16x16x4xf32> to vector<256x4xf32>
      %27 = vector.extract_strided_slice %10 {offsets = [2, 2, 0], sizes = [16, 16, 4], strides = [1, 1, 1]} : vector<18x18x4xf32> to vector<16x16x4xf32>
      %28 = vector.shape_cast %27 : vector<16x16x4xf32> to vector<256x4xf32>
      %c0_6 = arith.constant 0 : index
      %c0_7 = arith.constant 0 : index
      %c0_8 = arith.constant 0 : index
      %c0_9 = arith.constant 0 : index
      %29 = vector.load %arg3[%c0_6, %c0_7, %c0_8, %c0_9] : memref<1x18x18x4xf32, #tpu.memory_space<vmem>>, vector<1x18x18x4xf32>
      %30 = vector.shape_cast %29 : vector<1x18x18x4xf32> to vector<18x18x4xf32>
      %31 = vector.extract_strided_slice %30 {offsets = [0, 0, 0], sizes = [16, 16, 4], strides = [1, 1, 1]} : vector<18x18x4xf32> to vector<16x16x4xf32>
      %32 = vector.shape_cast %31 : vector<16x16x4xf32> to vector<256x4xf32>
      %33 = vector.extract_strided_slice %30 {offsets = [0, 1, 0], sizes = [16, 16, 4], strides = [1, 1, 1]} : vector<18x18x4xf32> to vector<16x16x4xf32>
      %34 = vector.shape_cast %33 : vector<16x16x4xf32> to vector<256x4xf32>
      %35 = vector.extract_strided_slice %30 {offsets = [0, 2, 0], sizes = [16, 16, 4], strides = [1, 1, 1]} : vector<18x18x4xf32> to vector<16x16x4xf32>
      %36 = vector.shape_cast %35 : vector<16x16x4xf32> to vector<256x4xf32>
      %37 = vector.extract_strided_slice %30 {offsets = [1, 0, 0], sizes = [16, 16, 4], strides = [1, 1, 1]} : vector<18x18x4xf32> to vector<16x16x4xf32>
      %38 = vector.shape_cast %37 : vector<16x16x4xf32> to vector<256x4xf32>
      %39 = vector.extract_strided_slice %30 {offsets = [1, 1, 0], sizes = [16, 16, 4], strides = [1, 1, 1]} : vector<18x18x4xf32> to vector<16x16x4xf32>
      %40 = vector.shape_cast %39 : vector<16x16x4xf32> to vector<256x4xf32>
      %41 = vector.extract_strided_slice %30 {offsets = [1, 2, 0], sizes = [16, 16, 4], strides = [1, 1, 1]} : vector<18x18x4xf32> to vector<16x16x4xf32>
      %42 = vector.shape_cast %41 : vector<16x16x4xf32> to vector<256x4xf32>
      %43 = vector.extract_strided_slice %30 {offsets = [2, 0, 0], sizes = [16, 16, 4], strides = [1, 1, 1]} : vector<18x18x4xf32> to vector<16x16x4xf32>
      %44 = vector.shape_cast %43 : vector<16x16x4xf32> to vector<256x4xf32>
      %45 = vector.extract_strided_slice %30 {offsets = [2, 1, 0], sizes = [16, 16, 4], strides = [1, 1, 1]} : vector<18x18x4xf32> to vector<16x16x4xf32>
      %46 = vector.shape_cast %45 : vector<16x16x4xf32> to vector<256x4xf32>
      %47 = vector.extract_strided_slice %30 {offsets = [2, 2, 0], sizes = [16, 16, 4], strides = [1, 1, 1]} : vector<18x18x4xf32> to vector<16x16x4xf32>
      %48 = vector.shape_cast %47 : vector<16x16x4xf32> to vector<256x4xf32>
      %49 = tpu.concatenate %12, %14, %16, %18, %20, %22, %24, %26, %28, %32, %34, %36, %38, %40, %42, %44 in 1 : vector<256x4xf32>, vector<256x4xf32>, vector<256x4xf32>, vector<256x4xf32>, vector<256x4xf32>, vector<256x4xf32>, vector<256x4xf32>, vector<256x4xf32>, vector<256x4xf32>, vector<256x4xf32>, vector<256x4xf32>, vector<256x4xf32>, vector<256x4xf32>, vector<256x4xf32>, vector<256x4xf32>, vector<256x4xf32> -> vector<256x64xf32>
      %50 = tpu.concatenate %46, %48 in 1 : vector<256x4xf32>, vector<256x4xf32> -> vector<256x8xf32>
      %51 = tpu.concatenate %49, %50 in 1 : vector<256x64xf32>, vector<256x8xf32> -> vector<256x72xf32>
      %52 = arith.truncf %51 : vector<256x72xf32> to vector<256x72xbf16>
      %53 = arith.extf %52 : vector<256x72xbf16> to vector<256x72xf32>
      %54 = arith.subf %51, %53 : vector<256x72xf32>
      %55 = arith.truncf %54 : vector<256x72xf32> to vector<256x72xbf16>
      %c0_10 = arith.constant 0 : index
      %c0_11 = arith.constant 0 : index
      %c0_12 = arith.constant 0 : index
      %56 = vector.load %arg4[%c0_10, %c0_11, %c0_12] : memref<2x72x128xbf16, #tpu.memory_space<vmem>>, vector<1x72x128xbf16>
      %57 = vector.shape_cast %56 : vector<1x72x128xbf16> to vector<72x128xbf16>
      %c1 = arith.constant 1 : index
      %c0_13 = arith.constant 0 : index
      %c0_14 = arith.constant 0 : index
      %58 = vector.load %arg4[%c1, %c0_13, %c0_14] : memref<2x72x128xbf16, #tpu.memory_space<vmem>>, vector<1x72x128xbf16>
      %59 = vector.shape_cast %58 : vector<1x72x128xbf16> to vector<72x128xbf16>
      %cst = arith.constant dense<0.000000e+00> : vector<256x128xf32>
      %60 = tpu.matmul %52, %57, %cst {dimension_numbers = #tpu.dot_dimension_numbers<[1], [0], [0], [1], [0, 0, 1, 1], [], []>} : vector<256x72xbf16>, vector<72x128xbf16>, vector<256x128xf32> -> vector<256x128xf32>
      %cst_15 = arith.constant dense<0.000000e+00> : vector<256x128xf32>
      %61 = tpu.matmul %55, %57, %cst_15 {dimension_numbers = #tpu.dot_dimension_numbers<[1], [0], [0], [1], [0, 0, 1, 1], [], []>} : vector<256x72xbf16>, vector<72x128xbf16>, vector<256x128xf32> -> vector<256x128xf32>
      %62 = arith.addf %60, %61 : vector<256x128xf32>
      %cst_16 = arith.constant dense<0.000000e+00> : vector<256x128xf32>
      %63 = tpu.matmul %52, %59, %cst_16 {dimension_numbers = #tpu.dot_dimension_numbers<[1], [0], [0], [1], [0, 0, 1, 1], [], []>} : vector<256x72xbf16>, vector<72x128xbf16>, vector<256x128xf32> -> vector<256x128xf32>
      %64 = arith.addf %62, %63 : vector<256x128xf32>
      %65 = arith.index_cast %arg1 : i32 to index
      %c0_17 = arith.constant 0 : index
      %c0_18 = arith.constant 0 : index
      %66 = vector.load %arg8[%65, %c0_17, %c0_18] : memref<2x256x128xf32, #tpu.memory_space<vmem>>, vector<1x256x128xf32>
      %67 = vector.shape_cast %66 : vector<1x256x128xf32> to vector<256x128xf32>
      %68 = vector.shape_cast %64 : vector<256x128xf32> to vector<1x256x128xf32>
      tpu.vector_store %arg8[%65, %c0_17, %c0_18], %68 {strides = array<i32>} : memref<2x256x128xf32, #tpu.memory_space<vmem>>, vector<1x256x128xf32>,
    } else {
    }
    %c1_i32 = arith.constant 1 : i32
    %3 = arith.cmpi eq, %arg0, %c1_i32 : i32
    %4 = arith.extui %3 : i1 to i32
    %c0_i32_1 = arith.constant 0 : i32
    %5 = arith.cmpi ne, %4, %c0_i32_1 : i32
    scf.if %5 {
      %c0_i32_3 = arith.constant 0 : i32
      %9 = arith.cmpi eq, %arg1, %c0_i32_3 : i32
      %10 = arith.extui %9 : i1 to i32
      %c0_i32_4 = arith.constant 0 : i32
      %11 = arith.cmpi ne, %10, %c0_i32_4 : i32
      scf.if %11 {
        %c0_22 = arith.constant 0 : index
        %c0_23 = arith.constant 0 : index
        %65 = vector.load %arg6[%c0_22, %c0_23] : memref<4x128xf32, #tpu.memory_space<vmem>>, vector<1x128xf32>
        %c1_24 = arith.constant 1 : index
        %c0_25 = arith.constant 0 : index
        %66 = vector.load %arg6[%c1_24, %c0_25] : memref<4x128xf32, #tpu.memory_space<vmem>>, vector<1x128xf32>
        %c0_26 = arith.constant 0 : index
        %c0_27 = arith.constant 0 : index
        %c0_28 = arith.constant 0 : index
        %67 = vector.load %arg8[%c0_26, %c0_27, %c0_28] : memref<2x256x128xf32, #tpu.memory_space<vmem>>, vector<2x256x128xf32>
        %68 = vector.shape_cast %67 : vector<2x256x128xf32> to vector<512x128xf32>
        %cst_29 = arith.constant dense<0.000000e+00> : vector<128xf32>
        %69 = vector.multi_reduction <add>, %68, %cst_29 [0] : vector<512x128xf32> to vector<128xf32>
        %70 = vector.shape_cast %69 : vector<128xf32> to vector<1x128xf32>
        %cst_30 = arith.constant 5.120000e+02 : f32
        %71 = vector.broadcast %cst_30 : f32 to vector<1x128xf32>
        %72 = arith.divf %70, %71 : vector<1x128xf32>
        %73 = vector.broadcast %72 : vector<1x128xf32> to vector<512x128xf32>
        %74 = arith.subf %68, %73 : vector<512x128xf32>
        %75 = arith.mulf %74, %74 : vector<512x128xf32>
        %cst_31 = arith.constant dense<0.000000e+00> : vector<128xf32>
        %76 = vector.multi_reduction <add>, %75, %cst_31 [0] : vector<512x128xf32> to vector<128xf32>
        %77 = vector.shape_cast %76 : vector<128xf32> to vector<1x128xf32>
        %cst_32 = arith.constant 5.120000e+02 : f32
        %78 = vector.broadcast %cst_32 : f32 to vector<1x128xf32>
        %79 = arith.divf %77, %78 : vector<1x128xf32>
        %cst_33 = arith.constant 9.99999974E-6 : f32
        %80 = vector.broadcast %cst_33 : f32 to vector<1x128xf32>
        %81 = arith.addf %79, %80 : vector<1x128xf32>
        %82 = math.rsqrt %81 : vector<1x128xf32>
        %83 = arith.mulf %65, %82 : vector<1x128xf32>
        %84 = arith.mulf %72, %83 : vector<1x128xf32>
        %85 = arith.subf %66, %84 : vector<1x128xf32>
        %c0_34 = arith.constant 0 : index
        %c0_35 = arith.constant 0 : index
        %86 = vector.load %arg10[%c0_34, %c0_35] : memref<8x128xf32, #tpu.memory_space<vmem>>, vector<1x128xf32>
        tpu.vector_store %arg10[%c0_34, %c0_35], %83 {strides = array<i32>} : memref<8x128xf32, #tpu.memory_space<vmem>>, vector<1x128xf32>,
        %c1_36 = arith.constant 1 : index
        %c0_37 = arith.constant 0 : index
        %87 = vector.load %arg10[%c1_36, %c0_37] : memref<8x128xf32, #tpu.memory_space<vmem>>, vector<1x128xf32>
        tpu.vector_store %arg10[%c1_36, %c0_37], %85 {strides = array<i32>} : memref<8x128xf32, #tpu.memory_space<vmem>>, vector<1x128xf32>,
      } else {
      }
      %12 = arith.index_cast %arg1 : i32 to index
      %c0 = arith.constant 0 : index
      %c0_5 = arith.constant 0 : index
      %13 = vector.load %arg8[%12, %c0, %c0_5] : memref<2x256x128xf32, #tpu.memory_space<vmem>>, vector<1x256x128xf32>
      %14 = vector.shape_cast %13 : vector<1x256x128xf32> to vector<256x128xf32>
      %c0_6 = arith.constant 0 : index
      %c0_7 = arith.constant 0 : index
      %15 = vector.load %arg10[%c0_6, %c0_7] : memref<8x128xf32, #tpu.memory_space<vmem>>, vector<1x128xf32>
      %16 = vector.broadcast %15 : vector<1x128xf32> to vector<256x128xf32>
      %17 = arith.mulf %14, %16 : vector<256x128xf32>
      %c1 = arith.constant 1 : index
      %c0_8 = arith.constant 0 : index
      %18 = vector.load %arg10[%c1, %c0_8] : memref<8x128xf32, #tpu.memory_space<vmem>>, vector<1x128xf32>
      %19 = vector.broadcast %18 : vector<1x128xf32> to vector<256x128xf32>
      %20 = arith.addf %17, %19 : vector<256x128xf32>
      %cst = arith.constant 0.000000e+00 : f32
      %21 = vector.broadcast %cst : f32 to vector<256x128xf32>
      %22 = arith.maximumf %20, %21 : vector<256x128xf32>
      %23 = vector.extract_strided_slice %22 {offsets = [0, 0], sizes = [256, 4], strides = [1, 1]} : vector<256x128xf32> to vector<256x4xf32>
      %24 = vector.shape_cast %23 : vector<256x4xf32> to vector<16x16x4xf32>
      %cst_9 = arith.constant 0.000000e+00 : f32
      %25 = vector.broadcast %cst_9 : f32 to vector<16x1x4xf32>
      %26 = tpu.concatenate %25, %24, %25 in 1 : vector<16x1x4xf32>, vector<16x16x4xf32>, vector<16x1x4xf32> -> vector<16x18x4xf32>
      %cst_10 = arith.constant 0.000000e+00 : f32
      %27 = vector.broadcast %cst_10 : f32 to vector<1x18x4xf32>
      %28 = tpu.concatenate %27, %26, %27 in 0 : vector<1x18x4xf32>, vector<16x18x4xf32>, vector<1x18x4xf32> -> vector<18x18x4xf32>
      %29 = vector.extract_strided_slice %28 {offsets = [0, 0, 0], sizes = [16, 16, 4], strides = [1, 1, 1]} : vector<18x18x4xf32> to vector<16x16x4xf32>
      %30 = vector.shape_cast %29 : vector<16x16x4xf32> to vector<256x4xf32>
      %31 = vector.extract_strided_slice %28 {offsets = [0, 1, 0], sizes = [16, 16, 4], strides = [1, 1, 1]} : vector<18x18x4xf32> to vector<16x16x4xf32>
      %32 = vector.shape_cast %31 : vector<16x16x4xf32> to vector<256x4xf32>
      %33 = vector.extract_strided_slice %28 {offsets = [0, 2, 0], sizes = [16, 16, 4], strides = [1, 1, 1]} : vector<18x18x4xf32> to vector<16x16x4xf32>
      %34 = vector.shape_cast %33 : vector<16x16x4xf32> to vector<256x4xf32>
      %35 = vector.extract_strided_slice %28 {offsets = [1, 0, 0], sizes = [16, 16, 4], strides = [1, 1, 1]} : vector<18x18x4xf32> to vector<16x16x4xf32>
      %36 = vector.shape_cast %35 : vector<16x16x4xf32> to vector<256x4xf32>
      %37 = vector.extract_strided_slice %28 {offsets = [1, 1, 0], sizes = [16, 16, 4], strides = [1, 1, 1]} : vector<18x18x4xf32> to vector<16x16x4xf32>
      %38 = vector.shape_cast %37 : vector<16x16x4xf32> to vector<256x4xf32>
      %39 = vector.extract_strided_slice %28 {offsets = [1, 2, 0], sizes = [16, 16, 4], strides = [1, 1, 1]} : vector<18x18x4xf32> to vector<16x16x4xf32>
      %40 = vector.shape_cast %39 : vector<16x16x4xf32> to vector<256x4xf32>
      %41 = vector.extract_strided_slice %28 {offsets = [2, 0, 0], sizes = [16, 16, 4], strides = [1, 1, 1]} : vector<18x18x4xf32> to vector<16x16x4xf32>
      %42 = vector.shape_cast %41 : vector<16x16x4xf32> to vector<256x4xf32>
      %43 = vector.extract_strided_slice %28 {offsets = [2, 1, 0], sizes = [16, 16, 4], strides = [1, 1, 1]} : vector<18x18x4xf32> to vector<16x16x4xf32>
      %44 = vector.shape_cast %43 : vector<16x16x4xf32> to vector<256x4xf32>
      %45 = vector.extract_strided_slice %28 {offsets = [2, 2, 0], sizes = [16, 16, 4], strides = [1, 1, 1]} : vector<18x18x4xf32> to vector<16x16x4xf32>
      %46 = vector.shape_cast %45 : vector<16x16x4xf32> to vector<256x4xf32>
      %47 = tpu.concatenate %30, %32, %34, %36, %38, %40, %42, %44, %46 in 1 : vector<256x4xf32>, vector<256x4xf32>, vector<256x4xf32>, vector<256x4xf32>, vector<256x4xf32>, vector<256x4xf32>, vector<256x4xf32>, vector<256x4xf32>, vector<256x4xf32> -> vector<256x36xf32>
      %48 = arith.truncf %47 : vector<256x36xf32> to vector<256x36xbf16>
      %49 = arith.extf %48 : vector<256x36xbf16> to vector<256x36xf32>
      %50 = arith.subf %47, %49 : vector<256x36xf32>
      %51 = arith.truncf %50 : vector<256x36xf32> to vector<256x36xbf16>
      %c0_11 = arith.constant 0 : index
      %c0_12 = arith.constant 0 : index
      %c0_13 = arith.constant 0 : index
      %52 = vector.load %arg5[%c0_11, %c0_12, %c0_13] : memref<2x36x128xbf16, #tpu.memory_space<vmem>>, vector<1x36x128xbf16>
      %53 = vector.shape_cast %52 : vector<1x36x128xbf16> to vector<36x128xbf16>
      %c1_14 = arith.constant 1 : index
      %c0_15 = arith.constant 0 : index
      %c0_16 = arith.constant 0 : index
      %54 = vector.load %arg5[%c1_14, %c0_15, %c0_16] : memref<2x36x128xbf16, #tpu.memory_space<vmem>>, vector<1x36x128xbf16>
      %55 = vector.shape_cast %54 : vector<1x36x128xbf16> to vector<36x128xbf16>
      %cst_17 = arith.constant dense<0.000000e+00> : vector<256x128xf32>
      %56 = tpu.matmul %48, %53, %cst_17 {dimension_numbers = #tpu.dot_dimension_numbers<[1], [0], [0], [1], [0, 0, 1, 1], [], []>} : vector<256x36xbf16>, vector<36x128xbf16>, vector<256x128xf32> -> vector<256x128xf32>
      %cst_18 = arith.constant dense<0.000000e+00> : vector<256x128xf32>
      %57 = tpu.matmul %51, %53, %cst_18 {dimension_numbers = #tpu.dot_dimension_numbers<[1], [0], [0], [1], [0, 0, 1, 1], [], []>} : vector<256x36xbf16>, vector<36x128xbf16>, vector<256x128xf32> -> vector<256x128xf32>
      %58 = arith.addf %56, %57 : vector<256x128xf32>
      %cst_19 = arith.constant dense<0.000000e+00> : vector<256x128xf32>
      %59 = tpu.matmul %48, %55, %cst_19 {dimension_numbers = #tpu.dot_dimension_numbers<[1], [0], [0], [1], [0, 0, 1, 1], [], []>} : vector<256x36xbf16>, vector<36x128xbf16>, vector<256x128xf32> -> vector<256x128xf32>
      %60 = arith.addf %58, %59 : vector<256x128xf32>
      %61 = arith.index_cast %arg1 : i32 to index
      %c0_20 = arith.constant 0 : index
      %c0_21 = arith.constant 0 : index
      %62 = vector.load %arg9[%61, %c0_20, %c0_21] : memref<2x256x128xf32, #tpu.memory_space<vmem>>, vector<1x256x128xf32>
      %63 = vector.shape_cast %62 : vector<1x256x128xf32> to vector<256x128xf32>
      %64 = vector.shape_cast %60 : vector<256x128xf32> to vector<1x256x128xf32>
      tpu.vector_store %arg9[%61, %c0_20, %c0_21], %64 {strides = array<i32>} : memref<2x256x128xf32, #tpu.memory_space<vmem>>, vector<1x256x128xf32>,
    } else {
    }
    %c2_i32 = arith.constant 2 : i32
    %6 = arith.cmpi eq, %arg0, %c2_i32 : i32
    %7 = arith.extui %6 : i1 to i32
    %c0_i32_2 = arith.constant 0 : i32
    %8 = arith.cmpi ne, %7, %c0_i32_2 : i32
    scf.if %8 {
      %c0_i32_3 = arith.constant 0 : i32
      %9 = arith.cmpi eq, %arg1, %c0_i32_3 : i32
      %10 = arith.extui %9 : i1 to i32
      %c0_i32_4 = arith.constant 0 : i32
      %11 = arith.cmpi ne, %10, %c0_i32_4 : i32
      scf.if %11 {
        %c2_10 = arith.constant 2 : index
        %c0_11 = arith.constant 0 : index
        %27 = vector.load %arg6[%c2_10, %c0_11] : memref<4x128xf32, #tpu.memory_space<vmem>>, vector<1x128xf32>
        %c3_12 = arith.constant 3 : index
        %c0_13 = arith.constant 0 : index
        %28 = vector.load %arg6[%c3_12, %c0_13] : memref<4x128xf32, #tpu.memory_space<vmem>>, vector<1x128xf32>
        %c0_14 = arith.constant 0 : index
        %c0_15 = arith.constant 0 : index
        %c0_16 = arith.constant 0 : index
        %29 = vector.load %arg9[%c0_14, %c0_15, %c0_16] : memref<2x256x128xf32, #tpu.memory_space<vmem>>, vector<2x256x128xf32>
        %30 = vector.shape_cast %29 : vector<2x256x128xf32> to vector<512x128xf32>
        %cst_17 = arith.constant dense<0.000000e+00> : vector<128xf32>
        %31 = vector.multi_reduction <add>, %30, %cst_17 [0] : vector<512x128xf32> to vector<128xf32>
        %32 = vector.shape_cast %31 : vector<128xf32> to vector<1x128xf32>
        %cst_18 = arith.constant 5.120000e+02 : f32
        %33 = vector.broadcast %cst_18 : f32 to vector<1x128xf32>
        %34 = arith.divf %32, %33 : vector<1x128xf32>
        %35 = vector.broadcast %34 : vector<1x128xf32> to vector<512x128xf32>
        %36 = arith.subf %30, %35 : vector<512x128xf32>
        %37 = arith.mulf %36, %36 : vector<512x128xf32>
        %cst_19 = arith.constant dense<0.000000e+00> : vector<128xf32>
        %38 = vector.multi_reduction <add>, %37, %cst_19 [0] : vector<512x128xf32> to vector<128xf32>
        %39 = vector.shape_cast %38 : vector<128xf32> to vector<1x128xf32>
        %cst_20 = arith.constant 5.120000e+02 : f32
        %40 = vector.broadcast %cst_20 : f32 to vector<1x128xf32>
        %41 = arith.divf %39, %40 : vector<1x128xf32>
        %cst_21 = arith.constant 9.99999974E-6 : f32
        %42 = vector.broadcast %cst_21 : f32 to vector<1x128xf32>
        %43 = arith.addf %41, %42 : vector<1x128xf32>
        %44 = math.rsqrt %43 : vector<1x128xf32>
        %45 = arith.mulf %27, %44 : vector<1x128xf32>
        %46 = arith.mulf %34, %45 : vector<1x128xf32>
        %47 = arith.subf %28, %46 : vector<1x128xf32>
        %c2_22 = arith.constant 2 : index
        %c0_23 = arith.constant 0 : index
        %48 = vector.load %arg10[%c2_22, %c0_23] : memref<8x128xf32, #tpu.memory_space<vmem>>, vector<1x128xf32>
        tpu.vector_store %arg10[%c2_22, %c0_23], %45 {strides = array<i32>} : memref<8x128xf32, #tpu.memory_space<vmem>>, vector<1x128xf32>,
        %c3_24 = arith.constant 3 : index
        %c0_25 = arith.constant 0 : index
        %49 = vector.load %arg10[%c3_24, %c0_25] : memref<8x128xf32, #tpu.memory_space<vmem>>, vector<1x128xf32>
        tpu.vector_store %arg10[%c3_24, %c0_25], %47 {strides = array<i32>} : memref<8x128xf32, #tpu.memory_space<vmem>>, vector<1x128xf32>,
      } else {
      }
      %12 = arith.index_cast %arg1 : i32 to index
      %c0 = arith.constant 0 : index
      %c0_5 = arith.constant 0 : index
      %13 = vector.load %arg9[%12, %c0, %c0_5] : memref<2x256x128xf32, #tpu.memory_space<vmem>>, vector<1x256x128xf32>
      %14 = vector.shape_cast %13 : vector<1x256x128xf32> to vector<256x128xf32>
      %c2 = arith.constant 2 : index
      %c0_6 = arith.constant 0 : index
      %15 = vector.load %arg10[%c2, %c0_6] : memref<8x128xf32, #tpu.memory_space<vmem>>, vector<1x128xf32>
      %16 = vector.broadcast %15 : vector<1x128xf32> to vector<256x128xf32>
      %17 = arith.mulf %14, %16 : vector<256x128xf32>
      %c3 = arith.constant 3 : index
      %c0_7 = arith.constant 0 : index
      %18 = vector.load %arg10[%c3, %c0_7] : memref<8x128xf32, #tpu.memory_space<vmem>>, vector<1x128xf32>
      %19 = vector.broadcast %18 : vector<1x128xf32> to vector<256x128xf32>
      %20 = arith.addf %17, %19 : vector<256x128xf32>
      %cst = arith.constant 0.000000e+00 : f32
      %21 = vector.broadcast %cst : f32 to vector<256x128xf32>
      %22 = arith.maximumf %20, %21 : vector<256x128xf32>
      %23 = arith.index_cast %arg1 : i32 to index
      %c0_8 = arith.constant 0 : index
      %c0_9 = arith.constant 0 : index
      %24 = vector.load %arg7[%23, %c0_8, %c0_9] : memref<2x256x128xf32, #tpu.memory_space<vmem>>, vector<1x256x128xf32>
      %25 = vector.shape_cast %24 : vector<1x256x128xf32> to vector<256x128xf32>
      %26 = vector.shape_cast %22 : vector<256x128xf32> to vector<1x256x128xf32>
      tpu.vector_store %arg7[%23, %c0_8, %c0_9], %26 {strides = array<i32>} : memref<2x256x128xf32, #tpu.memory_space<vmem>>, vector<1x256x128xf32>,
    } else {
    }
    return
  }
  func.func @transform_0(%arg0: i32, %arg1: i32) -> (i32, i32, i32, i32) {
    %c0_i32 = arith.constant 0 : i32
    %c0_i32_0 = arith.constant 0 : i32
    %c0_i32_1 = arith.constant 0 : i32
    %c0_i32_2 = arith.constant 0 : i32
    return %arg1, %c0_i32, %c0_i32_0, %c0_i32_1 : i32, i32, i32, i32
  }
  func.func @transform_1(%arg0: i32, %arg1: i32) -> (i32, i32, i32, i32) {
    %c0_i32 = arith.constant 0 : i32
    %c0_i32_0 = arith.constant 0 : i32
    %c0_i32_1 = arith.constant 0 : i32
    %c0_i32_2 = arith.constant 0 : i32
    return %arg1, %c0_i32, %c0_i32_0, %c0_i32_1 : i32, i32, i32, i32
  }
  func.func @transform_2(%arg0: i32, %arg1: i32) -> (i32, i32, i32) {
    %c0_i32 = arith.constant 0 : i32
    %c0_i32_0 = arith.constant 0 : i32
    %c0_i32_1 = arith.constant 0 : i32
    %c0_i32_2 = arith.constant 0 : i32
    return %c0_i32, %c0_i32_0, %c0_i32_1 : i32, i32, i32
  }
  func.func @transform_3(%arg0: i32, %arg1: i32) -> (i32, i32, i32) {
    %c0_i32 = arith.constant 0 : i32
    %c0_i32_0 = arith.constant 0 : i32
    %c0_i32_1 = arith.constant 0 : i32
    %c0_i32_2 = arith.constant 0 : i32
    return %c0_i32, %c0_i32_0, %c0_i32_1 : i32, i32, i32
  }
  func.func @transform_4(%arg0: i32, %arg1: i32) -> (i32, i32) {
    %c0_i32 = arith.constant 0 : i32
    %c0_i32_0 = arith.constant 0 : i32
    %c0_i32_1 = arith.constant 0 : i32
    return %c0_i32, %c0_i32_0 : i32, i32
  }
  func.func @transform_5(%arg0: i32, %arg1: i32) -> (i32, i32, i32) {
    %c0_i32 = arith.constant 0 : i32
    %c0_i32_0 = arith.constant 0 : i32
    %c0_i32_1 = arith.constant 0 : i32
    %c0_i32_2 = arith.constant 0 : i32
    return %c0_i32, %c0_i32_0, %c0_i32_1 : i32, i32, i32
  }
}

</mosaic_0001>

<llo_original>
// kernel: tpu_custom_call.1
$region0: #{tpu_custom_call.1}
  #allocation0 [shape = 'u32[]', space=smem, size = 0x4, offset = 0x4, fixed_abs, tag = 'smem constant byte address 0x4 - core index']
  #allocation1 [shape = 'u32[72,128]{1,0:T(1,128)}', space=vmem, size = 0x9000, scoped, tag = 'internal scratch']
  #allocation2 [shape = 'f32[2,256,128]{2,1,0:T(8,128)}', space=vmem, size = 0x40000, scoped, tag = 'scratch operand']
  #allocation3 [shape = 'f32[2,256,128]{2,1,0:T(8,128)}', space=vmem, size = 0x40000, scoped, tag = 'scratch operand']
  #allocation4 [shape = 'f32[8,128]{1,0:T(8,128)}', space=vmem, size = 0x1000, scoped, tag = 'scratch operand']
  %s0 = inlined_call_operand.vmem [shape: f32[2,18,18,4], index: 0, kind: input, shape index: {}]
  %s1 = inlined_call_operand.vmem [shape: f32[2,18,18,4], index: 1, kind: input, shape index: {}]
  %s2 = inlined_call_operand.vmem [shape: bf16[2,72,128], index: 2, kind: input, shape index: {}]
  %s3 = inlined_call_operand.vmem [shape: bf16[2,36,128], index: 3, kind: input, shape index: {}]
  %s4 = inlined_call_operand.vmem [shape: f32[4,128], index: 4, kind: input, shape index: {}]
  %s5 = inlined_call_operand.hbm [shape: f32[2,256,128], index: 5, kind: output, shape index: {}]
  %s6 = sld [smem:[#allocation0]]
  $region73: #{tpu_custom_call.1} parent=0
    _
  %s8 = ssub.s32 1, %s6
  %s9 = scalar_select 0, %s8, %s6
  $region1: #{tpu_custom_call.1} parent=0
    #allocation5 [shape = 'u8[262144]{0}', space=vmem, size = 0x40000, scoped, tag = 'output window, operand 0, single buffered']
    #allocation6 [shape = 's32[2]{0}', space=sflag, size = 0x8, scoped, tag = 'scoped memory for tpu_custom_call.1']
    %10 = vsyncpa [#allocation6], 0
    loop: start=0, step=1, limit=8
    $region2: #{tpu_custom_call.1} parent=1 // loop_pre_header
      _
    $region3: #{tpu_custom_call.1} parent=1 // loop_header
      %s12 = sphi 0, %s16
      %p13 = scmp.ge.s32.totalorder %s12, 8
      %s19 = sphi 0, %s31
      %s20 = sphi 0, %s27
      %s21 = sphi 0, %s19
      %s22 = sphi 0, %s20
      %s23 = sphi 0, %s21
      %s24 = sphi 0, %s22
      %s34 = sphi 0, %s36
      %s37 = sphi 0, %s34
      %s38 = sphi 0, %s37
      %s54 = sphi 0, %s38
      %s60 = sphi 0, %s62
      %s63 = sphi 0, %s60
      %s64 = sphi 0, %s63
      %s80 = sphi 0, %s64
      %s84 = sphi 0, %s84
      %s86 = sphi 0, %s84
      %s87 = sphi 0, %s86
      %s101 = sphi 0, %s87
      %s105 = sphi 0, %s105
      %s107 = sphi 0, %s105
      %s108 = sphi 0, %s107
      %s122 = sphi 0, %s108
      %s126 = sphi 0, %s126
      %s128 = sphi 0, %s126
      %s129 = sphi 0, %s128
      %s143 = sphi 0, %s129
      %s147 = sphi 0, %s147
      %s149 = sphi 0, %s147
      %s150 = sphi 0, %s149
      %s164 = sphi 0, %s150
    $region4: #{tpu_custom_call.1} parent=1 // loop_header_branch
      %15 = sbr.rel (%p13) target = $region8
    $region5: #{tpu_custom_call.1} parent=1 // loop_body
      %s17 = ssub.s32 %s12, 1
      %s18 = ssub.s32 %s12, 2
      %s25 = sadd.s32 1, %s20
      %p26 = scmp.ge.s32.totalorder %s25, 2
      %s27 = scalar_select %p26, 0, %s25
      %s28 = sadd.s32 1, %s19
      %s29 = scalar_select %p26, %s28, %s19
      %p30 = scmp.ge.s32.totalorder %s29, 3
      %s31 = scalar_select %p30, 0, %s29
      %s32 = ssub.s32 %s20, %s27
      %p33 = scmp.eq.s32.totalorder %s32, 0
      %s35 = sadd.s32 %s34, 1
      %s36 = scalar_select %p33, %s34, %s35
      %p39 = pneg %p33
      %p40 = scmp.eq.s32.totalorder %s12, 5
      %p41 = por %p39, %p40
      %p42 = scmp.ne.s32.totalorder %s34, %s37
      %p43 = scmp.eq.s32.totalorder %s12, 0
      %p44 = por %p42, %p43
      %p45 = scmp.ne.s32.totalorder %s34, %s37
      %p46 = scmp.eq.s32.totalorder %s17, 5
      %p47 = por %p45, %p46
      %p48 = scmp.ne.s32.totalorder %s37, %s38
      %p49 = scmp.eq.s32.totalorder %s17, 0
      %p50 = por %p48, %p49
      %p51 = scmp.ne.s32.totalorder %s37, %s38
      %p52 = scmp.eq.s32.totalorder %s18, 5
      %p53 = por %p51, %p52
      %p55 = scmp.ne.s32.totalorder %s38, %s54
      %p56 = scmp.eq.s32.totalorder %s18, 0
      %p57 = por %p55, %p56
      %s58 = ssub.s32 %s20, %s27
      %p59 = scmp.eq.s32.totalorder %s58, 0
      %s61 = sadd.s32 %s60, 1
      %s62 = scalar_select %p59, %s60, %s61
      %p65 = pneg %p59
      %p66 = scmp.eq.s32.totalorder %s12, 5
      %p67 = por %p65, %p66
      %p68 = scmp.ne.s32.totalorder %s60, %s63
      %p69 = scmp.eq.s32.totalorder %s12, 0
      %p70 = por %p68, %p69
      %p71 = scmp.ne.s32.totalorder %s60, %s63
      %p72 = scmp.eq.s32.totalorder %s17, 5
      %p73 = por %p71, %p72
      %p74 = scmp.ne.s32.totalorder %s63, %s64
      %p75 = scmp.eq.s32.totalorder %s17, 0
      %p76 = por %p74, %p75
      %p77 = scmp.ne.s32.totalorder %s63, %s64
      %p78 = scmp.eq.s32.totalorder %s18, 5
      %p79 = por %p77, %p78
      %p81 = scmp.ne.s32.totalorder %s64, %s80
      %p82 = scmp.eq.s32.totalorder %s18, 0
      %p83 = por %p81, %p82
      %s85 = sadd.s32 %s84, 1
      %p88 = scmp.eq.s32.totalorder %s12, 5
      %p89 = scmp.ne.s32.totalorder %s84, %s86
      %p90 = scmp.eq.s32.totalorder %s12, 0
      %p91 = por %p89, %p90
      %p92 = scmp.ne.s32.totalorder %s84, %s86
      %p93 = scmp.eq.s32.totalorder %s17, 5
      %p94 = por %p92, %p93
      %p95 = scmp.ne.s32.totalorder %s86, %s87
      %p96 = scmp.eq.s32.totalorder %s17, 0
      %p97 = por %p95, %p96
      %p98 = scmp.ne.s32.totalorder %s86, %s87
      %p99 = scmp.eq.s32.totalorder %s18, 5
      %p100 = por %p98, %p99
      %p102 = scmp.ne.s32.totalorder %s87, %s101
      %p103 = scmp.eq.s32.totalorder %s18, 0
      %p104 = por %p102, %p103
      %s106 = sadd.s32 %s105, 1
      %p109 = scmp.eq.s32.totalorder %s12, 5
      %p110 = scmp.ne.s32.totalorder %s105, %s107
      %p111 = scmp.eq.s32.totalorder %s12, 0
      %p112 = por %p110, %p111
      %p113 = scmp.ne.s32.totalorder %s105, %s107
      %p114 = scmp.eq.s32.totalorder %s17, 5
      %p115 = por %p113, %p114
      %p116 = scmp.ne.s32.totalorder %s107, %s108
      %p117 = scmp.eq.s32.totalorder %s17, 0
      %p118 = por %p116, %p117
      %p119 = scmp.ne.s32.totalorder %s107, %s108
      %p120 = scmp.eq.s32.totalorder %s18, 5
      %p121 = por %p119, %p120
      %p123 = scmp.ne.s32.totalorder %s108, %s122
      %p124 = scmp.eq.s32.totalorder %s18, 0
      %p125 = por %p123, %p124
      %s127 = sadd.s32 %s126, 1
      %p130 = scmp.eq.s32.totalorder %s12, 5
      %p131 = scmp.ne.s32.totalorder %s126, %s128
      %p132 = scmp.eq.s32.totalorder %s12, 0
      %p133 = por %p131, %p132
      %p134 = scmp.ne.s32.totalorder %s126, %s128
      %p135 = scmp.eq.s32.totalorder %s17, 5
      %p136 = por %p134, %p135
      %p137 = scmp.ne.s32.totalorder %s128, %s129
      %p138 = scmp.eq.s32.totalorder %s17, 0
      %p139 = por %p137, %p138
      %p140 = scmp.ne.s32.totalorder %s128, %s129
      %p141 = scmp.eq.s32.totalorder %s18, 5
      %p142 = por %p140, %p141
      %p144 = scmp.ne.s32.totalorder %s129, %s143
      %p145 = scmp.eq.s32.totalorder %s18, 0
      %p146 = por %p144, %p145
      %s148 = sadd.s32 %s147, 1
      %p151 = scmp.eq.s32.totalorder %s12, 5
      %p152 = scmp.ne.s32.totalorder %s147, %s149
      %p153 = scmp.eq.s32.totalorder %s12, 0
      %p154 = por %p152, %p153
      %p155 = scmp.ne.s32.totalorder %s147, %s149
      %p156 = scmp.eq.s32.totalorder %s17, 5
      %p157 = por %p155, %p156
      %p158 = scmp.ne.s32.totalorder %s149, %s150
      %p159 = scmp.eq.s32.totalorder %s17, 0
      %p160 = por %p158, %p159
      %p161 = scmp.ne.s32.totalorder %s149, %s150
      %p162 = scmp.eq.s32.totalorder %s18, 5
      %p163 = por %p161, %p162
      %p165 = scmp.ne.s32.totalorder %s150, %s164
      %p166 = scmp.eq.s32.totalorder %s18, 0
      %p167 = por %p165, %p166
      %p168 = scmp.le.s32.totalorder 1, %s12
      %p169 = scmp.lt.s32.totalorder %s12, 7
      %p170 = pnand %p168, %p169
      %p171 = pneg %p170
      // Predicated region
      $region9: #{tpu_custom_call.1} parent=5 // pred_check
        _
      $region10: #{tpu_custom_call.1} parent=5 // pred_check_branch
        %173 = sbr.rel (%p170) target = $region12
      $region11: #{tpu_custom_call.1} parent=5 // pred_region
        %s174 = ssub.s32 %s12, 1
        // Predicated region
        $region13: #{tpu_custom_call.1} parent=11 // pred_check
          %p175 = pneg %p97
        $region14: #{tpu_custom_call.1} parent=11 // pred_check_branch
          %177 = sbr.rel (%p175) target = $region16
        $region15: #{tpu_custom_call.1} parent=11 // pred_region
          _
        $region16: #{tpu_custom_call.1} parent=11 // pred_fallthru
          _
        // Predicated region
        $region17: #{tpu_custom_call.1} parent=11 // pred_check
          %p178 = pneg %p118
        $region18: #{tpu_custom_call.1} parent=11 // pred_check_branch
          %180 = sbr.rel (%p178) target = $region20
        $region19: #{tpu_custom_call.1} parent=11 // pred_region
          _
        $region20: #{tpu_custom_call.1} parent=11 // pred_fallthru
          _
        // Predicated region
        $region21: #{tpu_custom_call.1} parent=11 // pred_check
          %p181 = pneg %p139
        $region22: #{tpu_custom_call.1} parent=11 // pred_check_branch
          %183 = sbr.rel (%p181) target = $region24
        $region23: #{tpu_custom_call.1} parent=11 // pred_region
          _
        $region24: #{tpu_custom_call.1} parent=11 // pred_fallthru
          _
      $region12: #{tpu_custom_call.1} parent=5 // pred_fallthru
        _
      %p184 = scmp.lt.s32.totalorder %s12, 6
      // Predicated region
      $region25: #{tpu_custom_call.1} parent=5 // pred_check
        %p185 = pneg %p184
      $region26: #{tpu_custom_call.1} parent=5 // pred_check_branch
        %187 = sbr.rel (%p185) target = $region28
      $region27: #{tpu_custom_call.1} parent=5 // pred_region
        // Predicated region
        $region29: #{tpu_custom_call.1} parent=27 // pred_check
          %p188 = pneg %p44
        $region30: #{tpu_custom_call.1} parent=27 // pred_check_branch
          %190 = sbr.rel (%p188) target = $region32
        $region31: #{tpu_custom_call.1} parent=27 // pred_region
          %p191 = scmp.lt.s32.totalorder %s20, 1
          %s192 = scalar_select %p191, %s20, 1
          %s193 = smul.addr %s192, 54
          %s194 = smul.addr %s193, 8
          %s195 = scalar_lea.vmem %s0, %s194
        $region32: #{tpu_custom_call.1} parent=27 // pred_fallthru
          _
        // Predicated region
        $region33: #{tpu_custom_call.1} parent=27 // pred_check
          %p196 = pneg %p70
        $region34: #{tpu_custom_call.1} parent=27 // pred_check_branch
          %198 = sbr.rel (%p196) target = $region36
        $region35: #{tpu_custom_call.1} parent=27 // pred_region
          %p199 = scmp.lt.s32.totalorder %s20, 1
          %s200 = scalar_select %p199, %s20, 1
          %s201 = smul.addr %s200, 54
          %s202 = smul.addr %s201, 8
          %s203 = scalar_lea.vmem %s1, %s202
        $region36: #{tpu_custom_call.1} parent=27 // pred_fallthru
          _
      $region28: #{tpu_custom_call.1} parent=5 // pred_fallthru
        _
      %p204 = scmp.le.s32.totalorder 1, %s12
      %p205 = scmp.lt.s32.totalorder %s12, 7
      %p206 = pnand %p204, %p205
      %p207 = pneg %p206
      // Predicated region
      $region37: #{tpu_custom_call.1} parent=5 // pred_check
        _
      $region38: #{tpu_custom_call.1} parent=5 // pred_check_branch
        %209 = sbr.rel (%p206) target = $region40
      $region39: #{tpu_custom_call.1} parent=5 // pred_region
        %s210 = ssub.s32 %s12, 1
        %p211 = scmp.lt.s32.totalorder %s22, 1
        %s212 = scalar_select %p211, %s22, 1
        %s213 = smul.addr %s212, 54
        %s214 = smul.addr %s213, 8
        %s215 = scalar_lea.vmem %s0, %s214
        %p216 = pneg %p50
        %p217 = pneg %p47
        %p218 = scmp.lt.s32.totalorder %s22, 1
        %s219 = scalar_select %p218, %s22, 1
        %s220 = smul.addr %s219, 54
        %s221 = smul.addr %s220, 8
        %s222 = scalar_lea.vmem %s1, %s221
        %p223 = pneg %p76
        %p224 = pneg %p73
        %p225 = pneg %p97
        %p226 = pneg %p94
        %p227 = pneg %p118
        %p228 = pneg %p115
        %p229 = pneg %p139
        %p230 = pneg %p136
        %p231 = pneg %p160
        %p232 = pneg %p157
        %p233 = scmp.lt.s32.totalorder %s22, 1
        %s234 = scalar_select %p233, %s22, 1
        %s235 = smul.addr %s234, 54
        %s236 = smul.addr %s235, 8
        %s237 = scalar_lea.vmem %s0, %s236
        %p238 = scmp.lt.s32.totalorder %s22, 1
        %s239 = scalar_select %p238, %s22, 1
        %s240 = smul.addr %s239, 54
        %s241 = smul.addr %s240, 8
        %s242 = scalar_lea.vmem %s1, %s241
        %p244 = scmp.eq.s32.totalorder %s21, 0
        // Predicated region
        $region41: #{tpu_custom_call.1} parent=39 // pred_check
          %p245 = pneg %p244
        $region42: #{tpu_custom_call.1} parent=39 // pred_check_branch
          %247 = sbr.rel (%p245) target = $region44
        $region43: #{tpu_custom_call.1} parent=39 // pred_region
          %v248 = vld [vmem:[%s237] sm:$0xff]
          %v249 = vld [vmem:[%s237 + $0x8] sm:$0xff]
          %v250 = vld [vmem:[%s237 + $0x10] sm:$0x3]
          %v251 = vld [vmem:[%s237 + $0x18] sm:$0xff]
          %v252 = vld [vmem:[%s237 + $0x20] sm:$0xff]
          %v253 = vld [vmem:[%s237 + $0x28] sm:$0x3]
          %v254 = vld [vmem:[%s237 + $0x30] sm:$0xff]
          %v255 = vld [vmem:[%s237 + $0x38] sm:$0xff]
          %v256 = vld [vmem:[%s237 + $0x40] sm:$0x3]
          %v257 = vld [vmem:[%s237 + $0x48] sm:$0xff]
          %v258 = vld [vmem:[%s237 + $0x50] sm:$0xff]
          %v259 = vld [vmem:[%s237 + $0x58] sm:$0x3]
          %v260 = vld [vmem:[%s237 + $0x60] sm:$0xff]
          %v261 = vld [vmem:[%s237 + $0x68] sm:$0xff]
          %v262 = vld [vmem:[%s237 + $0x70] sm:$0x3]
          %v263 = vld [vmem:[%s237 + $0x78] sm:$0xff]
          %v264 = vld [vmem:[%s237 + $0x80] sm:$0xff]
          %v265 = vld [vmem:[%s237 + $0x88] sm:$0x3]
          %v266 = vld [vmem:[%s237 + $0x90] sm:$0xff]
          %v267 = vld [vmem:[%s237 + $0x98] sm:$0xff]
          %v268 = vld [vmem:[%s237 + $0xa0] sm:$0x3]
          %v269 = vld [vmem:[%s237 + $0xa8] sm:$0xff]
          %v270 = vld [vmem:[%s237 + $0xb0] sm:$0xff]
          %v271 = vld [vmem:[%s237 + $0xb8] sm:$0x3]
          %v272 = vld [vmem:[%s237 + $0xc0] sm:$0xff]
          %v273 = vld [vmem:[%s237 + $0xc8] sm:$0xff]
          %v274 = vld [vmem:[%s237 + $0xd0] sm:$0x3]
          %v275 = vld [vmem:[%s237 + $0xd8] sm:$0xff]
          %v276 = vld [vmem:[%s237 + $0xe0] sm:$0xff]
          %v277 = vld [vmem:[%s237 + $0xe8] sm:$0x3]
          %v278 = vld [vmem:[%s237 + $0xf0] sm:$0xff]
          %v279 = vld [vmem:[%s237 + $0xf8] sm:$0xff]
          %v280 = vld [vmem:[%s237 + $0x100] sm:$0x3]
          %v281 = vld [vmem:[%s237 + $0x108] sm:$0xff]
          %v282 = vld [vmem:[%s237 + $0x110] sm:$0xff]
          %v283 = vld [vmem:[%s237 + $0x118] sm:$0x3]
          %v284 = vld [vmem:[%s237 + $0x120] sm:$0xff]
          %v285 = vld [vmem:[%s237 + $0x128] sm:$0xff]
          %v286 = vld [vmem:[%s237 + $0x130] sm:$0x3]
          %v287 = vld [vmem:[%s237 + $0x138] sm:$0xff]
          %v288 = vld [vmem:[%s237 + $0x140] sm:$0xff]
          %v289 = vld [vmem:[%s237 + $0x148] sm:$0x3]
          %v290 = vld [vmem:[%s237 + $0x150] sm:$0xff]
          %v291 = vld [vmem:[%s237 + $0x158] sm:$0xff]
          %v292 = vld [vmem:[%s237 + $0x160] sm:$0x3]
          %v293 = vld [vmem:[%s237 + $0x168] sm:$0xff]
          %v294 = vld [vmem:[%s237 + $0x170] sm:$0xff]
          %v295 = vld [vmem:[%s237 + $0x178] sm:$0x3]
          %v296 = vld [vmem:[%s237 + $0x180] sm:$0xff]
          %v297 = vld [vmem:[%s237 + $0x188] sm:$0xff]
          %v298 = vld [vmem:[%s237 + $0x190] sm:$0x3]
          %v299 = vld [vmem:[%s237 + $0x198] sm:$0xff]
          %v300 = vld [vmem:[%s237 + $0x1a0] sm:$0xff]
          %v301 = vld [vmem:[%s237 + $0x1a8] sm:$0x3]
          %vm350 = vcmask 1046528
          %v351 = vrot.slane %v248, 1
          %v352 = vrot.slane %v249, 1
          %v353 = vsel %vm350, %v351, %v352
          %v354 = vrot.slane %v250, 1
          %v355 = vsel %vm350, %v352, %v354
          %v356 = vrot.slane %v251, 1
          %v357 = vrot.slane %v252, 1
          %v358 = vsel %vm350, %v356, %v357
          %v359 = vrot.slane %v253, 1
          %v360 = vsel %vm350, %v357, %v359
          %v361 = vrot.slane %v254, 1
          %v362 = vrot.slane %v255, 1
          %v363 = vsel %vm350, %v361, %v362
          %v364 = vrot.slane %v256, 1
          %v365 = vsel %vm350, %v362, %v364
          %v366 = vrot.slane %v257, 1
          %v367 = vrot.slane %v258, 1
          %v368 = vsel %vm350, %v366, %v367
          %v369 = vrot.slane %v259, 1
          %v370 = vsel %vm350, %v367, %v369
          %v371 = vrot.slane %v260, 1
          %v372 = vrot.slane %v261, 1
          %v373 = vsel %vm350, %v371, %v372
          %v374 = vrot.slane %v262, 1
          %v375 = vsel %vm350, %v372, %v374
          %v376 = vrot.slane %v263, 1
          %v377 = vrot.slane %v264, 1
          %v378 = vsel %vm350, %v376, %v377
          %v379 = vrot.slane %v265, 1
          %v380 = vsel %vm350, %v377, %v379
          %v381 = vrot.slane %v266, 1
          %v382 = vrot.slane %v267, 1
          %v383 = vsel %vm350, %v381, %v382
          %v384 = vrot.slane %v268, 1
          %v385 = vsel %vm350, %v382, %v384
          %v386 = vrot.slane %v269, 1
          %v387 = vrot.slane %v270, 1
          %v388 = vsel %vm350, %v386, %v387
          %v389 = vrot.slane %v271, 1
          %v390 = vsel %vm350, %v387, %v389
          %v391 = vrot.slane %v272, 1
          %v392 = vrot.slane %v273, 1
          %v393 = vsel %vm350, %v391, %v392
          %v394 = vrot.slane %v274, 1
          %v395 = vsel %vm350, %v392, %v394
          %v396 = vrot.slane %v275, 1
          %v397 = vrot.slane %v276, 1
          %v398 = vsel %vm350, %v396, %v397
          %v399 = vrot.slane %v277, 1
          %v400 = vsel %vm350, %v397, %v399
          %v401 = vrot.slane %v278, 1
          %v402 = vrot.slane %v279, 1
          %v403 = vsel %vm350, %v401, %v402
          %v404 = vrot.slane %v280, 1
          %v405 = vsel %vm350, %v402, %v404
          %v406 = vrot.slane %v281, 1
          %v407 = vrot.slane %v282, 1
          %v408 = vsel %vm350, %v406, %v407
          %v409 = vrot.slane %v283, 1
          %v410 = vsel %vm350, %v407, %v409
          %v411 = vrot.slane %v284, 1
          %v412 = vrot.slane %v285, 1
          %v413 = vsel %vm350, %v411, %v412
          %v414 = vrot.slane %v286, 1
          %v415 = vsel %vm350, %v412, %v414
          %v416 = vrot.slane %v287, 1
          %v417 = vrot.slane %v288, 1
          %v418 = vsel %vm350, %v416, %v417
          %v419 = vrot.slane %v289, 1
          %v420 = vsel %vm350, %v417, %v419
          %v421 = vrot.slane %v290, 1
          %v422 = vrot.slane %v291, 1
          %v423 = vsel %vm350, %v421, %v422
          %v424 = vrot.slane %v292, 1
          %v425 = vsel %vm350, %v422, %v424
          %v426 = vrot.slane %v293, 1
          %v427 = vrot.slane %v294, 1
          %v428 = vsel %vm350, %v426, %v427
          %v429 = vrot.slane %v295, 1
          %v430 = vsel %vm350, %v427, %v429
          %vm431 = vcmask 1045504
          %v432 = vrot.slane %v248, 2
          %v433 = vrot.slane %v249, 2
          %v434 = vsel %vm431, %v432, %v433
          %v435 = vrot.slane %v250, 2
          %v436 = vsel %vm431, %v433, %v435
          %v437 = vrot.slane %v251, 2
          %v438 = vrot.slane %v252, 2
          %v439 = vsel %vm431, %v437, %v438
          %v440 = vrot.slane %v253, 2
          %v441 = vsel %vm431, %v438, %v440
          %v442 = vrot.slane %v254, 2
          %v443 = vrot.slane %v255, 2
          %v444 = vsel %vm431, %v442, %v443
          %v445 = vrot.slane %v256, 2
          %v446 = vsel %vm431, %v443, %v445
          %v447 = vrot.slane %v257, 2
          %v448 = vrot.slane %v258, 2
          %v449 = vsel %vm431, %v447, %v448
          %v450 = vrot.slane %v259, 2
          %v451 = vsel %vm431, %v448, %v450
          %v452 = vrot.slane %v260, 2
          %v453 = vrot.slane %v261, 2
          %v454 = vsel %vm431, %v452, %v453
          %v455 = vrot.slane %v262, 2
          %v456 = vsel %vm431, %v453, %v455
          %v457 = vrot.slane %v263, 2
          %v458 = vrot.slane %v264, 2
          %v459 = vsel %vm431, %v457, %v458
          %v460 = vrot.slane %v265, 2
          %v461 = vsel %vm431, %v458, %v460
          %v462 = vrot.slane %v266, 2
          %v463 = vrot.slane %v267, 2
          %v464 = vsel %vm431, %v462, %v463
          %v465 = vrot.slane %v268, 2
          %v466 = vsel %vm431, %v463, %v465
          %v467 = vrot.slane %v269, 2
          %v468 = vrot.slane %v270, 2
          %v469 = vsel %vm431, %v467, %v468
          %v470 = vrot.slane %v271, 2
          %v471 = vsel %vm431, %v468, %v470
          %v472 = vrot.slane %v272, 2
          %v473 = vrot.slane %v273, 2
          %v474 = vsel %vm431, %v472, %v473
          %v475 = vrot.slane %v274, 2
          %v476 = vsel %vm431, %v473, %v475
          %v477 = vrot.slane %v275, 2
          %v478 = vrot.slane %v276, 2
          %v479 = vsel %vm431, %v477, %v478
          %v480 = vrot.slane %v277, 2
          %v481 = vsel %vm431, %v478, %v480
          %v482 = vrot.slane %v278, 2
          %v483 = vrot.slane %v279, 2
          %v484 = vsel %vm431, %v482, %v483
          %v485 = vrot.slane %v280, 2
          %v486 = vsel %vm431, %v483, %v485
          %v487 = vrot.slane %v281, 2
          %v488 = vrot.slane %v282, 2
          %v489 = vsel %vm431, %v487, %v488
          %v490 = vrot.slane %v283, 2
          %v491 = vsel %vm431, %v488, %v490
          %v492 = vrot.slane %v284, 2
          %v493 = vrot.slane %v285, 2
          %v494 = vsel %vm431, %v492, %v493
          %v495 = vrot.slane %v286, 2
          %v496 = vsel %vm431, %v493, %v495
          %v497 = vrot.slane %v287, 2
          %v498 = vrot.slane %v288, 2
          %v499 = vsel %vm431, %v497, %v498
          %v500 = vrot.slane %v289, 2
          %v501 = vsel %vm431, %v498, %v500
          %v502 = vrot.slane %v290, 2
          %v503 = vrot.slane %v291, 2
          %v504 = vsel %vm431, %v502, %v503
          %v505 = vrot.slane %v292, 2
          %v506 = vsel %vm431, %v503, %v505
          %v507 = vrot.slane %v293, 2
          %v508 = vrot.slane %v294, 2
          %v509 = vsel %vm431, %v507, %v508
          %v510 = vrot.slane %v295, 2
          %v511 = vsel %vm431, %v508, %v510
          %v515 = vrot.slane %v296, 1
          %v516 = vrot.slane %v297, 1
          %v517 = vsel %vm350, %v515, %v516
          %v518 = vrot.slane %v298, 1
          %v519 = vsel %vm350, %v516, %v518
          %v520 = vrot.slane %v296, 2
          %v521 = vrot.slane %v297, 2
          %v522 = vsel %vm431, %v520, %v521
          %v523 = vrot.slane %v298, 2
          %v524 = vsel %vm431, %v521, %v523
          %v528 = vrot.slane %v299, 1
          %v529 = vrot.slane %v300, 1
          %v530 = vsel %vm350, %v528, %v529
          %v531 = vrot.slane %v301, 1
          %v532 = vsel %vm350, %v529, %v531
          %v533 = vrot.slane %v299, 2
          %v534 = vrot.slane %v300, 2
          %v535 = vsel %vm431, %v533, %v534
          %v536 = vrot.slane %v301, 2
          %v537 = vsel %vm431, %v534, %v536
          %v538 = vld [vmem:[%s242] sm:$0xff]
          %v539 = vld [vmem:[%s242 + $0x8] sm:$0xff]
          %v540 = vld [vmem:[%s242 + $0x10] sm:$0x3]
          %v541 = vld [vmem:[%s242 + $0x18] sm:$0xff]
          %v542 = vld [vmem:[%s242 + $0x20] sm:$0xff]
          %v543 = vld [vmem:[%s242 + $0x28] sm:$0x3]
          %v544 = vld [vmem:[%s242 + $0x30] sm:$0xff]
          %v545 = vld [vmem:[%s242 + $0x38] sm:$0xff]
          %v546 = vld [vmem:[%s242 + $0x40] sm:$0x3]
          %v547 = vld [vmem:[%s242 + $0x48] sm:$0xff]
          %v548 = vld [vmem:[%s242 + $0x50] sm:$0xff]
          %v549 = vld [vmem:[%s242 + $0x58] sm:$0x3]
          %v550 = vld [vmem:[%s242 + $0x60] sm:$0xff]
          %v551 = vld [vmem:[%s242 + $0x68] sm:$0xff]
          %v552 = vld [vmem:[%s242 + $0x70] sm:$0x3]
          %v553 = vld [vmem:[%s242 + $0x78] sm:$0xff]
          %v554 = vld [vmem:[%s242 + $0x80] sm:$0xff]
          %v555 = vld [vmem:[%s242 + $0x88] sm:$0x3]
          %v556 = vld [vmem:[%s242 + $0x90] sm:$0xff]
          %v557 = vld [vmem:[%s242 + $0x98] sm:$0xff]
          %v558 = vld [vmem:[%s242 + $0xa0] sm:$0x3]
          %v559 = vld [vmem:[%s242 + $0xa8] sm:$0xff]
          %v560 = vld [vmem:[%s242 + $0xb0] sm:$0xff]
          %v561 = vld [vmem:[%s242 + $0xb8] sm:$0x3]
          %v562 = vld [vmem:[%s242 + $0xc0] sm:$0xff]
          %v563 = vld [vmem:[%s242 + $0xc8] sm:$0xff]
          %v564 = vld [vmem:[%s242 + $0xd0] sm:$0x3]
          %v565 = vld [vmem:[%s242 + $0xd8] sm:$0xff]
          %v566 = vld [vmem:[%s242 + $0xe0] sm:$0xff]
          %v567 = vld [vmem:[%s242 + $0xe8] sm:$0x3]
          %v568 = vld [vmem:[%s242 + $0xf0] sm:$0xff]
          %v569 = vld [vmem:[%s242 + $0xf8] sm:$0xff]
          %v570 = vld [vmem:[%s242 + $0x100] sm:$0x3]
          %v571 = vld [vmem:[%s242 + $0x108] sm:$0xff]
          %v572 = vld [vmem:[%s242 + $0x110] sm:$0xff]
          %v573 = vld [vmem:[%s242 + $0x118] sm:$0x3]
          %v574 = vld [vmem:[%s242 + $0x120] sm:$0xff]
          %v575 = vld [vmem:[%s242 + $0x128] sm:$0xff]
          %v576 = vld [vmem:[%s242 + $0x130] sm:$0x3]
          %v577 = vld [vmem:[%s242 + $0x138] sm:$0xff]
          %v578 = vld [vmem:[%s242 + $0x140] sm:$0xff]
          %v579 = vld [vmem:[%s242 + $0x148] sm:$0x3]
          %v580 = vld [vmem:[%s242 + $0x150] sm:$0xff]
          %v581 = vld [vmem:[%s242 + $0x158] sm:$0xff]
          %v582 = vld [vmem:[%s242 + $0x160] sm:$0x3]
          %v583 = vld [vmem:[%s242 + $0x168] sm:$0xff]
          %v584 = vld [vmem:[%s242 + $0x170] sm:$0xff]
          %v585 = vld [vmem:[%s242 + $0x178] sm:$0x3]
          %v586 = vld [vmem:[%s242 + $0x180] sm:$0xff]
          %v587 = vld [vmem:[%s242 + $0x188] sm:$0xff]
          %v588 = vld [vmem:[%s242 + $0x190] sm:$0x3]
          %v589 = vld [vmem:[%s242 + $0x198] sm:$0xff]
          %v590 = vld [vmem:[%s242 + $0x1a0] sm:$0xff]
          %v591 = vld [vmem:[%s242 + $0x1a8] sm:$0x3]
          %v640 = vrot.slane %v538, 1
          %v641 = vrot.slane %v539, 1
          %v642 = vsel %vm350, %v640, %v641
          %v643 = vrot.slane %v540, 1
          %v644 = vsel %vm350, %v641, %v643
          %v645 = vrot.slane %v541, 1
          %v646 = vrot.slane %v542, 1
          %v647 = vsel %vm350, %v645, %v646
          %v648 = vrot.slane %v543, 1
          %v649 = vsel %vm350, %v646, %v648
          %v650 = vrot.slane %v544, 1
          %v651 = vrot.slane %v545, 1
          %v652 = vsel %vm350, %v650, %v651
          %v653 = vrot.slane %v546, 1
          %v654 = vsel %vm350, %v651, %v653
          %v655 = vrot.slane %v547, 1
          %v656 = vrot.slane %v548, 1
          %v657 = vsel %vm350, %v655, %v656
          %v658 = vrot.slane %v549, 1
          %v659 = vsel %vm350, %v656, %v658
          %v660 = vrot.slane %v550, 1
          %v661 = vrot.slane %v551, 1
          %v662 = vsel %vm350, %v660, %v661
          %v663 = vrot.slane %v552, 1
          %v664 = vsel %vm350, %v661, %v663
          %v665 = vrot.slane %v553, 1
          %v666 = vrot.slane %v554, 1
          %v667 = vsel %vm350, %v665, %v666
          %v668 = vrot.slane %v555, 1
          %v669 = vsel %vm350, %v666, %v668
          %v670 = vrot.slane %v556, 1
          %v671 = vrot.slane %v557, 1
          %v672 = vsel %vm350, %v670, %v671
          %v673 = vrot.slane %v558, 1
          %v674 = vsel %vm350, %v671, %v673
          %v675 = vrot.slane %v559, 1
          %v676 = vrot.slane %v560, 1
          %v677 = vsel %vm350, %v675, %v676
          %v678 = vrot.slane %v561, 1
          %v679 = vsel %vm350, %v676, %v678
          %v680 = vrot.slane %v562, 1
          %v681 = vrot.slane %v563, 1
          %v682 = vsel %vm350, %v680, %v681
          %v683 = vrot.slane %v564, 1
          %v684 = vsel %vm350, %v681, %v683
          %v685 = vrot.slane %v565, 1
          %v686 = vrot.slane %v566, 1
          %v687 = vsel %vm350, %v685, %v686
          %v688 = vrot.slane %v567, 1
          %v689 = vsel %vm350, %v686, %v688
          %v690 = vrot.slane %v568, 1
          %v691 = vrot.slane %v569, 1
          %v692 = vsel %vm350, %v690, %v691
          %v693 = vrot.slane %v570, 1
          %v694 = vsel %vm350, %v691, %v693
          %v695 = vrot.slane %v571, 1
          %v696 = vrot.slane %v572, 1
          %v697 = vsel %vm350, %v695, %v696
          %v698 = vrot.slane %v573, 1
          %v699 = vsel %vm350, %v696, %v698
          %v700 = vrot.slane %v574, 1
          %v701 = vrot.slane %v575, 1
          %v702 = vsel %vm350, %v700, %v701
          %v703 = vrot.slane %v576, 1
          %v704 = vsel %vm350, %v701, %v703
          %v705 = vrot.slane %v577, 1
          %v706 = vrot.slane %v578, 1
          %v707 = vsel %vm350, %v705, %v706
          %v708 = vrot.slane %v579, 1
          %v709 = vsel %vm350, %v706, %v708
          %v710 = vrot.slane %v580, 1
          %v711 = vrot.slane %v581, 1
          %v712 = vsel %vm350, %v710, %v711
          %v713 = vrot.slane %v582, 1
          %v714 = vsel %vm350, %v711, %v713
          %v715 = vrot.slane %v583, 1
          %v716 = vrot.slane %v584, 1
          %v717 = vsel %vm350, %v715, %v716
          %v718 = vrot.slane %v585, 1
          %v719 = vsel %vm350, %v716, %v718
          %v720 = vrot.slane %v538, 2
          %v721 = vrot.slane %v539, 2
          %v722 = vsel %vm431, %v720, %v721
          %v723 = vrot.slane %v540, 2
          %v724 = vsel %vm431, %v721, %v723
          %v725 = vrot.slane %v541, 2
          %v726 = vrot.slane %v542, 2
          %v727 = vsel %vm431, %v725, %v726
          %v728 = vrot.slane %v543, 2
          %v729 = vsel %vm431, %v726, %v728
          %v730 = vrot.slane %v544, 2
          %v731 = vrot.slane %v545, 2
          %v732 = vsel %vm431, %v730, %v731
          %v733 = vrot.slane %v546, 2
          %v734 = vsel %vm431, %v731, %v733
          %v735 = vrot.slane %v547, 2
          %v736 = vrot.slane %v548, 2
          %v737 = vsel %vm431, %v735, %v736
          %v738 = vrot.slane %v549, 2
          %v739 = vsel %vm431, %v736, %v738
          %v740 = vrot.slane %v550, 2
          %v741 = vrot.slane %v551, 2
          %v742 = vsel %vm431, %v740, %v741
          %v743 = vrot.slane %v552, 2
          %v744 = vsel %vm431, %v741, %v743
          %v745 = vrot.slane %v553, 2
          %v746 = vrot.slane %v554, 2
          %v747 = vsel %vm431, %v745, %v746
          %v748 = vrot.slane %v555, 2
          %v749 = vsel %vm431, %v746, %v748
          %v750 = vrot.slane %v556, 2
          %v751 = vrot.slane %v557, 2
          %v752 = vsel %vm431, %v750, %v751
          %v753 = vrot.slane %v558, 2
          %v754 = vsel %vm431, %v751, %v753
          %v755 = vrot.slane %v559, 2
          %v756 = vrot.slane %v560, 2
          %v757 = vsel %vm431, %v755, %v756
          %v758 = vrot.slane %v561, 2
          %v759 = vsel %vm431, %v756, %v758
          %v760 = vrot.slane %v562, 2
          %v761 = vrot.slane %v563, 2
          %v762 = vsel %vm431, %v760, %v761
          %v763 = vrot.slane %v564, 2
          %v764 = vsel %vm431, %v761, %v763
          %v765 = vrot.slane %v565, 2
          %v766 = vrot.slane %v566, 2
          %v767 = vsel %vm431, %v765, %v766
          %v768 = vrot.slane %v567, 2
          %v769 = vsel %vm431, %v766, %v768
          %v770 = vrot.slane %v568, 2
          %v771 = vrot.slane %v569, 2
          %v772 = vsel %vm431, %v770, %v771
          %v773 = vrot.slane %v570, 2
          %v774 = vsel %vm431, %v771, %v773
          %v775 = vrot.slane %v571, 2
          %v776 = vrot.slane %v572, 2
          %v777 = vsel %vm431, %v775, %v776
          %v778 = vrot.slane %v573, 2
          %v779 = vsel %vm431, %v776, %v778
          %v780 = vrot.slane %v574, 2
          %v781 = vrot.slane %v575, 2
          %v782 = vsel %vm431, %v780, %v781
          %v783 = vrot.slane %v576, 2
          %v784 = vsel %vm431, %v781, %v783
          %v785 = vrot.slane %v577, 2
          %v786 = vrot.slane %v578, 2
          %v787 = vsel %vm431, %v785, %v786
          %v788 = vrot.slane %v579, 2
          %v789 = vsel %vm431, %v786, %v788
          %v790 = vrot.slane %v580, 2
          %v791 = vrot.slane %v581, 2
          %v792 = vsel %vm431, %v790, %v791
          %v793 = vrot.slane %v582, 2
          %v794 = vsel %vm431, %v791, %v793
          %v795 = vrot.slane %v583, 2
          %v796 = vrot.slane %v584, 2
          %v797 = vsel %vm431, %v795, %v796
          %v798 = vrot.slane %v585, 2
          %v799 = vsel %vm431, %v796, %v798
          %v803 = vrot.slane %v586, 1
          %v804 = vrot.slane %v587, 1
          %v805 = vsel %vm350, %v803, %v804
          %v806 = vrot.slane %v588, 1
          %v807 = vsel %vm350, %v804, %v806
          %v808 = vrot.slane %v586, 2
          %v809 = vrot.slane %v587, 2
          %v810 = vsel %vm431, %v808, %v809
          %v811 = vrot.slane %v588, 2
          %v812 = vsel %vm431, %v809, %v811
          %v816 = vrot.slane %v589, 1
          %v817 = vrot.slane %v590, 1
          %v818 = vsel %vm350, %v816, %v817
          %v819 = vrot.slane %v591, 1
          %v820 = vsel %vm350, %v817, %v819
          %v853 = vrot.slane %v589, 2
          %v854 = vrot.slane %v590, 2
          %v855 = vsel %vm431, %v853, %v854
          %v856 = vrot.slane %v591, 2
          %v857 = vsel %vm431, %v854, %v856
          %858 = vrot.lane.b32.xlu0 %v353, 4
          %v859 = vpop.permute.xlu0 %858
          %860 = vrot.lane.b32.xlu0 %v355, 4
          %v861 = vpop.permute.xlu0 %860
          %862 = vrot.lane.b32.xlu0 %v358, 4
          %v863 = vpop.permute.xlu0 %862
          %864 = vrot.lane.b32.xlu0 %v360, 4
          %v865 = vpop.permute.xlu0 %864
          %866 = vrot.lane.b32.xlu0 %v363, 4
          %v867 = vpop.permute.xlu0 %866
          %868 = vrot.lane.b32.xlu0 %v365, 4
          %v869 = vpop.permute.xlu0 %868
          %870 = vrot.lane.b32.xlu0 %v368, 4
          %v871 = vpop.permute.xlu0 %870
          %872 = vrot.lane.b32.xlu0 %v370, 4
          %v873 = vpop.permute.xlu0 %872
          %874 = vrot.lane.b32.xlu0 %v373, 4
          %v875 = vpop.permute.xlu0 %874
          %876 = vrot.lane.b32.xlu0 %v375, 4
          %v877 = vpop.permute.xlu0 %876
          %878 = vrot.lane.b32.xlu0 %v378, 4
          %v879 = vpop.permute.xlu0 %878
          %880 = vrot.lane.b32.xlu0 %v380, 4
          %v881 = vpop.permute.xlu0 %880
          %882 = vrot.lane.b32.xlu0 %v383, 4
          %v883 = vpop.permute.xlu0 %882
          %884 = vrot.lane.b32.xlu0 %v385, 4
          %v885 = vpop.permute.xlu0 %884
          %886 = vrot.lane.b32.xlu0 %v388, 4
          %v887 = vpop.permute.xlu0 %886
          %888 = vrot.lane.b32.xlu0 %v390, 4
          %v889 = vpop.permute.xlu0 %888
          %890 = vrot.lane.b32.xlu0 %v393, 4
          %v891 = vpop.permute.xlu0 %890
          %892 = vrot.lane.b32.xlu0 %v395, 4
          %v893 = vpop.permute.xlu0 %892
          %894 = vrot.lane.b32.xlu0 %v398, 4
          %v895 = vpop.permute.xlu0 %894
          %896 = vrot.lane.b32.xlu0 %v400, 4
          %v897 = vpop.permute.xlu0 %896
          %898 = vrot.lane.b32.xlu0 %v403, 4
          %v899 = vpop.permute.xlu0 %898
          %900 = vrot.lane.b32.xlu0 %v405, 4
          %v901 = vpop.permute.xlu0 %900
          %902 = vrot.lane.b32.xlu0 %v408, 4
          %v903 = vpop.permute.xlu0 %902
          %904 = vrot.lane.b32.xlu0 %v410, 4
          %v905 = vpop.permute.xlu0 %904
          %906 = vrot.lane.b32.xlu0 %v413, 4
          %v907 = vpop.permute.xlu0 %906
          %908 = vrot.lane.b32.xlu0 %v415, 4
          %v909 = vpop.permute.xlu0 %908
          %910 = vrot.lane.b32.xlu0 %v418, 4
          %v911 = vpop.permute.xlu0 %910
          %912 = vrot.lane.b32.xlu0 %v420, 4
          %v913 = vpop.permute.xlu0 %912
          %914 = vrot.lane.b32.xlu0 %v423, 4
          %v915 = vpop.permute.xlu0 %914
          %916 = vrot.lane.b32.xlu0 %v425, 4
          %v917 = vpop.permute.xlu0 %916
          %918 = vrot.lane.b32.xlu0 %v428, 4
          %v919 = vpop.permute.xlu0 %918
          %920 = vrot.lane.b32.xlu0 %v430, 4
          %v921 = vpop.permute.xlu0 %920
          %954 = vrot.lane.b32.xlu0 %v434, 8
          %v955 = vpop.permute.xlu0 %954
          %956 = vrot.lane.b32.xlu0 %v436, 8
          %v957 = vpop.permute.xlu0 %956
          %958 = vrot.lane.b32.xlu0 %v439, 8
          %v959 = vpop.permute.xlu0 %958
          %960 = vrot.lane.b32.xlu0 %v441, 8
          %v961 = vpop.permute.xlu0 %960
          %962 = vrot.lane.b32.xlu0 %v444, 8
          %v963 = vpop.permute.xlu0 %962
          %964 = vrot.lane.b32.xlu0 %v446, 8
          %v965 = vpop.permute.xlu0 %964
          %966 = vrot.lane.b32.xlu0 %v449, 8
          %v967 = vpop.permute.xlu0 %966
          %968 = vrot.lane.b32.xlu0 %v451, 8
          %v969 = vpop.permute.xlu0 %968
          %970 = vrot.lane.b32.xlu0 %v454, 8
          %v971 = vpop.permute.xlu0 %970
          %972 = vrot.lane.b32.xlu0 %v456, 8
          %v973 = vpop.permute.xlu0 %972
          %974 = vrot.lane.b32.xlu0 %v459, 8
          %v975 = vpop.permute.xlu0 %974
          %976 = vrot.lane.b32.xlu0 %v461, 8
          %v977 = vpop.permute.xlu0 %976
          %978 = vrot.lane.b32.xlu0 %v464, 8
          %v979 = vpop.permute.xlu0 %978
          %980 = vrot.lane.b32.xlu0 %v466, 8
          %v981 = vpop.permute.xlu0 %980
          %982 = vrot.lane.b32.xlu0 %v469, 8
          %v983 = vpop.permute.xlu0 %982
          %984 = vrot.lane.b32.xlu0 %v471, 8
          %v985 = vpop.permute.xlu0 %984
          %986 = vrot.lane.b32.xlu0 %v474, 8
          %v987 = vpop.permute.xlu0 %986
          %988 = vrot.lane.b32.xlu0 %v476, 8
          %v989 = vpop.permute.xlu0 %988
          %990 = vrot.lane.b32.xlu0 %v479, 8
          %v991 = vpop.permute.xlu0 %990
          %992 = vrot.lane.b32.xlu0 %v481, 8
          %v993 = vpop.permute.xlu0 %992
          %994 = vrot.lane.b32.xlu0 %v484, 8
          %v995 = vpop.permute.xlu0 %994
          %996 = vrot.lane.b32.xlu0 %v486, 8
          %v997 = vpop.permute.xlu0 %996
          %998 = vrot.lane.b32.xlu0 %v489, 8
          %v999 = vpop.permute.xlu0 %998
          %1000 = vrot.lane.b32.xlu0 %v491, 8
          %v1001 = vpop.permute.xlu0 %1000
          %1002 = vrot.lane.b32.xlu0 %v494, 8
          %v1003 = vpop.permute.xlu0 %1002
          %1004 = vrot.lane.b32.xlu0 %v496, 8
          %v1005 = vpop.permute.xlu0 %1004
          %1006 = vrot.lane.b32.xlu0 %v499, 8
          %v1007 = vpop.permute.xlu0 %1006
          %1008 = vrot.lane.b32.xlu0 %v501, 8
          %v1009 = vpop.permute.xlu0 %1008
          %1010 = vrot.lane.b32.xlu0 %v504, 8
          %v1011 = vpop.permute.xlu0 %1010
          %1012 = vrot.lane.b32.xlu0 %v506, 8
          %v1013 = vpop.permute.xlu0 %1012
          %1014 = vrot.lane.b32.xlu0 %v509, 8
          %v1015 = vpop.permute.xlu0 %1014
          %1016 = vrot.lane.b32.xlu0 %v511, 8
          %v1017 = vpop.permute.xlu0 %1016
          %1050 = vrot.lane.b32.xlu0 %v251, 12
          %v1051 = vpop.permute.xlu0 %1050
          %1052 = vrot.lane.b32.xlu0 %v252, 12
          %v1053 = vpop.permute.xlu0 %1052
          %1054 = vrot.lane.b32.xlu0 %v254, 12
          %v1055 = vpop.permute.xlu0 %1054
          %1056 = vrot.lane.b32.xlu0 %v255, 12
          %v1057 = vpop.permute.xlu0 %1056
          %1058 = vrot.lane.b32.xlu0 %v257, 12
          %v1059 = vpop.permute.xlu0 %1058
          %1060 = vrot.lane.b32.xlu0 %v258, 12
          %v1061 = vpop.permute.xlu0 %1060
          %1062 = vrot.lane.b32.xlu0 %v260, 12
          %v1063 = vpop.permute.xlu0 %1062
          %1064 = vrot.lane.b32.xlu0 %v261, 12
          %v1065 = vpop.permute.xlu0 %1064
          %1066 = vrot.lane.b32.xlu0 %v263, 12
          %v1067 = vpop.permute.xlu0 %1066
          %1068 = vrot.lane.b32.xlu0 %v264, 12
          %v1069 = vpop.permute.xlu0 %1068
          %1070 = vrot.lane.b32.xlu0 %v266, 12
          %v1071 = vpop.permute.xlu0 %1070
          %1072 = vrot.lane.b32.xlu0 %v267, 12
          %v1073 = vpop.permute.xlu0 %1072
          %1074 = vrot.lane.b32.xlu0 %v269, 12
          %v1075 = vpop.permute.xlu0 %1074
          %1076 = vrot.lane.b32.xlu0 %v270, 12
          %v1077 = vpop.permute.xlu0 %1076
          %1078 = vrot.lane.b32.xlu0 %v272, 12
          %v1079 = vpop.permute.xlu0 %1078
          %1080 = vrot.lane.b32.xlu0 %v273, 12
          %v1081 = vpop.permute.xlu0 %1080
          %1082 = vrot.lane.b32.xlu0 %v275, 12
          %v1083 = vpop.permute.xlu0 %1082
          %1084 = vrot.lane.b32.xlu0 %v276, 12
          %v1085 = vpop.permute.xlu0 %1084
          %1086 = vrot.lane.b32.xlu0 %v278, 12
          %v1087 = vpop.permute.xlu0 %1086
          %1088 = vrot.lane.b32.xlu0 %v279, 12
          %v1089 = vpop.permute.xlu0 %1088
          %1090 = vrot.lane.b32.xlu0 %v281, 12
          %v1091 = vpop.permute.xlu0 %1090
          %1092 = vrot.lane.b32.xlu0 %v282, 12
          %v1093 = vpop.permute.xlu0 %1092
          %1094 = vrot.lane.b32.xlu0 %v284, 12
          %v1095 = vpop.permute.xlu0 %1094
          %1096 = vrot.lane.b32.xlu0 %v285, 12
          %v1097 = vpop.permute.xlu0 %1096
          %1098 = vrot.lane.b32.xlu0 %v287, 12
          %v1099 = vpop.permute.xlu0 %1098
          %1100 = vrot.lane.b32.xlu0 %v288, 12
          %v1101 = vpop.permute.xlu0 %1100
          %1102 = vrot.lane.b32.xlu0 %v290, 12
          %v1103 = vpop.permute.xlu0 %1102
          %1104 = vrot.lane.b32.xlu0 %v291, 12
          %v1105 = vpop.permute.xlu0 %1104
          %1106 = vrot.lane.b32.xlu0 %v293, 12
          %v1107 = vpop.permute.xlu0 %1106
          %1108 = vrot.lane.b32.xlu0 %v294, 12
          %v1109 = vpop.permute.xlu0 %1108
          %1110 = vrot.lane.b32.xlu0 %v296, 12
          %v1111 = vpop.permute.xlu0 %1110
          %1112 = vrot.lane.b32.xlu0 %v297, 12
          %v1113 = vpop.permute.xlu0 %1112
          %1146 = vrot.lane.b32.xlu0 %v358, 16
          %v1147 = vpop.permute.xlu0 %1146
          %1148 = vrot.lane.b32.xlu0 %v360, 16
          %v1149 = vpop.permute.xlu0 %1148
          %1150 = vrot.lane.b32.xlu0 %v363, 16
          %v1151 = vpop.permute.xlu0 %1150
          %1152 = vrot.lane.b32.xlu0 %v365, 16
          %v1153 = vpop.permute.xlu0 %1152
          %1154 = vrot.lane.b32.xlu0 %v368, 16
          %v1155 = vpop.permute.xlu0 %1154
          %1156 = vrot.lane.b32.xlu0 %v370, 16
          %v1157 = vpop.permute.xlu0 %1156
          %1158 = vrot.lane.b32.xlu0 %v373, 16
          %v1159 = vpop.permute.xlu0 %1158
          %1160 = vrot.lane.b32.xlu0 %v375, 16
          %v1161 = vpop.permute.xlu0 %1160
          %1162 = vrot.lane.b32.xlu0 %v378, 16
          %v1163 = vpop.permute.xlu0 %1162
          %1164 = vrot.lane.b32.xlu0 %v380, 16
          %v1165 = vpop.permute.xlu0 %1164
          %1166 = vrot.lane.b32.xlu0 %v383, 16
          %v1167 = vpop.permute.xlu0 %1166
          %1168 = vrot.lane.b32.xlu0 %v385, 16
          %v1169 = vpop.permute.xlu0 %1168
          %1170 = vrot.lane.b32.xlu0 %v388, 16
          %v1171 = vpop.permute.xlu0 %1170
          %1172 = vrot.lane.b32.xlu0 %v390, 16
          %v1173 = vpop.permute.xlu0 %1172
          %1174 = vrot.lane.b32.xlu0 %v393, 16
          %v1175 = vpop.permute.xlu0 %1174
          %1176 = vrot.lane.b32.xlu0 %v395, 16
          %v1177 = vpop.permute.xlu0 %1176
          %1178 = vrot.lane.b32.xlu0 %v398, 16
          %v1179 = vpop.permute.xlu0 %1178
          %1180 = vrot.lane.b32.xlu0 %v400, 16
          %v1181 = vpop.permute.xlu0 %1180
          %1182 = vrot.lane.b32.xlu0 %v403, 16
          %v1183 = vpop.permute.xlu0 %1182
          %1184 = vrot.lane.b32.xlu0 %v405, 16
          %v1185 = vpop.permute.xlu0 %1184
          %1186 = vrot.lane.b32.xlu0 %v408, 16
          %v1187 = vpop.permute.xlu0 %1186
          %1188 = vrot.lane.b32.xlu0 %v410, 16
          %v1189 = vpop.permute.xlu0 %1188
          %1190 = vrot.lane.b32.xlu0 %v413, 16
          %v1191 = vpop.permute.xlu0 %1190
          %1192 = vrot.lane.b32.xlu0 %v415, 16
          %v1193 = vpop.permute.xlu0 %1192
          %1194 = vrot.lane.b32.xlu0 %v418, 16
          %v1195 = vpop.permute.xlu0 %1194
          %1196 = vrot.lane.b32.xlu0 %v420, 16
          %v1197 = vpop.permute.xlu0 %1196
          %1198 = vrot.lane.b32.xlu0 %v423, 16
          %v1199 = vpop.permute.xlu0 %1198
          %1200 = vrot.lane.b32.xlu0 %v425, 16
          %v1201 = vpop.permute.xlu0 %1200
          %1202 = vrot.lane.b32.xlu0 %v428, 16
          %v1203 = vpop.permute.xlu0 %1202
          %1204 = vrot.lane.b32.xlu0 %v430, 16
          %v1205 = vpop.permute.xlu0 %1204
          %1206 = vrot.lane.b32.xlu0 %v517, 16
          %v1207 = vpop.permute.xlu0 %1206
          %1208 = vrot.lane.b32.xlu0 %v519, 16
          %v1209 = vpop.permute.xlu0 %1208
          %1242 = vrot.lane.b32.xlu0 %v439, 20
          %v1243 = vpop.permute.xlu0 %1242
          %1244 = vrot.lane.b32.xlu0 %v441, 20
          %v1245 = vpop.permute.xlu0 %1244
          %1246 = vrot.lane.b32.xlu0 %v444, 20
          %v1247 = vpop.permute.xlu0 %1246
          %1248 = vrot.lane.b32.xlu0 %v446, 20
          %v1249 = vpop.permute.xlu0 %1248
          %1250 = vrot.lane.b32.xlu0 %v449, 20
          %v1251 = vpop.permute.xlu0 %1250
          %1252 = vrot.lane.b32.xlu0 %v451, 20
          %v1253 = vpop.permute.xlu0 %1252
          %1254 = vrot.lane.b32.xlu0 %v454, 20
          %v1255 = vpop.permute.xlu0 %1254
          %1256 = vrot.lane.b32.xlu0 %v456, 20
          %v1257 = vpop.permute.xlu0 %1256
          %1258 = vrot.lane.b32.xlu0 %v459, 20
          %v1259 = vpop.permute.xlu0 %1258
          %1260 = vrot.lane.b32.xlu0 %v461, 20
          %v1261 = vpop.permute.xlu0 %1260
          %1262 = vrot.lane.b32.xlu0 %v464, 20
          %v1263 = vpop.permute.xlu0 %1262
          %1264 = vrot.lane.b32.xlu0 %v466, 20
          %v1265 = vpop.permute.xlu0 %1264
          %1266 = vrot.lane.b32.xlu0 %v469, 20
          %v1267 = vpop.permute.xlu0 %1266
          %1268 = vrot.lane.b32.xlu0 %v471, 20
          %v1269 = vpop.permute.xlu0 %1268
          %1270 = vrot.lane.b32.xlu0 %v474, 20
          %v1271 = vpop.permute.xlu0 %1270
          %1272 = vrot.lane.b32.xlu0 %v476, 20
          %v1273 = vpop.permute.xlu0 %1272
          %1274 = vrot.lane.b32.xlu0 %v479, 20
          %v1275 = vpop.permute.xlu0 %1274
          %1276 = vrot.lane.b32.xlu0 %v481, 20
          %v1277 = vpop.permute.xlu0 %1276
          %1278 = vrot.lane.b32.xlu0 %v484, 20
          %v1279 = vpop.permute.xlu0 %1278
          %1280 = vrot.lane.b32.xlu0 %v486, 20
          %v1281 = vpop.permute.xlu0 %1280
          %1282 = vrot.lane.b32.xlu0 %v489, 20
          %v1283 = vpop.permute.xlu0 %1282
          %1284 = vrot.lane.b32.xlu0 %v491, 20
          %v1285 = vpop.permute.xlu0 %1284
          %1286 = vrot.lane.b32.xlu0 %v494, 20
          %v1287 = vpop.permute.xlu0 %1286
          %1288 = vrot.lane.b32.xlu0 %v496, 20
          %v1289 = vpop.permute.xlu0 %1288
          %1290 = vrot.lane.b32.xlu0 %v499, 20
          %v1291 = vpop.permute.xlu0 %1290
          %1292 = vrot.lane.b32.xlu0 %v501, 20
          %v1293 = vpop.permute.xlu0 %1292
          %1294 = vrot.lane.b32.xlu0 %v504, 20
          %v1295 = vpop.permute.xlu0 %1294
          %1296 = vrot.lane.b32.xlu0 %v506, 20
          %v1297 = vpop.permute.xlu0 %1296
          %1298 = vrot.lane.b32.xlu0 %v509, 20
          %v1299 = vpop.permute.xlu0 %1298
          %1300 = vrot.lane.b32.xlu0 %v511, 20
          %v1301 = vpop.permute.xlu0 %1300
          %1302 = vrot.lane.b32.xlu0 %v522, 20
          %v1303 = vpop.permute.xlu0 %1302
          %1304 = vrot.lane.b32.xlu0 %v524, 20
          %v1305 = vpop.permute.xlu0 %1304
          %1338 = vrot.lane.b32.xlu0 %v254, 24
          %v1339 = vpop.permute.xlu0 %1338
          %1340 = vrot.lane.b32.xlu0 %v255, 24
          %v1341 = vpop.permute.xlu0 %1340
          %1342 = vrot.lane.b32.xlu0 %v257, 24
          %v1343 = vpop.permute.xlu0 %1342
          %1344 = vrot.lane.b32.xlu0 %v258, 24
          %v1345 = vpop.permute.xlu0 %1344
          %1346 = vrot.lane.b32.xlu0 %v260, 24
          %v1347 = vpop.permute.xlu0 %1346
          %1348 = vrot.lane.b32.xlu0 %v261, 24
          %v1349 = vpop.permute.xlu0 %1348
          %1350 = vrot.lane.b32.xlu0 %v263, 24
          %v1351 = vpop.permute.xlu0 %1350
          %1352 = vrot.lane.b32.xlu0 %v264, 24
          %v1353 = vpop.permute.xlu0 %1352
          %1354 = vrot.lane.b32.xlu0 %v266, 24
          %v1355 = vpop.permute.xlu0 %1354
          %1356 = vrot.lane.b32.xlu0 %v267, 24
          %v1357 = vpop.permute.xlu0 %1356
          %1358 = vrot.lane.b32.xlu0 %v269, 24
          %v1359 = vpop.permute.xlu0 %1358
          %1360 = vrot.lane.b32.xlu0 %v270, 24
          %v1361 = vpop.permute.xlu0 %1360
          %1362 = vrot.lane.b32.xlu0 %v272, 24
          %v1363 = vpop.permute.xlu0 %1362
          %1364 = vrot.lane.b32.xlu0 %v273, 24
          %v1365 = vpop.permute.xlu0 %1364
          %1366 = vrot.lane.b32.xlu0 %v275, 24
          %v1367 = vpop.permute.xlu0 %1366
          %1368 = vrot.lane.b32.xlu0 %v276, 24
          %v1369 = vpop.permute.xlu0 %1368
          %1370 = vrot.lane.b32.xlu0 %v278, 24
          %v1371 = vpop.permute.xlu0 %1370
          %1372 = vrot.lane.b32.xlu0 %v279, 24
          %v1373 = vpop.permute.xlu0 %1372
          %1374 = vrot.lane.b32.xlu0 %v281, 24
          %v1375 = vpop.permute.xlu0 %1374
          %1376 = vrot.lane.b32.xlu0 %v282, 24
          %v1377 = vpop.permute.xlu0 %1376
          %1378 = vrot.lane.b32.xlu0 %v284, 24
          %v1379 = vpop.permute.xlu0 %1378
          %1380 = vrot.lane.b32.xlu0 %v285, 24
          %v1381 = vpop.permute.xlu0 %1380
          %1382 = vrot.lane.b32.xlu0 %v287, 24
          %v1383 = vpop.permute.xlu0 %1382
          %1384 = vrot.lane.b32.xlu0 %v288, 24
          %v1385 = vpop.permute.xlu0 %1384
          %1386 = vrot.lane.b32.xlu0 %v290, 24
          %v1387 = vpop.permute.xlu0 %1386
          %1388 = vrot.lane.b32.xlu0 %v291, 24
          %v1389 = vpop.permute.xlu0 %1388
          %1390 = vrot.lane.b32.xlu0 %v293, 24
          %v1391 = vpop.permute.xlu0 %1390
          %1392 = vrot.lane.b32.xlu0 %v294, 24
          %v1393 = vpop.permute.xlu0 %1392
          %1394 = vrot.lane.b32.xlu0 %v296, 24
          %v1395 = vpop.permute.xlu0 %1394
          %1396 = vrot.lane.b32.xlu0 %v297, 24
          %v1397 = vpop.permute.xlu0 %1396
          %1398 = vrot.lane.b32.xlu0 %v299, 24
          %v1399 = vpop.permute.xlu0 %1398
          %1400 = vrot.lane.b32.xlu0 %v300, 24
          %v1401 = vpop.permute.xlu0 %1400
          %1434 = vrot.lane.b32.xlu0 %v363, 28
          %v1435 = vpop.permute.xlu0 %1434
          %1436 = vrot.lane.b32.xlu0 %v365, 28
          %v1437 = vpop.permute.xlu0 %1436
          %1438 = vrot.lane.b32.xlu0 %v368, 28
          %v1439 = vpop.permute.xlu0 %1438
          %1440 = vrot.lane.b32.xlu0 %v370, 28
          %v1441 = vpop.permute.xlu0 %1440
          %1442 = vrot.lane.b32.xlu0 %v373, 28
          %v1443 = vpop.permute.xlu0 %1442
          %1444 = vrot.lane.b32.xlu0 %v375, 28
          %v1445 = vpop.permute.xlu0 %1444
          %1446 = vrot.lane.b32.xlu0 %v378, 28
          %v1447 = vpop.permute.xlu0 %1446
          %1448 = vrot.lane.b32.xlu0 %v380, 28
          %v1449 = vpop.permute.xlu0 %1448
          %1450 = vrot.lane.b32.xlu0 %v383, 28
          %v1451 = vpop.permute.xlu0 %1450
          %1452 = vrot.lane.b32.xlu0 %v385, 28
          %v1453 = vpop.permute.xlu0 %1452
          %1454 = vrot.lane.b32.xlu0 %v388, 28
          %v1455 = vpop.permute.xlu0 %1454
          %1456 = vrot.lane.b32.xlu0 %v390, 28
          %v1457 = vpop.permute.xlu0 %1456
          %1458 = vrot.lane.b32.xlu0 %v393, 28
          %v1459 = vpop.permute.xlu0 %1458
          %1460 = vrot.lane.b32.xlu0 %v395, 28
          %v1461 = vpop.permute.xlu0 %1460
          %1462 = vrot.lane.b32.xlu0 %v398, 28
          %v1463 = vpop.permute.xlu0 %1462
          %1464 = vrot.lane.b32.xlu0 %v400, 28
          %v1465 = vpop.permute.xlu0 %1464
          %1466 = vrot.lane.b32.xlu0 %v403, 28
          %v1467 = vpop.permute.xlu0 %1466
          %1468 = vrot.lane.b32.xlu0 %v405, 28
          %v1469 = vpop.permute.xlu0 %1468
          %1470 = vrot.lane.b32.xlu0 %v408, 28
          %v1471 = vpop.permute.xlu0 %1470
          %1472 = vrot.lane.b32.xlu0 %v410, 28
          %v1473 = vpop.permute.xlu0 %1472
          %1474 = vrot.lane.b32.xlu0 %v413, 28
          %v1475 = vpop.permute.xlu0 %1474
          %1476 = vrot.lane.b32.xlu0 %v415, 28
          %v1477 = vpop.permute.xlu0 %1476
          %1478 = vrot.lane.b32.xlu0 %v418, 28
          %v1479 = vpop.permute.xlu0 %1478
          %1480 = vrot.lane.b32.xlu0 %v420, 28
          %v1481 = vpop.permute.xlu0 %1480
          %1482 = vrot.lane.b32.xlu0 %v423, 28
          %v1483 = vpop.permute.xlu0 %1482
          %1484 = vrot.lane.b32.xlu0 %v425, 28
          %v1485 = vpop.permute.xlu0 %1484
          %1486 = vrot.lane.b32.xlu0 %v428, 28
          %v1487 = vpop.permute.xlu0 %1486
          %1488 = vrot.lane.b32.xlu0 %v430, 28
          %v1489 = vpop.permute.xlu0 %1488
          %1490 = vrot.lane.b32.xlu0 %v517, 28
          %v1491 = vpop.permute.xlu0 %1490
          %1492 = vrot.lane.b32.xlu0 %v519, 28
          %v1493 = vpop.permute.xlu0 %1492
          %1494 = vrot.lane.b32.xlu0 %v530, 28
          %v1495 = vpop.permute.xlu0 %1494
          %1496 = vrot.lane.b32.xlu0 %v532, 28
          %v1497 = vpop.permute.xlu0 %1496
          %1530 = vrot.lane.b32.xlu0 %v444, 32
          %v1531 = vpop.permute.xlu0 %1530
          %1532 = vrot.lane.b32.xlu0 %v446, 32
          %v1533 = vpop.permute.xlu0 %1532
          %1534 = vrot.lane.b32.xlu0 %v449, 32
          %v1535 = vpop.permute.xlu0 %1534
          %1536 = vrot.lane.b32.xlu0 %v451, 32
          %v1537 = vpop.permute.xlu0 %1536
          %1538 = vrot.lane.b32.xlu0 %v454, 32
          %v1539 = vpop.permute.xlu0 %1538
          %1540 = vrot.lane.b32.xlu0 %v456, 32
          %v1541 = vpop.permute.xlu0 %1540
          %1542 = vrot.lane.b32.xlu0 %v459, 32
          %v1543 = vpop.permute.xlu0 %1542
          %1544 = vrot.lane.b32.xlu0 %v461, 32
          %v1545 = vpop.permute.xlu0 %1544
          %1546 = vrot.lane.b32.xlu0 %v464, 32
          %v1547 = vpop.permute.xlu0 %1546
          %1548 = vrot.lane.b32.xlu0 %v466, 32
          %v1549 = vpop.permute.xlu0 %1548
          %1550 = vrot.lane.b32.xlu0 %v469, 32
          %v1551 = vpop.permute.xlu0 %1550
          %1552 = vrot.lane.b32.xlu0 %v471, 32
          %v1553 = vpop.permute.xlu0 %1552
          %1554 = vrot.lane.b32.xlu0 %v474, 32
          %v1555 = vpop.permute.xlu0 %1554
          %1556 = vrot.lane.b32.xlu0 %v476, 32
          %v1557 = vpop.permute.xlu0 %1556
          %1558 = vrot.lane.b32.xlu0 %v479, 32
          %v1559 = vpop.permute.xlu0 %1558
          %1560 = vrot.lane.b32.xlu0 %v481, 32
          %v1561 = vpop.permute.xlu0 %1560
          %1562 = vrot.lane.b32.xlu0 %v484, 32
          %v1563 = vpop.permute.xlu0 %1562
          %1564 = vrot.lane.b32.xlu0 %v486, 32
          %v1565 = vpop.permute.xlu0 %1564
          %1566 = vrot.lane.b32.xlu0 %v489, 32
          %v1567 = vpop.permute.xlu0 %1566
          %1568 = vrot.lane.b32.xlu0 %v491, 32
          %v1569 = vpop.permute.xlu0 %1568
          %1570 = vrot.lane.b32.xlu0 %v494, 32
          %v1571 = vpop.permute.xlu0 %1570
          %1572 = vrot.lane.b32.xlu0 %v496, 32
          %v1573 = vpop.permute.xlu0 %1572
          %1574 = vrot.lane.b32.xlu0 %v499, 32
          %v1575 = vpop.permute.xlu0 %1574
          %1576 = vrot.lane.b32.xlu0 %v501, 32
          %v1577 = vpop.permute.xlu0 %1576
          %1578 = vrot.lane.b32.xlu0 %v504, 32
          %v1579 = vpop.permute.xlu0 %1578
          %1580 = vrot.lane.b32.xlu0 %v506, 32
          %v1581 = vpop.permute.xlu0 %1580
          %1582 = vrot.lane.b32.xlu0 %v509, 32
          %v1583 = vpop.permute.xlu0 %1582
          %1584 = vrot.lane.b32.xlu0 %v511, 32
          %v1585 = vpop.permute.xlu0 %1584
          %1586 = vrot.lane.b32.xlu0 %v522, 32
          %v1587 = vpop.permute.xlu0 %1586
          %1588 = vrot.lane.b32.xlu0 %v524, 32
          %v1589 = vpop.permute.xlu0 %1588
          %1590 = vrot.lane.b32.xlu0 %v535, 32
          %v1591 = vpop.permute.xlu0 %1590
          %1592 = vrot.lane.b32.xlu0 %v537, 32
          %v1593 = vpop.permute.xlu0 %1592
          %1626 = vrot.lane.b32.xlu0 %v538, 36
          %v1627 = vpop.permute.xlu0 %1626
          %1628 = vrot.lane.b32.xlu0 %v539, 36
          %v1629 = vpop.permute.xlu0 %1628
          %1630 = vrot.lane.b32.xlu0 %v541, 36
          %v1631 = vpop.permute.xlu0 %1630
          %1632 = vrot.lane.b32.xlu0 %v542, 36
          %v1633 = vpop.permute.xlu0 %1632
          %1634 = vrot.lane.b32.xlu0 %v544, 36
          %v1635 = vpop.permute.xlu0 %1634
          %1636 = vrot.lane.b32.xlu0 %v545, 36
          %v1637 = vpop.permute.xlu0 %1636
          %1638 = vrot.lane.b32.xlu0 %v547, 36
          %v1639 = vpop.permute.xlu0 %1638
          %1640 = vrot.lane.b32.xlu0 %v548, 36
          %v1641 = vpop.permute.xlu0 %1640
          %1642 = vrot.lane.b32.xlu0 %v550, 36
          %v1643 = vpop.permute.xlu0 %1642
          %1644 = vrot.lane.b32.xlu0 %v551, 36
          %v1645 = vpop.permute.xlu0 %1644
          %1646 = vrot.lane.b32.xlu0 %v553, 36
          %v1647 = vpop.permute.xlu0 %1646
          %1648 = vrot.lane.b32.xlu0 %v554, 36
          %v1649 = vpop.permute.xlu0 %1648
          %1650 = vrot.lane.b32.xlu0 %v556, 36
          %v1651 = vpop.permute.xlu0 %1650
          %1652 = vrot.lane.b32.xlu0 %v557, 36
          %v1653 = vpop.permute.xlu0 %1652
          %1654 = vrot.lane.b32.xlu0 %v559, 36
          %v1655 = vpop.permute.xlu0 %1654
          %1656 = vrot.lane.b32.xlu0 %v560, 36
          %v1657 = vpop.permute.xlu0 %1656
          %1658 = vrot.lane.b32.xlu0 %v562, 36
          %v1659 = vpop.permute.xlu0 %1658
          %1660 = vrot.lane.b32.xlu0 %v563, 36
          %v1661 = vpop.permute.xlu0 %1660
          %1662 = vrot.lane.b32.xlu0 %v565, 36
          %v1663 = vpop.permute.xlu0 %1662
          %1664 = vrot.lane.b32.xlu0 %v566, 36
          %v1665 = vpop.permute.xlu0 %1664
          %1666 = vrot.lane.b32.xlu0 %v568, 36
          %v1667 = vpop.permute.xlu0 %1666
          %1668 = vrot.lane.b32.xlu0 %v569, 36
          %v1669 = vpop.permute.xlu0 %1668
          %1670 = vrot.lane.b32.xlu0 %v571, 36
          %v1671 = vpop.permute.xlu0 %1670
          %1672 = vrot.lane.b32.xlu0 %v572, 36
          %v1673 = vpop.permute.xlu0 %1672
          %1674 = vrot.lane.b32.xlu0 %v574, 36
          %v1675 = vpop.permute.xlu0 %1674
          %1676 = vrot.lane.b32.xlu0 %v575, 36
          %v1677 = vpop.permute.xlu0 %1676
          %1678 = vrot.lane.b32.xlu0 %v577, 36
          %v1679 = vpop.permute.xlu0 %1678
          %1680 = vrot.lane.b32.xlu0 %v578, 36
          %v1681 = vpop.permute.xlu0 %1680
          %1682 = vrot.lane.b32.xlu0 %v580, 36
          %v1683 = vpop.permute.xlu0 %1682
          %1684 = vrot.lane.b32.xlu0 %v581, 36
          %v1685 = vpop.permute.xlu0 %1684
          %1686 = vrot.lane.b32.xlu0 %v583, 36
          %v1687 = vpop.permute.xlu0 %1686
          %1688 = vrot.lane.b32.xlu0 %v584, 36
          %v1689 = vpop.permute.xlu0 %1688
          %1722 = vrot.lane.b32.xlu0 %v642, 40
          %v1723 = vpop.permute.xlu0 %1722
          %1724 = vrot.lane.b32.xlu0 %v644, 40
          %v1725 = vpop.permute.xlu0 %1724
          %1726 = vrot.lane.b32.xlu0 %v647, 40
          %v1727 = vpop.permute.xlu0 %1726
          %1728 = vrot.lane.b32.xlu0 %v649, 40
          %v1729 = vpop.permute.xlu0 %1728
          %1730 = vrot.lane.b32.xlu0 %v652, 40
          %v1731 = vpop.permute.xlu0 %1730
          %1732 = vrot.lane.b32.xlu0 %v654, 40
          %v1733 = vpop.permute.xlu0 %1732
          %1734 = vrot.lane.b32.xlu0 %v657, 40
          %v1735 = vpop.permute.xlu0 %1734
          %1736 = vrot.lane.b32.xlu0 %v659, 40
          %v1737 = vpop.permute.xlu0 %1736
          %1738 = vrot.lane.b32.xlu0 %v662, 40
          %v1739 = vpop.permute.xlu0 %1738
          %1740 = vrot.lane.b32.xlu0 %v664, 40
          %v1741 = vpop.permute.xlu0 %1740
          %1742 = vrot.lane.b32.xlu0 %v667, 40
          %v1743 = vpop.permute.xlu0 %1742
          %1744 = vrot.lane.b32.xlu0 %v669, 40
          %v1745 = vpop.permute.xlu0 %1744
          %1746 = vrot.lane.b32.xlu0 %v672, 40
          %v1747 = vpop.permute.xlu0 %1746
          %1748 = vrot.lane.b32.xlu0 %v674, 40
          %v1749 = vpop.permute.xlu0 %1748
          %1750 = vrot.lane.b32.xlu0 %v677, 40
          %v1751 = vpop.permute.xlu0 %1750
          %1752 = vrot.lane.b32.xlu0 %v679, 40
          %v1753 = vpop.permute.xlu0 %1752
          %1754 = vrot.lane.b32.xlu0 %v682, 40
          %v1755 = vpop.permute.xlu0 %1754
          %1756 = vrot.lane.b32.xlu0 %v684, 40
          %v1757 = vpop.permute.xlu0 %1756
          %1758 = vrot.lane.b32.xlu0 %v687, 40
          %v1759 = vpop.permute.xlu0 %1758
          %1760 = vrot.lane.b32.xlu0 %v689, 40
          %v1761 = vpop.permute.xlu0 %1760
          %1762 = vrot.lane.b32.xlu0 %v692, 40
          %v1763 = vpop.permute.xlu0 %1762
          %1764 = vrot.lane.b32.xlu0 %v694, 40
          %v1765 = vpop.permute.xlu0 %1764
          %1766 = vrot.lane.b32.xlu0 %v697, 40
          %v1767 = vpop.permute.xlu0 %1766
          %1768 = vrot.lane.b32.xlu0 %v699, 40
          %v1769 = vpop.permute.xlu0 %1768
          %1770 = vrot.lane.b32.xlu0 %v702, 40
          %v1771 = vpop.permute.xlu0 %1770
          %1772 = vrot.lane.b32.xlu0 %v704, 40
          %v1773 = vpop.permute.xlu0 %1772
          %1774 = vrot.lane.b32.xlu0 %v707, 40
          %v1775 = vpop.permute.xlu0 %1774
          %1776 = vrot.lane.b32.xlu0 %v709, 40
          %v1777 = vpop.permute.xlu0 %1776
          %1778 = vrot.lane.b32.xlu0 %v712, 40
          %v1779 = vpop.permute.xlu0 %1778
          %1780 = vrot.lane.b32.xlu0 %v714, 40
          %v1781 = vpop.permute.xlu0 %1780
          %1782 = vrot.lane.b32.xlu0 %v717, 40
          %v1783 = vpop.permute.xlu0 %1782
          %1784 = vrot.lane.b32.xlu0 %v719, 40
          %v1785 = vpop.permute.xlu0 %1784
          %1818 = vrot.lane.b32.xlu0 %v722, 44
          %v1819 = vpop.permute.xlu0 %1818
          %1820 = vrot.lane.b32.xlu0 %v724, 44
          %v1821 = vpop.permute.xlu0 %1820
          %1822 = vrot.lane.b32.xlu0 %v727, 44
          %v1823 = vpop.permute.xlu0 %1822
          %1824 = vrot.lane.b32.xlu0 %v729, 44
          %v1825 = vpop.permute.xlu0 %1824
          %1826 = vrot.lane.b32.xlu0 %v732, 44
          %v1827 = vpop.permute.xlu0 %1826
          %1828 = vrot.lane.b32.xlu0 %v734, 44
          %v1829 = vpop.permute.xlu0 %1828
          %1830 = vrot.lane.b32.xlu0 %v737, 44
          %v1831 = vpop.permute.xlu0 %1830
          %1832 = vrot.lane.b32.xlu0 %v739, 44
          %v1833 = vpop.permute.xlu0 %1832
          %1834 = vrot.lane.b32.xlu0 %v742, 44
          %v1835 = vpop.permute.xlu0 %1834
          %1836 = vrot.lane.b32.xlu0 %v744, 44
          %v1837 = vpop.permute.xlu0 %1836
          %1838 = vrot.lane.b32.xlu0 %v747, 44
          %v1839 = vpop.permute.xlu0 %1838
          %1840 = vrot.lane.b32.xlu0 %v749, 44
          %v1841 = vpop.permute.xlu0 %1840
          %1842 = vrot.lane.b32.xlu0 %v752, 44
          %v1843 = vpop.permute.xlu0 %1842
          %1844 = vrot.lane.b32.xlu0 %v754, 44
          %v1845 = vpop.permute.xlu0 %1844
          %1846 = vrot.lane.b32.xlu0 %v757, 44
          %v1847 = vpop.permute.xlu0 %1846
          %1848 = vrot.lane.b32.xlu0 %v759, 44
          %v1849 = vpop.permute.xlu0 %1848
          %1850 = vrot.lane.b32.xlu0 %v762, 44
          %v1851 = vpop.permute.xlu0 %1850
          %1852 = vrot.lane.b32.xlu0 %v764, 44
          %v1853 = vpop.permute.xlu0 %1852
          %1854 = vrot.lane.b32.xlu0 %v767, 44
          %v1855 = vpop.permute.xlu0 %1854
          %1856 = vrot.lane.b32.xlu0 %v769, 44
          %v1857 = vpop.permute.xlu0 %1856
          %1858 = vrot.lane.b32.xlu0 %v772, 44
          %v1859 = vpop.permute.xlu0 %1858
          %1860 = vrot.lane.b32.xlu0 %v774, 44
          %v1861 = vpop.permute.xlu0 %1860
          %1862 = vrot.lane.b32.xlu0 %v777, 44
          %v1863 = vpop.permute.xlu0 %1862
          %1864 = vrot.lane.b32.xlu0 %v779, 44
          %v1865 = vpop.permute.xlu0 %1864
          %1866 = vrot.lane.b32.xlu0 %v782, 44
          %v1867 = vpop.permute.xlu0 %1866
          %1868 = vrot.lane.b32.xlu0 %v784, 44
          %v1869 = vpop.permute.xlu0 %1868
          %1870 = vrot.lane.b32.xlu0 %v787, 44
          %v1871 = vpop.permute.xlu0 %1870
          %1872 = vrot.lane.b32.xlu0 %v789, 44
          %v1873 = vpop.permute.xlu0 %1872
          %1874 = vrot.lane.b32.xlu0 %v792, 44
          %v1875 = vpop.permute.xlu0 %1874
          %1876 = vrot.lane.b32.xlu0 %v794, 44
          %v1877 = vpop.permute.xlu0 %1876
          %1878 = vrot.lane.b32.xlu0 %v797, 44
          %v1879 = vpop.permute.xlu0 %1878
          %1880 = vrot.lane.b32.xlu0 %v799, 44
          %v1881 = vpop.permute.xlu0 %1880
          %1914 = vrot.lane.b32.xlu0 %v541, 48
          %v1915 = vpop.permute.xlu0 %1914
          %1916 = vrot.lane.b32.xlu0 %v542, 48
          %v1917 = vpop.permute.xlu0 %1916
          %1918 = vrot.lane.b32.xlu0 %v544, 48
          %v1919 = vpop.permute.xlu0 %1918
          %1920 = vrot.lane.b32.xlu0 %v545, 48
          %v1921 = vpop.permute.xlu0 %1920
          %1922 = vrot.lane.b32.xlu0 %v547, 48
          %v1923 = vpop.permute.xlu0 %1922
          %1924 = vrot.lane.b32.xlu0 %v548, 48
          %v1925 = vpop.permute.xlu0 %1924
          %1926 = vrot.lane.b32.xlu0 %v550, 48
          %v1927 = vpop.permute.xlu0 %1926
          %1928 = vrot.lane.b32.xlu0 %v551, 48
          %v1929 = vpop.permute.xlu0 %1928
          %1930 = vrot.lane.b32.xlu0 %v553, 48
          %v1931 = vpop.permute.xlu0 %1930
          %1932 = vrot.lane.b32.xlu0 %v554, 48
          %v1933 = vpop.permute.xlu0 %1932
          %1934 = vrot.lane.b32.xlu0 %v556, 48
          %v1935 = vpop.permute.xlu0 %1934
          %1936 = vrot.lane.b32.xlu0 %v557, 48
          %v1937 = vpop.permute.xlu0 %1936
          %1938 = vrot.lane.b32.xlu0 %v559, 48
          %v1939 = vpop.permute.xlu0 %1938
          %1940 = vrot.lane.b32.xlu0 %v560, 48
          %v1941 = vpop.permute.xlu0 %1940
          %1942 = vrot.lane.b32.xlu0 %v562, 48
          %v1943 = vpop.permute.xlu0 %1942
          %1944 = vrot.lane.b32.xlu0 %v563, 48
          %v1945 = vpop.permute.xlu0 %1944
          %1946 = vrot.lane.b32.xlu0 %v565, 48
          %v1947 = vpop.permute.xlu0 %1946
          %1948 = vrot.lane.b32.xlu0 %v566, 48
          %v1949 = vpop.permute.xlu0 %1948
          %1950 = vrot.lane.b32.xlu0 %v568, 48
          %v1951 = vpop.permute.xlu0 %1950
          %1952 = vrot.lane.b32.xlu0 %v569, 48
          %v1953 = vpop.permute.xlu0 %1952
          %1954 = vrot.lane.b32.xlu0 %v571, 48
          %v1955 = vpop.permute.xlu0 %1954
          %1956 = vrot.lane.b32.xlu0 %v572, 48
          %v1957 = vpop.permute.xlu0 %1956
          %1958 = vrot.lane.b32.xlu0 %v574, 48
          %v1959 = vpop.permute.xlu0 %1958
          %1960 = vrot.lane.b32.xlu0 %v575, 48
          %v1961 = vpop.permute.xlu0 %1960
          %1962 = vrot.lane.b32.xlu0 %v577, 48
          %v1963 = vpop.permute.xlu0 %1962
          %1964 = vrot.lane.b32.xlu0 %v578, 48
          %v1965 = vpop.permute.xlu0 %1964
          %1966 = vrot.lane.b32.xlu0 %v580, 48
          %v1967 = vpop.permute.xlu0 %1966
          %1968 = vrot.lane.b32.xlu0 %v581, 48
          %v1969 = vpop.permute.xlu0 %1968
          %1970 = vrot.lane.b32.xlu0 %v583, 48
          %v1971 = vpop.permute.xlu0 %1970
          %1972 = vrot.lane.b32.xlu0 %v584, 48
          %v1973 = vpop.permute.xlu0 %1972
          %1974 = vrot.lane.b32.xlu0 %v586, 48
          %v1975 = vpop.permute.xlu0 %1974
          %1976 = vrot.lane.b32.xlu0 %v587, 48
          %v1977 = vpop.permute.xlu0 %1976
          %2010 = vrot.lane.b32.xlu0 %v647, 52
          %v2011 = vpop.permute.xlu0 %2010
          %2012 = vrot.lane.b32.xlu0 %v649, 52
          %v2013 = vpop.permute.xlu0 %2012
          %2014 = vrot.lane.b32.xlu0 %v652, 52
          %v2015 = vpop.permute.xlu0 %2014
          %2016 = vrot.lane.b32.xlu0 %v654, 52
          %v2017 = vpop.permute.xlu0 %2016
          %2018 = vrot.lane.b32.xlu0 %v657, 52
          %v2019 = vpop.permute.xlu0 %2018
          %2020 = vrot.lane.b32.xlu0 %v659, 52
          %v2021 = vpop.permute.xlu0 %2020
          %2022 = vrot.lane.b32.xlu0 %v662, 52
          %v2023 = vpop.permute.xlu0 %2022
          %2024 = vrot.lane.b32.xlu0 %v664, 52
          %v2025 = vpop.permute.xlu0 %2024
          %2026 = vrot.lane.b32.xlu0 %v667, 52
          %v2027 = vpop.permute.xlu0 %2026
          %2028 = vrot.lane.b32.xlu0 %v669, 52
          %v2029 = vpop.permute.xlu0 %2028
          %2030 = vrot.lane.b32.xlu0 %v672, 52
          %v2031 = vpop.permute.xlu0 %2030
          %2032 = vrot.lane.b32.xlu0 %v674, 52
          %v2033 = vpop.permute.xlu0 %2032
          %2034 = vrot.lane.b32.xlu0 %v677, 52
          %v2035 = vpop.permute.xlu0 %2034
          %2036 = vrot.lane.b32.xlu0 %v679, 52
          %v2037 = vpop.permute.xlu0 %2036
          %2038 = vrot.lane.b32.xlu0 %v682, 52
          %v2039 = vpop.permute.xlu0 %2038
          %2040 = vrot.lane.b32.xlu0 %v684, 52
          %v2041 = vpop.permute.xlu0 %2040
          %2042 = vrot.lane.b32.xlu0 %v687, 52
          %v2043 = vpop.permute.xlu0 %2042
          %2044 = vrot.lane.b32.xlu0 %v689, 52
          %v2045 = vpop.permute.xlu0 %2044
          %2046 = vrot.lane.b32.xlu0 %v692, 52
          %v2047 = vpop.permute.xlu0 %2046
          %2048 = vrot.lane.b32.xlu0 %v694, 52
          %v2049 = vpop.permute.xlu0 %2048
          %2050 = vrot.lane.b32.xlu0 %v697, 52
          %v2051 = vpop.permute.xlu0 %2050
          %2052 = vrot.lane.b32.xlu0 %v699, 52
          %v2053 = vpop.permute.xlu0 %2052
          %2054 = vrot.lane.b32.xlu0 %v702, 52
          %v2055 = vpop.permute.xlu0 %2054
          %2056 = vrot.lane.b32.xlu0 %v704, 52
          %v2057 = vpop.permute.xlu0 %2056
          %2058 = vrot.lane.b32.xlu0 %v707, 52
          %v2059 = vpop.permute.xlu0 %2058
          %2060 = vrot.lane.b32.xlu0 %v709, 52
          %v2061 = vpop.permute.xlu0 %2060
          %2062 = vrot.lane.b32.xlu0 %v712, 52
          %v2063 = vpop.permute.xlu0 %2062
          %2064 = vrot.lane.b32.xlu0 %v714, 52
          %v2065 = vpop.permute.xlu0 %2064
          %2066 = vrot.lane.b32.xlu0 %v717, 52
          %v2067 = vpop.permute.xlu0 %2066
          %2068 = vrot.lane.b32.xlu0 %v719, 52
          %v2069 = vpop.permute.xlu0 %2068
          %2070 = vrot.lane.b32.xlu0 %v805, 52
          %v2071 = vpop.permute.xlu0 %2070
          %2072 = vrot.lane.b32.xlu0 %v807, 52
          %v2073 = vpop.permute.xlu0 %2072
          %2106 = vrot.lane.b32.xlu0 %v727, 56
          %v2107 = vpop.permute.xlu0 %2106
          %2108 = vrot.lane.b32.xlu0 %v729, 56
          %v2109 = vpop.permute.xlu0 %2108
          %2110 = vrot.lane.b32.xlu0 %v732, 56
          %v2111 = vpop.permute.xlu0 %2110
          %2112 = vrot.lane.b32.xlu0 %v734, 56
          %v2113 = vpop.permute.xlu0 %2112
          %2114 = vrot.lane.b32.xlu0 %v737, 56
          %v2115 = vpop.permute.xlu0 %2114
          %2116 = vrot.lane.b32.xlu0 %v739, 56
          %v2117 = vpop.permute.xlu0 %2116
          %2118 = vrot.lane.b32.xlu0 %v742, 56
          %v2119 = vpop.permute.xlu0 %2118
          %2120 = vrot.lane.b32.xlu0 %v744, 56
          %v2121 = vpop.permute.xlu0 %2120
          %2122 = vrot.lane.b32.xlu0 %v747, 56
          %v2123 = vpop.permute.xlu0 %2122
          %2124 = vrot.lane.b32.xlu0 %v749, 56
          %v2125 = vpop.permute.xlu0 %2124
          %2126 = vrot.lane.b32.xlu0 %v752, 56
          %v2127 = vpop.permute.xlu0 %2126
          %2128 = vrot.lane.b32.xlu0 %v754, 56
          %v2129 = vpop.permute.xlu0 %2128
          %2130 = vrot.lane.b32.xlu0 %v757, 56
          %v2131 = vpop.permute.xlu0 %2130
          %2132 = vrot.lane.b32.xlu0 %v759, 56
          %v2133 = vpop.permute.xlu0 %2132
          %2134 = vrot.lane.b32.xlu0 %v762, 56
          %v2135 = vpop.permute.xlu0 %2134
          %2136 = vrot.lane.b32.xlu0 %v764, 56
          %v2137 = vpop.permute.xlu0 %2136
          %2138 = vrot.lane.b32.xlu0 %v767, 56
          %v2139 = vpop.permute.xlu0 %2138
          %2140 = vrot.lane.b32.xlu0 %v769, 56
          %v2141 = vpop.permute.xlu0 %2140
          %2142 = vrot.lane.b32.xlu0 %v772, 56
          %v2143 = vpop.permute.xlu0 %2142
          %2144 = vrot.lane.b32.xlu0 %v774, 56
          %v2145 = vpop.permute.xlu0 %2144
          %2146 = vrot.lane.b32.xlu0 %v777, 56
          %v2147 = vpop.permute.xlu0 %2146
          %2148 = vrot.lane.b32.xlu0 %v779, 56
          %v2149 = vpop.permute.xlu0 %2148
          %2150 = vrot.lane.b32.xlu0 %v782, 56
          %v2151 = vpop.permute.xlu0 %2150
          %2152 = vrot.lane.b32.xlu0 %v784, 56
          %v2153 = vpop.permute.xlu0 %2152
          %2154 = vrot.lane.b32.xlu0 %v787, 56
          %v2155 = vpop.permute.xlu0 %2154
          %2156 = vrot.lane.b32.xlu0 %v789, 56
          %v2157 = vpop.permute.xlu0 %2156
          %2158 = vrot.lane.b32.xlu0 %v792, 56
          %v2159 = vpop.permute.xlu0 %2158
          %2160 = vrot.lane.b32.xlu0 %v794, 56
          %v2161 = vpop.permute.xlu0 %2160
          %2162 = vrot.lane.b32.xlu0 %v797, 56
          %v2163 = vpop.permute.xlu0 %2162
          %2164 = vrot.lane.b32.xlu0 %v799, 56
          %v2165 = vpop.permute.xlu0 %2164
          %2166 = vrot.lane.b32.xlu0 %v810, 56
          %v2167 = vpop.permute.xlu0 %2166
          %2168 = vrot.lane.b32.xlu0 %v812, 56
          %v2169 = vpop.permute.xlu0 %2168
          %2202 = vrot.lane.b32.xlu0 %v544, 60
          %v2203 = vpop.permute.xlu0 %2202
          %2204 = vrot.lane.b32.xlu0 %v545, 60
          %v2205 = vpop.permute.xlu0 %2204
          %2206 = vrot.lane.b32.xlu0 %v547, 60
          %v2207 = vpop.permute.xlu0 %2206
          %2208 = vrot.lane.b32.xlu0 %v548, 60
          %v2209 = vpop.permute.xlu0 %2208
          %2210 = vrot.lane.b32.xlu0 %v550, 60
          %v2211 = vpop.permute.xlu0 %2210
          %2212 = vrot.lane.b32.xlu0 %v551, 60
          %v2213 = vpop.permute.xlu0 %2212
          %2214 = vrot.lane.b32.xlu0 %v553, 60
          %v2215 = vpop.permute.xlu0 %2214
          %2216 = vrot.lane.b32.xlu0 %v554, 60
          %v2217 = vpop.permute.xlu0 %2216
          %2218 = vrot.lane.b32.xlu0 %v556, 60
          %v2219 = vpop.permute.xlu0 %2218
          %2220 = vrot.lane.b32.xlu0 %v557, 60
          %v2221 = vpop.permute.xlu0 %2220
          %2222 = vrot.lane.b32.xlu0 %v559, 60
          %v2223 = vpop.permute.xlu0 %2222
          %2224 = vrot.lane.b32.xlu0 %v560, 60
          %v2225 = vpop.permute.xlu0 %2224
          %2226 = vrot.lane.b32.xlu0 %v562, 60
          %v2227 = vpop.permute.xlu0 %2226
          %2228 = vrot.lane.b32.xlu0 %v563, 60
          %v2229 = vpop.permute.xlu0 %2228
          %2230 = vrot.lane.b32.xlu0 %v565, 60
          %v2231 = vpop.permute.xlu0 %2230
          %2232 = vrot.lane.b32.xlu0 %v566, 60
          %v2233 = vpop.permute.xlu0 %2232
          %2234 = vrot.lane.b32.xlu0 %v568, 60
          %v2235 = vpop.permute.xlu0 %2234
          %2236 = vrot.lane.b32.xlu0 %v569, 60
          %v2237 = vpop.permute.xlu0 %2236
          %2238 = vrot.lane.b32.xlu0 %v571, 60
          %v2239 = vpop.permute.xlu0 %2238
          %2240 = vrot.lane.b32.xlu0 %v572, 60
          %v2241 = vpop.permute.xlu0 %2240
          %2242 = vrot.lane.b32.xlu0 %v574, 60
          %v2243 = vpop.permute.xlu0 %2242
          %2244 = vrot.lane.b32.xlu0 %v575, 60
          %v2245 = vpop.permute.xlu0 %2244
          %2246 = vrot.lane.b32.xlu0 %v577, 60
          %v2247 = vpop.permute.xlu0 %2246
          %2248 = vrot.lane.b32.xlu0 %v578, 60
          %v2249 = vpop.permute.xlu0 %2248
          %2250 = vrot.lane.b32.xlu0 %v580, 60
          %v2251 = vpop.permute.xlu0 %2250
          %2252 = vrot.lane.b32.xlu0 %v581, 60
          %v2253 = vpop.permute.xlu0 %2252
          %2254 = vrot.lane.b32.xlu0 %v583, 60
          %v2255 = vpop.permute.xlu0 %2254
          %2256 = vrot.lane.b32.xlu0 %v584, 60
          %v2257 = vpop.permute.xlu0 %2256
          %2258 = vrot.lane.b32.xlu0 %v586, 60
          %v2259 = vpop.permute.xlu0 %2258
          %2260 = vrot.lane.b32.xlu0 %v587, 60
          %v2261 = vpop.permute.xlu0 %2260
          %2262 = vrot.lane.b32.xlu0 %v589, 60
          %v2263 = vpop.permute.xlu0 %2262
          %2264 = vrot.lane.b32.xlu0 %v590, 60
          %v2265 = vpop.permute.xlu0 %2264
          %vm2298 = vcmask 31744
          %v2299 = vsel %vm2298, %v248, %v859
          %v2300 = vsel %vm2298, %v249, %v861
          %v2301 = vsel %vm2298, %v251, %v863
          %v2302 = vsel %vm2298, %v252, %v865
          %v2303 = vsel %vm2298, %v254, %v867
          %v2304 = vsel %vm2298, %v255, %v869
          %v2305 = vsel %vm2298, %v257, %v871
          %v2306 = vsel %vm2298, %v258, %v873
          %v2307 = vsel %vm2298, %v260, %v875
          %v2308 = vsel %vm2298, %v261, %v877
          %v2309 = vsel %vm2298, %v263, %v879
          %v2310 = vsel %vm2298, %v264, %v881
          %v2311 = vsel %vm2298, %v266, %v883
          %v2312 = vsel %vm2298, %v267, %v885
          %v2313 = vsel %vm2298, %v269, %v887
          %v2314 = vsel %vm2298, %v270, %v889
          %v2315 = vsel %vm2298, %v272, %v891
          %v2316 = vsel %vm2298, %v273, %v893
          %v2317 = vsel %vm2298, %v275, %v895
          %v2318 = vsel %vm2298, %v276, %v897
          %v2319 = vsel %vm2298, %v278, %v899
          %v2320 = vsel %vm2298, %v279, %v901
          %v2321 = vsel %vm2298, %v281, %v903
          %v2322 = vsel %vm2298, %v282, %v905
          %v2323 = vsel %vm2298, %v284, %v907
          %v2324 = vsel %vm2298, %v285, %v909
          %v2325 = vsel %vm2298, %v287, %v911
          %v2326 = vsel %vm2298, %v288, %v913
          %v2327 = vsel %vm2298, %v290, %v915
          %v2328 = vsel %vm2298, %v291, %v917
          %v2329 = vsel %vm2298, %v293, %v919
          %v2330 = vsel %vm2298, %v294, %v921
          %vm2331 = vcmask 64512
          %v2332 = vsel %vm2331, %v2299, %v955
          %v2333 = vsel %vm2331, %v2300, %v957
          %v2334 = vsel %vm2331, %v2301, %v959
          %v2335 = vsel %vm2331, %v2302, %v961
          %v2336 = vsel %vm2331, %v2303, %v963
          %v2337 = vsel %vm2331, %v2304, %v965
          %v2338 = vsel %vm2331, %v2305, %v967
          %v2339 = vsel %vm2331, %v2306, %v969
          %v2340 = vsel %vm2331, %v2307, %v971
          %v2341 = vsel %vm2331, %v2308, %v973
          %v2342 = vsel %vm2331, %v2309, %v975
          %v2343 = vsel %vm2331, %v2310, %v977
          %v2344 = vsel %vm2331, %v2311, %v979
          %v2345 = vsel %vm2331, %v2312, %v981
          %v2346 = vsel %vm2331, %v2313, %v983
          %v2347 = vsel %vm2331, %v2314, %v985
          %v2348 = vsel %vm2331, %v2315, %v987
          %v2349 = vsel %vm2331, %v2316, %v989
          %v2350 = vsel %vm2331, %v2317, %v991
          %v2351 = vsel %vm2331, %v2318, %v993
          %v2352 = vsel %vm2331, %v2319, %v995
          %v2353 = vsel %vm2331, %v2320, %v997
          %v2354 = vsel %vm2331, %v2321, %v999
          %v2355 = vsel %vm2331, %v2322, %v1001
          %v2356 = vsel %vm2331, %v2323, %v1003
          %v2357 = vsel %vm2331, %v2324, %v1005
          %v2358 = vsel %vm2331, %v2325, %v1007
          %v2359 = vsel %vm2331, %v2326, %v1009
          %v2360 = vsel %vm2331, %v2327, %v1011
          %v2361 = vsel %vm2331, %v2328, %v1013
          %v2362 = vsel %vm2331, %v2329, %v1015
          %v2363 = vsel %vm2331, %v2330, %v1017
          %vm2364 = vcmask 97280
          %v2365 = vsel %vm2364, %v2332, %v1051
          %v2366 = vsel %vm2364, %v2333, %v1053
          %v2367 = vsel %vm2364, %v2334, %v1055
          %v2368 = vsel %vm2364, %v2335, %v1057
          %v2369 = vsel %vm2364, %v2336, %v1059
          %v2370 = vsel %vm2364, %v2337, %v1061
          %v2371 = vsel %vm2364, %v2338, %v1063
          %v2372 = vsel %vm2364, %v2339, %v1065
          %v2373 = vsel %vm2364, %v2340, %v1067
          %v2374 = vsel %vm2364, %v2341, %v1069
          %v2375 = vsel %vm2364, %v2342, %v1071
          %v2376 = vsel %vm2364, %v2343, %v1073
          %v2377 = vsel %vm2364, %v2344, %v1075
          %v2378 = vsel %vm2364, %v2345, %v1077
          %v2379 = vsel %vm2364, %v2346, %v1079
          %v2380 = vsel %vm2364, %v2347, %v1081
          %v2381 = vsel %vm2364, %v2348, %v1083
          %v2382 = vsel %vm2364, %v2349, %v1085
          %v2383 = vsel %vm2364, %v2350, %v1087
          %v2384 = vsel %vm2364, %v2351, %v1089
          %v2385 = vsel %vm2364, %v2352, %v1091
          %v2386 = vsel %vm2364, %v2353, %v1093
          %v2387 = vsel %vm2364, %v2354, %v1095
          %v2388 = vsel %vm2364, %v2355, %v1097
          %v2389 = vsel %vm2364, %v2356, %v1099
          %v2390 = vsel %vm2364, %v2357, %v1101
          %v2391 = vsel %vm2364, %v2358, %v1103
          %v2392 = vsel %vm2364, %v2359, %v1105
          %v2393 = vsel %vm2364, %v2360, %v1107
          %v2394 = vsel %vm2364, %v2361, %v1109
          %v2395 = vsel %vm2364, %v2362, %v1111
          %v2396 = vsel %vm2364, %v2363, %v1113
          %vm2397 = vcmask 130048
          %v2398 = vsel %vm2397, %v2365, %v1147
          %v2399 = vsel %vm2397, %v2366, %v1149
          %v2400 = vsel %vm2397, %v2367, %v1151
          %v2401 = vsel %vm2397, %v2368, %v1153
          %v2402 = vsel %vm2397, %v2369, %v1155
          %v2403 = vsel %vm2397, %v2370, %v1157
          %v2404 = vsel %vm2397, %v2371, %v1159
          %v2405 = vsel %vm2397, %v2372, %v1161
          %v2406 = vsel %vm2397, %v2373, %v1163
          %v2407 = vsel %vm2397, %v2374, %v1165
          %v2408 = vsel %vm2397, %v2375, %v1167
          %v2409 = vsel %vm2397, %v2376, %v1169
          %v2410 = vsel %vm2397, %v2377, %v1171
          %v2411 = vsel %vm2397, %v2378, %v1173
          %v2412 = vsel %vm2397, %v2379, %v1175
          %v2413 = vsel %vm2397, %v2380, %v1177
          %v2414 = vsel %vm2397, %v2381, %v1179
          %v2415 = vsel %vm2397, %v2382, %v1181
          %v2416 = vsel %vm2397, %v2383, %v1183
          %v2417 = vsel %vm2397, %v2384, %v1185
          %v2418 = vsel %vm2397, %v2385, %v1187
          %v2419 = vsel %vm2397, %v2386, %v1189
          %v2420 = vsel %vm2397, %v2387, %v1191
          %v2421 = vsel %vm2397, %v2388, %v1193
          %v2422 = vsel %vm2397, %v2389, %v1195
          %v2423 = vsel %vm2397, %v2390, %v1197
          %v2424 = vsel %vm2397, %v2391, %v1199
          %v2425 = vsel %vm2397, %v2392, %v1201
          %v2426 = vsel %vm2397, %v2393, %v1203
          %v2427 = vsel %vm2397, %v2394, %v1205
          %v2428 = vsel %vm2397, %v2395, %v1207
          %v2429 = vsel %vm2397, %v2396, %v1209
          %vm2430 = vcmask 162816
          %v2431 = vsel %vm2430, %v2398, %v1243
          %v2432 = vsel %vm2430, %v2399, %v1245
          %v2433 = vsel %vm2430, %v2400, %v1247
          %v2434 = vsel %vm2430, %v2401, %v1249
          %v2435 = vsel %vm2430, %v2402, %v1251
          %v2436 = vsel %vm2430, %v2403, %v1253
          %v2437 = vsel %vm2430, %v2404, %v1255
          %v2438 = vsel %vm2430, %v2405, %v1257
          %v2439 = vsel %vm2430, %v2406, %v1259
          %v2440 = vsel %vm2430, %v2407, %v1261
          %v2441 = vsel %vm2430, %v2408, %v1263
          %v2442 = vsel %vm2430, %v2409, %v1265
          %v2443 = vsel %vm2430, %v2410, %v1267
          %v2444 = vsel %vm2430, %v2411, %v1269
          %v2445 = vsel %vm2430, %v2412, %v1271
          %v2446 = vsel %vm2430, %v2413, %v1273
          %v2447 = vsel %vm2430, %v2414, %v1275
          %v2448 = vsel %vm2430, %v2415, %v1277
          %v2449 = vsel %vm2430, %v2416, %v1279
          %v2450 = vsel %vm2430, %v2417, %v1281
          %v2451 = vsel %vm2430, %v2418, %v1283
          %v2452 = vsel %vm2430, %v2419, %v1285
          %v2453 = vsel %vm2430, %v2420, %v1287
          %v2454 = vsel %vm2430, %v2421, %v1289
          %v2455 = vsel %vm2430, %v2422, %v1291
          %v2456 = vsel %vm2430, %v2423, %v1293
          %v2457 = vsel %vm2430, %v2424, %v1295
          %v2458 = vsel %vm2430, %v2425, %v1297
          %v2459 = vsel %vm2430, %v2426, %v1299
          %v2460 = vsel %vm2430, %v2427, %v1301
          %v2461 = vsel %vm2430, %v2428, %v1303
          %v2462 = vsel %vm2430, %v2429, %v1305
          %vm2463 = vcmask 195584
          %v2464 = vsel %vm2463, %v2431, %v1339
          %v2465 = vsel %vm2463, %v2432, %v1341
          %v2466 = vsel %vm2463, %v2433, %v1343
          %v2467 = vsel %vm2463, %v2434, %v1345
          %v2468 = vsel %vm2463, %v2435, %v1347
          %v2469 = vsel %vm2463, %v2436, %v1349
          %v2470 = vsel %vm2463, %v2437, %v1351
          %v2471 = vsel %vm2463, %v2438, %v1353
          %v2472 = vsel %vm2463, %v2439, %v1355
          %v2473 = vsel %vm2463, %v2440, %v1357
          %v2474 = vsel %vm2463, %v2441, %v1359
          %v2475 = vsel %vm2463, %v2442, %v1361
          %v2476 = vsel %vm2463, %v2443, %v1363
          %v2477 = vsel %vm2463, %v2444, %v1365
          %v2478 = vsel %vm2463, %v2445, %v1367
          %v2479 = vsel %vm2463, %v2446, %v1369
          %v2480 = vsel %vm2463, %v2447, %v1371
          %v2481 = vsel %vm2463, %v2448, %v1373
          %v2482 = vsel %vm2463, %v2449, %v1375
          %v2483 = vsel %vm2463, %v2450, %v1377
          %v2484 = vsel %vm2463, %v2451, %v1379
          %v2485 = vsel %vm2463, %v2452, %v1381
          %v2486 = vsel %vm2463, %v2453, %v1383
          %v2487 = vsel %vm2463, %v2454, %v1385
          %v2488 = vsel %vm2463, %v2455, %v1387
          %v2489 = vsel %vm2463, %v2456, %v1389
          %v2490 = vsel %vm2463, %v2457, %v1391
          %v2491 = vsel %vm2463, %v2458, %v1393
          %v2492 = vsel %vm2463, %v2459, %v1395
          %v2493 = vsel %vm2463, %v2460, %v1397
          %v2494 = vsel %vm2463, %v2461, %v1399
          %v2495 = vsel %vm2463, %v2462, %v1401
          %vm2496 = vcmask 228352
          %v2497 = vsel %vm2496, %v2464, %v1435
          %v2498 = vsel %vm2496, %v2465, %v1437
          %v2499 = vsel %vm2496, %v2466, %v1439
          %v2500 = vsel %vm2496, %v2467, %v1441
          %v2501 = vsel %vm2496, %v2468, %v1443
          %v2502 = vsel %vm2496, %v2469, %v1445
          %v2503 = vsel %vm2496, %v2470, %v1447
          %v2504 = vsel %vm2496, %v2471, %v1449
          %v2505 = vsel %vm2496, %v2472, %v1451
          %v2506 = vsel %vm2496, %v2473, %v1453
          %v2507 = vsel %vm2496, %v2474, %v1455
          %v2508 = vsel %vm2496, %v2475, %v1457
          %v2509 = vsel %vm2496, %v2476, %v1459
          %v2510 = vsel %vm2496, %v2477, %v1461
          %v2511 = vsel %vm2496, %v2478, %v1463
          %v2512 = vsel %vm2496, %v2479, %v1465
          %v2513 = vsel %vm2496, %v2480, %v1467
          %v2514 = vsel %vm2496, %v2481, %v1469
          %v2515 = vsel %vm2496, %v2482, %v1471
          %v2516 = vsel %vm2496, %v2483, %v1473
          %v2517 = vsel %vm2496, %v2484, %v1475
          %v2518 = vsel %vm2496, %v2485, %v1477
          %v2519 = vsel %vm2496, %v2486, %v1479
          %v2520 = vsel %vm2496, %v2487, %v1481
          %v2521 = vsel %vm2496, %v2488, %v1483
          %v2522 = vsel %vm2496, %v2489, %v1485
          %v2523 = vsel %vm2496, %v2490, %v1487
          %v2524 = vsel %vm2496, %v2491, %v1489
          %v2525 = vsel %vm2496, %v2492, %v1491
          %v2526 = vsel %vm2496, %v2493, %v1493
          %v2527 = vsel %vm2496, %v2494, %v1495
          %v2528 = vsel %vm2496, %v2495, %v1497
          %vm2529 = vcmask 261120
          %v2530 = vsel %vm2529, %v2497, %v1531
          %v2531 = vsel %vm2529, %v2498, %v1533
          %v2532 = vsel %vm2529, %v2499, %v1535
          %v2533 = vsel %vm2529, %v2500, %v1537
          %v2534 = vsel %vm2529, %v2501, %v1539
          %v2535 = vsel %vm2529, %v2502, %v1541
          %v2536 = vsel %vm2529, %v2503, %v1543
          %v2537 = vsel %vm2529, %v2504, %v1545
          %v2538 = vsel %vm2529, %v2505, %v1547
          %v2539 = vsel %vm2529, %v2506, %v1549
          %v2540 = vsel %vm2529, %v2507, %v1551
          %v2541 = vsel %vm2529, %v2508, %v1553
          %v2542 = vsel %vm2529, %v2509, %v1555
          %v2543 = vsel %vm2529, %v2510, %v1557
          %v2544 = vsel %vm2529, %v2511, %v1559
          %v2545 = vsel %vm2529, %v2512, %v1561
          %v2546 = vsel %vm2529, %v2513, %v1563
          %v2547 = vsel %vm2529, %v2514, %v1565
          %v2548 = vsel %vm2529, %v2515, %v1567
          %v2549 = vsel %vm2529, %v2516, %v1569
          %v2550 = vsel %vm2529, %v2517, %v1571
          %v2551 = vsel %vm2529, %v2518, %v1573
          %v2552 = vsel %vm2529, %v2519, %v1575
          %v2553 = vsel %vm2529, %v2520, %v1577
          %v2554 = vsel %vm2529, %v2521, %v1579
          %v2555 = vsel %vm2529, %v2522, %v1581
          %v2556 = vsel %vm2529, %v2523, %v1583
          %v2557 = vsel %vm2529, %v2524, %v1585
          %v2558 = vsel %vm2529, %v2525, %v1587
          %v2559 = vsel %vm2529, %v2526, %v1589
          %v2560 = vsel %vm2529, %v2527, %v1591
          %v2561 = vsel %vm2529, %v2528, %v1593
          %vm2562 = vcmask 293888
          %v2563 = vsel %vm2562, %v2530, %v1627
          %v2564 = vsel %vm2562, %v2531, %v1629
          %v2565 = vsel %vm2562, %v2532, %v1631
          %v2566 = vsel %vm2562, %v2533, %v1633
          %v2567 = vsel %vm2562, %v2534, %v1635
          %v2568 = vsel %vm2562, %v2535, %v1637
          %v2569 = vsel %vm2562, %v2536, %v1639
          %v2570 = vsel %vm2562, %v2537, %v1641
          %v2571 = vsel %vm2562, %v2538, %v1643
          %v2572 = vsel %vm2562, %v2539, %v1645
          %v2573 = vsel %vm2562, %v2540, %v1647
          %v2574 = vsel %vm2562, %v2541, %v1649
          %v2575 = vsel %vm2562, %v2542, %v1651
          %v2576 = vsel %vm2562, %v2543, %v1653
          %v2577 = vsel %vm2562, %v2544, %v1655
          %v2578 = vsel %vm2562, %v2545, %v1657
          %v2579 = vsel %vm2562, %v2546, %v1659
          %v2580 = vsel %vm2562, %v2547, %v1661
          %v2581 = vsel %vm2562, %v2548, %v1663
          %v2582 = vsel %vm2562, %v2549, %v1665
          %v2583 = vsel %vm2562, %v2550, %v1667
          %v2584 = vsel %vm2562, %v2551, %v1669
          %v2585 = vsel %vm2562, %v2552, %v1671
          %v2586 = vsel %vm2562, %v2553, %v1673
          %v2587 = vsel %vm2562, %v2554, %v1675
          %v2588 = vsel %vm2562, %v2555, %v1677
          %v2589 = vsel %vm2562, %v2556, %v1679
          %v2590 = vsel %vm2562, %v2557, %v1681
          %v2591 = vsel %vm2562, %v2558, %v1683
          %v2592 = vsel %vm2562, %v2559, %v1685
          %v2593 = vsel %vm2562, %v2560, %v1687
          %v2594 = vsel %vm2562, %v2561, %v1689
          %vm2595 = vcmask 326656
          %v2596 = vsel %vm2595, %v2563, %v1723
          %v2597 = vsel %vm2595, %v2564, %v1725
          %v2598 = vsel %vm2595, %v2565, %v1727
          %v2599 = vsel %vm2595, %v2566, %v1729
          %v2600 = vsel %vm2595, %v2567, %v1731
          %v2601 = vsel %vm2595, %v2568, %v1733
          %v2602 = vsel %vm2595, %v2569, %v1735
          %v2603 = vsel %vm2595, %v2570, %v1737
          %v2604 = vsel %vm2595, %v2571, %v1739
          %v2605 = vsel %vm2595, %v2572, %v1741
          %v2606 = vsel %vm2595, %v2573, %v1743
          %v2607 = vsel %vm2595, %v2574, %v1745
          %v2608 = vsel %vm2595, %v2575, %v1747
          %v2609 = vsel %vm2595, %v2576, %v1749
          %v2610 = vsel %vm2595, %v2577, %v1751
          %v2611 = vsel %vm2595, %v2578, %v1753
          %v2612 = vsel %vm2595, %v2579, %v1755
          %v2613 = vsel %vm2595, %v2580, %v1757
          %v2614 = vsel %vm2595, %v2581, %v1759
          %v2615 = vsel %vm2595, %v2582, %v1761
          %v2616 = vsel %vm2595, %v2583, %v1763
          %v2617 = vsel %vm2595, %v2584, %v1765
          %v2618 = vsel %vm2595, %v2585, %v1767
          %v2619 = vsel %vm2595, %v2586, %v1769
          %v2620 = vsel %vm2595, %v2587, %v1771
          %v2621 = vsel %vm2595, %v2588, %v1773
          %v2622 = vsel %vm2595, %v2589, %v1775
          %v2623 = vsel %vm2595, %v2590, %v1777
          %v2624 = vsel %vm2595, %v2591, %v1779
          %v2625 = vsel %vm2595, %v2592, %v1781
          %v2626 = vsel %vm2595, %v2593, %v1783
          %v2627 = vsel %vm2595, %v2594, %v1785
          %vm2628 = vcmask 359424
          %v2629 = vsel %vm2628, %v2596, %v1819
          %v2630 = vsel %vm2628, %v2597, %v1821
          %v2631 = vsel %vm2628, %v2598, %v1823
          %v2632 = vsel %vm2628, %v2599, %v1825
          %v2633 = vsel %vm2628, %v2600, %v1827
          %v2634 = vsel %vm2628, %v2601, %v1829
          %v2635 = vsel %vm2628, %v2602, %v1831
          %v2636 = vsel %vm2628, %v2603, %v1833
          %v2637 = vsel %vm2628, %v2604, %v1835
          %v2638 = vsel %vm2628, %v2605, %v1837
          %v2639 = vsel %vm2628, %v2606, %v1839
          %v2640 = vsel %vm2628, %v2607, %v1841
          %v2641 = vsel %vm2628, %v2608, %v1843
          %v2642 = vsel %vm2628, %v2609, %v1845
          %v2643 = vsel %vm2628, %v2610, %v1847
          %v2644 = vsel %vm2628, %v2611, %v1849
          %v2645 = vsel %vm2628, %v2612, %v1851
          %v2646 = vsel %vm2628, %v2613, %v1853
          %v2647 = vsel %vm2628, %v2614, %v1855
          %v2648 = vsel %vm2628, %v2615, %v1857
          %v2649 = vsel %vm2628, %v2616, %v1859
          %v2650 = vsel %vm2628, %v2617, %v1861
          %v2651 = vsel %vm2628, %v2618, %v1863
          %v2652 = vsel %vm2628, %v2619, %v1865
          %v2653 = vsel %vm2628, %v2620, %v1867
          %v2654 = vsel %vm2628, %v2621, %v1869
          %v2655 = vsel %vm2628, %v2622, %v1871
          %v2656 = vsel %vm2628, %v2623, %v1873
          %v2657 = vsel %vm2628, %v2624, %v1875
          %v2658 = vsel %vm2628, %v2625, %v1877
          %v2659 = vsel %vm2628, %v2626, %v1879
          %v2660 = vsel %vm2628, %v2627, %v1881
          %vm2661 = vcmask 392192
          %v2662 = vsel %vm2661, %v2629, %v1915
          %v2663 = vsel %vm2661, %v2630, %v1917
          %v2664 = vsel %vm2661, %v2631, %v1919
          %v2665 = vsel %vm2661, %v2632, %v1921
          %v2666 = vsel %vm2661, %v2633, %v1923
          %v2667 = vsel %vm2661, %v2634, %v1925
          %v2668 = vsel %vm2661, %v2635, %v1927
          %v2669 = vsel %vm2661, %v2636, %v1929
          %v2670 = vsel %vm2661, %v2637, %v1931
          %v2671 = vsel %vm2661, %v2638, %v1933
          %v2672 = vsel %vm2661, %v2639, %v1935
          %v2673 = vsel %vm2661, %v2640, %v1937
          %v2674 = vsel %vm2661, %v2641, %v1939
          %v2675 = vsel %vm2661, %v2642, %v1941
          %v2676 = vsel %vm2661, %v2643, %v1943
          %v2677 = vsel %vm2661, %v2644, %v1945
          %v2678 = vsel %vm2661, %v2645, %v1947
          %v2679 = vsel %vm2661, %v2646, %v1949
          %v2680 = vsel %vm2661, %v2647, %v1951
          %v2681 = vsel %vm2661, %v2648, %v1953
          %v2682 = vsel %vm2661, %v2649, %v1955
          %v2683 = vsel %vm2661, %v2650, %v1957
          %v2684 = vsel %vm2661, %v2651, %v1959
          %v2685 = vsel %vm2661, %v2652, %v1961
          %v2686 = vsel %vm2661, %v2653, %v1963
          %v2687 = vsel %vm2661, %v2654, %v1965
          %v2688 = vsel %vm2661, %v2655, %v1967
          %v2689 = vsel %vm2661, %v2656, %v1969
          %v2690 = vsel %vm2661, %v2657, %v1971
          %v2691 = vsel %vm2661, %v2658, %v1973
          %v2692 = vsel %vm2661, %v2659, %v1975
          %v2693 = vsel %vm2661, %v2660, %v1977
          %vm2694 = vcmask 424960
          %v2695 = vsel %vm2694, %v2662, %v2011
          %v2696 = vsel %vm2694, %v2663, %v2013
          %v2697 = vsel %vm2694, %v2664, %v2015
          %v2698 = vsel %vm2694, %v2665, %v2017
          %v2699 = vsel %vm2694, %v2666, %v2019
          %v2700 = vsel %vm2694, %v2667, %v2021
          %v2701 = vsel %vm2694, %v2668, %v2023
          %v2702 = vsel %vm2694, %v2669, %v2025
          %v2703 = vsel %vm2694, %v2670, %v2027
          %v2704 = vsel %vm2694, %v2671, %v2029
          %v2705 = vsel %vm2694, %v2672, %v2031
          %v2706 = vsel %vm2694, %v2673, %v2033
          %v2707 = vsel %vm2694, %v2674, %v2035
          %v2708 = vsel %vm2694, %v2675, %v2037
          %v2709 = vsel %vm2694, %v2676, %v2039
          %v2710 = vsel %vm2694, %v2677, %v2041
          %v2711 = vsel %vm2694, %v2678, %v2043
          %v2712 = vsel %vm2694, %v2679, %v2045
          %v2713 = vsel %vm2694, %v2680, %v2047
          %v2714 = vsel %vm2694, %v2681, %v2049
          %v2715 = vsel %vm2694, %v2682, %v2051
          %v2716 = vsel %vm2694, %v2683, %v2053
          %v2717 = vsel %vm2694, %v2684, %v2055
          %v2718 = vsel %vm2694, %v2685, %v2057
          %v2719 = vsel %vm2694, %v2686, %v2059
          %v2720 = vsel %vm2694, %v2687, %v2061
          %v2721 = vsel %vm2694, %v2688, %v2063
          %v2722 = vsel %vm2694, %v2689, %v2065
          %v2723 = vsel %vm2694, %v2690, %v2067
          %v2724 = vsel %vm2694, %v2691, %v2069
          %v2725 = vsel %vm2694, %v2692, %v2071
          %v2726 = vsel %vm2694, %v2693, %v2073
          %vm2727 = vcmask 457728
          %v2728 = vsel %vm2727, %v2695, %v2107
          %v2729 = vsel %vm2727, %v2696, %v2109
          %v2730 = vsel %vm2727, %v2697, %v2111
          %v2731 = vsel %vm2727, %v2698, %v2113
          %v2732 = vsel %vm2727, %v2699, %v2115
          %v2733 = vsel %vm2727, %v2700, %v2117
          %v2734 = vsel %vm2727, %v2701, %v2119
          %v2735 = vsel %vm2727, %v2702, %v2121
          %v2736 = vsel %vm2727, %v2703, %v2123
          %v2737 = vsel %vm2727, %v2704, %v2125
          %v2738 = vsel %vm2727, %v2705, %v2127
          %v2739 = vsel %vm2727, %v2706, %v2129
          %v2740 = vsel %vm2727, %v2707, %v2131
          %v2741 = vsel %vm2727, %v2708, %v2133
          %v2742 = vsel %vm2727, %v2709, %v2135
          %v2743 = vsel %vm2727, %v2710, %v2137
          %v2744 = vsel %vm2727, %v2711, %v2139
          %v2745 = vsel %vm2727, %v2712, %v2141
          %v2746 = vsel %vm2727, %v2713, %v2143
          %v2747 = vsel %vm2727, %v2714, %v2145
          %v2748 = vsel %vm2727, %v2715, %v2147
          %v2749 = vsel %vm2727, %v2716, %v2149
          %v2750 = vsel %vm2727, %v2717, %v2151
          %v2751 = vsel %vm2727, %v2718, %v2153
          %v2752 = vsel %vm2727, %v2719, %v2155
          %v2753 = vsel %vm2727, %v2720, %v2157
          %v2754 = vsel %vm2727, %v2721, %v2159
          %v2755 = vsel %vm2727, %v2722, %v2161
          %v2756 = vsel %vm2727, %v2723, %v2163
          %v2757 = vsel %vm2727, %v2724, %v2165
          %v2758 = vsel %vm2727, %v2725, %v2167
          %v2759 = vsel %vm2727, %v2726, %v2169
          %vm2760 = vcmask 490496
          %v2761 = vsel %vm2760, %v2728, %v2203
          %v2762 = vsel %vm2760, %v2729, %v2205
          %v2763 = vsel %vm2760, %v2730, %v2207
          %v2764 = vsel %vm2760, %v2731, %v2209
          %v2765 = vsel %vm2760, %v2732, %v2211
          %v2766 = vsel %vm2760, %v2733, %v2213
          %v2767 = vsel %vm2760, %v2734, %v2215
          %v2768 = vsel %vm2760, %v2735, %v2217
          %v2769 = vsel %vm2760, %v2736, %v2219
          %v2770 = vsel %vm2760, %v2737, %v2221
          %v2771 = vsel %vm2760, %v2738, %v2223
          %v2772 = vsel %vm2760, %v2739, %v2225
          %v2773 = vsel %vm2760, %v2740, %v2227
          %v2774 = vsel %vm2760, %v2741, %v2229
          %v2775 = vsel %vm2760, %v2742, %v2231
          %v2776 = vsel %vm2760, %v2743, %v2233
          %v2777 = vsel %vm2760, %v2744, %v2235
          %v2778 = vsel %vm2760, %v2745, %v2237
          %v2779 = vsel %vm2760, %v2746, %v2239
          %v2780 = vsel %vm2760, %v2747, %v2241
          %v2781 = vsel %vm2760, %v2748, %v2243
          %v2782 = vsel %vm2760, %v2749, %v2245
          %v2783 = vsel %vm2760, %v2750, %v2247
          %v2784 = vsel %vm2760, %v2751, %v2249
          %v2785 = vsel %vm2760, %v2752, %v2251
          %v2786 = vsel %vm2760, %v2753, %v2253
          %v2787 = vsel %vm2760, %v2754, %v2255
          %v2788 = vsel %vm2760, %v2755, %v2257
          %v2789 = vsel %vm2760, %v2756, %v2259
          %v2790 = vsel %vm2760, %v2757, %v2261
          %v2791 = vsel %vm2760, %v2758, %v2263
          %v2792 = vsel %vm2760, %v2759, %v2265
          %2793 = vrot.lane.b32.xlu0 %v732, 4
          %v2794 = vpop.permute.xlu0 %2793
          %2795 = vrot.lane.b32.xlu0 %v734, 4
          %v2796 = vpop.permute.xlu0 %2795
          %2797 = vrot.lane.b32.xlu0 %v737, 4
          %v2798 = vpop.permute.xlu0 %2797
          %2799 = vrot.lane.b32.xlu0 %v739, 4
          %v2800 = vpop.permute.xlu0 %2799
          %2801 = vrot.lane.b32.xlu0 %v742, 4
          %v2802 = vpop.permute.xlu0 %2801
          %2803 = vrot.lane.b32.xlu0 %v744, 4
          %v2804 = vpop.permute.xlu0 %2803
          %2805 = vrot.lane.b32.xlu0 %v747, 4
          %v2806 = vpop.permute.xlu0 %2805
          %2807 = vrot.lane.b32.xlu0 %v749, 4
          %v2808 = vpop.permute.xlu0 %2807
          %2809 = vrot.lane.b32.xlu0 %v752, 4
          %v2810 = vpop.permute.xlu0 %2809
          %2811 = vrot.lane.b32.xlu0 %v754, 4
          %v2812 = vpop.permute.xlu0 %2811
          %2813 = vrot.lane.b32.xlu0 %v757, 4
          %v2814 = vpop.permute.xlu0 %2813
          %2815 = vrot.lane.b32.xlu0 %v759, 4
          %v2816 = vpop.permute.xlu0 %2815
          %2817 = vrot.lane.b32.xlu0 %v762, 4
          %v2818 = vpop.permute.xlu0 %2817
          %2819 = vrot.lane.b32.xlu0 %v764, 4
          %v2820 = vpop.permute.xlu0 %2819
          %2821 = vrot.lane.b32.xlu0 %v767, 4
          %v2822 = vpop.permute.xlu0 %2821
          %2823 = vrot.lane.b32.xlu0 %v769, 4
          %v2824 = vpop.permute.xlu0 %2823
          %2825 = vrot.lane.b32.xlu0 %v772, 4
          %v2826 = vpop.permute.xlu0 %2825
          %2827 = vrot.lane.b32.xlu0 %v774, 4
          %v2828 = vpop.permute.xlu0 %2827
          %2829 = vrot.lane.b32.xlu0 %v777, 4
          %v2830 = vpop.permute.xlu0 %2829
          %2831 = vrot.lane.b32.xlu0 %v779, 4
          %v2832 = vpop.permute.xlu0 %2831
          %2833 = vrot.lane.b32.xlu0 %v782, 4
          %v2834 = vpop.permute.xlu0 %2833
          %2835 = vrot.lane.b32.xlu0 %v784, 4
          %v2836 = vpop.permute.xlu0 %2835
          %2837 = vrot.lane.b32.xlu0 %v787, 4
          %v2838 = vpop.permute.xlu0 %2837
          %2839 = vrot.lane.b32.xlu0 %v789, 4
          %v2840 = vpop.permute.xlu0 %2839
          %2841 = vrot.lane.b32.xlu0 %v792, 4
          %v2842 = vpop.permute.xlu0 %2841
          %2843 = vrot.lane.b32.xlu0 %v794, 4
          %v2844 = vpop.permute.xlu0 %2843
          %2845 = vrot.lane.b32.xlu0 %v797, 4
          %v2846 = vpop.permute.xlu0 %2845
          %2847 = vrot.lane.b32.xlu0 %v799, 4
          %v2848 = vpop.permute.xlu0 %2847
          %2849 = vrot.lane.b32.xlu0 %v810, 4
          %v2850 = vpop.permute.xlu0 %2849
          %2851 = vrot.lane.b32.xlu0 %v812, 4
          %v2852 = vpop.permute.xlu0 %2851
          %2853 = vrot.lane.b32.xlu0 %v855, 4
          %v2854 = vpop.permute.xlu0 %2853
          %2855 = vrot.lane.b32.xlu0 %v857, 4
          %v2856 = vpop.permute.xlu0 %2855
          %v2889 = vsel %vm2298, %v652, %v2794
          %v2890 = vsel %vm2298, %v654, %v2796
          %v2891 = vsel %vm2298, %v657, %v2798
          %v2892 = vsel %vm2298, %v659, %v2800
          %v2893 = vsel %vm2298, %v662, %v2802
          %v2894 = vsel %vm2298, %v664, %v2804
          %v2895 = vsel %vm2298, %v667, %v2806
          %v2896 = vsel %vm2298, %v669, %v2808
          %v2897 = vsel %vm2298, %v672, %v2810
          %v2898 = vsel %vm2298, %v674, %v2812
          %v2899 = vsel %vm2298, %v677, %v2814
          %v2900 = vsel %vm2298, %v679, %v2816
          %v2901 = vsel %vm2298, %v682, %v2818
          %v2902 = vsel %vm2298, %v684, %v2820
          %v2903 = vsel %vm2298, %v687, %v2822
          %v2904 = vsel %vm2298, %v689, %v2824
          %v2905 = vsel %vm2298, %v692, %v2826
          %v2906 = vsel %vm2298, %v694, %v2828
          %v2907 = vsel %vm2298, %v697, %v2830
          %v2908 = vsel %vm2298, %v699, %v2832
          %v2909 = vsel %vm2298, %v702, %v2834
          %v2910 = vsel %vm2298, %v704, %v2836
          %v2911 = vsel %vm2298, %v707, %v2838
          %v2912 = vsel %vm2298, %v709, %v2840
          %v2913 = vsel %vm2298, %v712, %v2842
          %v2914 = vsel %vm2298, %v714, %v2844
          %v2915 = vsel %vm2298, %v717, %v2846
          %v2916 = vsel %vm2298, %v719, %v2848
          %v2917 = vsel %vm2298, %v805, %v2850
          %v2918 = vsel %vm2298, %v807, %v2852
          %v2919 = vsel %vm2298, %v818, %v2854
          %v2920 = vsel %vm2298, %v820, %v2856
          %2953 = vrot.lane.b32.xlu0 %v2889, 64
          %v2954 = vpop.permute.xlu0 %2953
          %2955 = vrot.lane.b32.xlu0 %v2890, 64
          %v2956 = vpop.permute.xlu0 %2955
          %2957 = vrot.lane.b32.xlu0 %v2891, 64
          %v2958 = vpop.permute.xlu0 %2957
          %2959 = vrot.lane.b32.xlu0 %v2892, 64
          %v2960 = vpop.permute.xlu0 %2959
          %2961 = vrot.lane.b32.xlu0 %v2893, 64
          %v2962 = vpop.permute.xlu0 %2961
          %2963 = vrot.lane.b32.xlu0 %v2894, 64
          %v2964 = vpop.permute.xlu0 %2963
          %2965 = vrot.lane.b32.xlu0 %v2895, 64
          %v2966 = vpop.permute.xlu0 %2965
          %2967 = vrot.lane.b32.xlu0 %v2896, 64
          %v2968 = vpop.permute.xlu0 %2967
          %2969 = vrot.lane.b32.xlu0 %v2897, 64
          %v2970 = vpop.permute.xlu0 %2969
          %2971 = vrot.lane.b32.xlu0 %v2898, 64
          %v2972 = vpop.permute.xlu0 %2971
          %2973 = vrot.lane.b32.xlu0 %v2899, 64
          %v2974 = vpop.permute.xlu0 %2973
          %2975 = vrot.lane.b32.xlu0 %v2900, 64
          %v2976 = vpop.permute.xlu0 %2975
          %2977 = vrot.lane.b32.xlu0 %v2901, 64
          %v2978 = vpop.permute.xlu0 %2977
          %2979 = vrot.lane.b32.xlu0 %v2902, 64
          %v2980 = vpop.permute.xlu0 %2979
          %2981 = vrot.lane.b32.xlu0 %v2903, 64
          %v2982 = vpop.permute.xlu0 %2981
          %2983 = vrot.lane.b32.xlu0 %v2904, 64
          %v2984 = vpop.permute.xlu0 %2983
          %2985 = vrot.lane.b32.xlu0 %v2905, 64
          %v2986 = vpop.permute.xlu0 %2985
          %2987 = vrot.lane.b32.xlu0 %v2906, 64
          %v2988 = vpop.permute.xlu0 %2987
          %2989 = vrot.lane.b32.xlu0 %v2907, 64
          %v2990 = vpop.permute.xlu0 %2989
          %2991 = vrot.lane.b32.xlu0 %v2908, 64
          %v2992 = vpop.permute.xlu0 %2991
          %2993 = vrot.lane.b32.xlu0 %v2909, 64
          %v2994 = vpop.permute.xlu0 %2993
          %2995 = vrot.lane.b32.xlu0 %v2910, 64
          %v2996 = vpop.permute.xlu0 %2995
          %2997 = vrot.lane.b32.xlu0 %v2911, 64
          %v2998 = vpop.permute.xlu0 %2997
          %2999 = vrot.lane.b32.xlu0 %v2912, 64
          %v3000 = vpop.permute.xlu0 %2999
          %3001 = vrot.lane.b32.xlu0 %v2913, 64
          %v3002 = vpop.permute.xlu0 %3001
          %3003 = vrot.lane.b32.xlu0 %v2914, 64
          %v3004 = vpop.permute.xlu0 %3003
          %3005 = vrot.lane.b32.xlu0 %v2915, 64
          %v3006 = vpop.permute.xlu0 %3005
          %3007 = vrot.lane.b32.xlu0 %v2916, 64
          %v3008 = vpop.permute.xlu0 %3007
          %3009 = vrot.lane.b32.xlu0 %v2917, 64
          %v3010 = vpop.permute.xlu0 %3009
          %3011 = vrot.lane.b32.xlu0 %v2918, 64
          %v3012 = vpop.permute.xlu0 %3011
          %3013 = vrot.lane.b32.xlu0 %v2919, 64
          %v3014 = vpop.permute.xlu0 %3013
          %3015 = vrot.lane.b32.xlu0 %v2920, 64
          %v3016 = vpop.permute.xlu0 %3015
          %vm3049 = vcmask 523264
          %v3050 = vsel %vm3049, %v2761, %v2954
          %v3051 = vsel %vm3049, %v2762, %v2956
          %v3052 = vsel %vm3049, %v2763, %v2958
          %v3053 = vsel %vm3049, %v2764, %v2960
          %v3054 = vsel %vm3049, %v2765, %v2962
          %v3055 = vsel %vm3049, %v2766, %v2964
          %v3056 = vsel %vm3049, %v2767, %v2966
          %v3057 = vsel %vm3049, %v2768, %v2968
          %v3058 = vsel %vm3049, %v2769, %v2970
          %v3059 = vsel %vm3049, %v2770, %v2972
          %v3060 = vsel %vm3049, %v2771, %v2974
          %v3061 = vsel %vm3049, %v2772, %v2976
          %v3062 = vsel %vm3049, %v2773, %v2978
          %v3063 = vsel %vm3049, %v2774, %v2980
          %v3064 = vsel %vm3049, %v2775, %v2982
          %v3065 = vsel %vm3049, %v2776, %v2984
          %v3066 = vsel %vm3049, %v2777, %v2986
          %v3067 = vsel %vm3049, %v2778, %v2988
          %v3068 = vsel %vm3049, %v2779, %v2990
          %v3069 = vsel %vm3049, %v2780, %v2992
          %v3070 = vsel %vm3049, %v2781, %v2994
          %v3071 = vsel %vm3049, %v2782, %v2996
          %v3072 = vsel %vm3049, %v2783, %v2998
          %v3073 = vsel %vm3049, %v2784, %v3000
          %v3074 = vsel %vm3049, %v2785, %v3002
          %v3075 = vsel %vm3049, %v2786, %v3004
          %v3076 = vsel %vm3049, %v2787, %v3006
          %v3077 = vsel %vm3049, %v2788, %v3008
          %v3078 = vsel %vm3049, %v2789, %v3010
          %v3079 = vsel %vm3049, %v2790, %v3012
          %v3080 = vsel %vm3049, %v2791, %v3014
          %v3081 = vsel %vm3049, %v2792, %v3016
          %v3082 = vpack.c.bf16 %v3050, %v3050
          %v3083 = vpack.c.bf16 %v3051, %v3051
          %v3084 = vpack.c.bf16 %v3052, %v3052
          %v3085 = vpack.c.bf16 %v3053, %v3053
          %v3086 = vpack.c.bf16 %v3054, %v3054
          %v3087 = vpack.c.bf16 %v3055, %v3055
          %v3088 = vpack.c.bf16 %v3056, %v3056
          %v3089 = vpack.c.bf16 %v3057, %v3057
          %v3090 = vpack.c.bf16 %v3058, %v3058
          %v3091 = vpack.c.bf16 %v3059, %v3059
          %v3092 = vpack.c.bf16 %v3060, %v3060
          %v3093 = vpack.c.bf16 %v3061, %v3061
          %v3094 = vpack.c.bf16 %v3062, %v3062
          %v3095 = vpack.c.bf16 %v3063, %v3063
          %v3096 = vpack.c.bf16 %v3064, %v3064
          %v3097 = vpack.c.bf16 %v3065, %v3065
          %v3098 = vpack.c.bf16 %v3066, %v3066
          %v3099 = vpack.c.bf16 %v3067, %v3067
          %v3100 = vpack.c.bf16 %v3068, %v3068
          %v3101 = vpack.c.bf16 %v3069, %v3069
          %v3102 = vpack.c.bf16 %v3070, %v3070
          %v3103 = vpack.c.bf16 %v3071, %v3071
          %v3104 = vpack.c.bf16 %v3072, %v3072
          %v3105 = vpack.c.bf16 %v3073, %v3073
          %v3106 = vpack.c.bf16 %v3074, %v3074
          %v3107 = vpack.c.bf16 %v3075, %v3075
          %v3108 = vpack.c.bf16 %v3076, %v3076
          %v3109 = vpack.c.bf16 %v3077, %v3077
          %v3110 = vpack.c.bf16 %v3078, %v3078
          %v3111 = vpack.c.bf16 %v3079, %v3079
          %v3112 = vpack.c.bf16 %v3080, %v3080
          %v3113 = vpack.c.bf16 %v3081, %v3081
          %v3114 = vunpack.c.l.bf16 %v3082
          %v3115 = vunpack.c.l.bf16 %v3083
          %v3116 = vunpack.c.l.bf16 %v3084
          %v3117 = vunpack.c.l.bf16 %v3085
          %v3118 = vunpack.c.l.bf16 %v3086
          %v3119 = vunpack.c.l.bf16 %v3087
          %v3120 = vunpack.c.l.bf16 %v3088
          %v3121 = vunpack.c.l.bf16 %v3089
          %v3122 = vunpack.c.l.bf16 %v3090
          %v3123 = vunpack.c.l.bf16 %v3091
          %v3124 = vunpack.c.l.bf16 %v3092
          %v3125 = vunpack.c.l.bf16 %v3093
          %v3126 = vunpack.c.l.bf16 %v3094
          %v3127 = vunpack.c.l.bf16 %v3095
          %v3128 = vunpack.c.l.bf16 %v3096
          %v3129 = vunpack.c.l.bf16 %v3097
          %v3130 = vunpack.c.l.bf16 %v3098
          %v3131 = vunpack.c.l.bf16 %v3099
          %v3132 = vunpack.c.l.bf16 %v3100
          %v3133 = vunpack.c.l.bf16 %v3101
          %v3134 = vunpack.c.l.bf16 %v3102
          %v3135 = vunpack.c.l.bf16 %v3103
          %v3136 = vunpack.c.l.bf16 %v3104
          %v3137 = vunpack.c.l.bf16 %v3105
          %v3138 = vunpack.c.l.bf16 %v3106
          %v3139 = vunpack.c.l.bf16 %v3107
          %v3140 = vunpack.c.l.bf16 %v3108
          %v3141 = vunpack.c.l.bf16 %v3109
          %v3142 = vunpack.c.l.bf16 %v3110
          %v3143 = vunpack.c.l.bf16 %v3111
          %v3144 = vunpack.c.l.bf16 %v3112
          %v3145 = vunpack.c.l.bf16 %v3113
          %v3146 = vsub.f32 %v3050, %v3114
          %v3147 = vsub.f32 %v3051, %v3115
          %v3148 = vsub.f32 %v3052, %v3116
          %v3149 = vsub.f32 %v3053, %v3117
          %v3150 = vsub.f32 %v3054, %v3118
          %v3151 = vsub.f32 %v3055, %v3119
          %v3152 = vsub.f32 %v3056, %v3120
          %v3153 = vsub.f32 %v3057, %v3121
          %v3154 = vsub.f32 %v3058, %v3122
          %v3155 = vsub.f32 %v3059, %v3123
          %v3156 = vsub.f32 %v3060, %v3124
          %v3157 = vsub.f32 %v3061, %v3125
          %v3158 = vsub.f32 %v3062, %v3126
          %v3159 = vsub.f32 %v3063, %v3127
          %v3160 = vsub.f32 %v3064, %v3128
          %v3161 = vsub.f32 %v3065, %v3129
          %v3162 = vsub.f32 %v3066, %v3130
          %v3163 = vsub.f32 %v3067, %v3131
          %v3164 = vsub.f32 %v3068, %v3132
          %v3165 = vsub.f32 %v3069, %v3133
          %v3166 = vsub.f32 %v3070, %v3134
          %v3167 = vsub.f32 %v3071, %v3135
          %v3168 = vsub.f32 %v3072, %v3136
          %v3169 = vsub.f32 %v3073, %v3137
          %v3170 = vsub.f32 %v3074, %v3138
          %v3171 = vsub.f32 %v3075, %v3139
          %v3172 = vsub.f32 %v3076, %v3140
          %v3173 = vsub.f32 %v3077, %v3141
          %v3174 = vsub.f32 %v3078, %v3142
          %v3175 = vsub.f32 %v3079, %v3143
          %v3176 = vsub.f32 %v3080, %v3144
          %v3177 = vsub.f32 %v3081, %v3145
          %v3178 = vpack.c.bf16 %v3147, %v3146
          %v3179 = vpack.c.bf16 %v3149, %v3148
          %v3180 = vpack.c.bf16 %v3151, %v3150
          %v3181 = vpack.c.bf16 %v3153, %v3152
          %v3182 = vpack.c.bf16 %v3155, %v3154
          %v3183 = vpack.c.bf16 %v3157, %v3156
          %v3184 = vpack.c.bf16 %v3159, %v3158
          %v3185 = vpack.c.bf16 %v3161, %v3160
          %v3186 = vpack.c.bf16 %v3163, %v3162
          %v3187 = vpack.c.bf16 %v3165, %v3164
          %v3188 = vpack.c.bf16 %v3167, %v3166
          %v3189 = vpack.c.bf16 %v3169, %v3168
          %v3190 = vpack.c.bf16 %v3171, %v3170
          %v3191 = vpack.c.bf16 %v3173, %v3172
          %v3192 = vpack.c.bf16 %v3175, %v3174
          %v3193 = vpack.c.bf16 %v3177, %v3176
          %v3194 = vld [vmem:[%s2] sm:$0xf]
          %v3195 = vld [vmem:[%s2 + $0x4] sm:$0xf]
          %v3196 = vld [vmem:[%s2 + $0x8] sm:$0xf]
          %v3197 = vld [vmem:[%s2 + $0xc] sm:$0xf]
          %v3198 = vld [vmem:[%s2 + $0x10] sm:$0xf]
          %v3199 = vld [vmem:[%s2 + $0x14] sm:$0xf]
          %v3200 = vld [vmem:[%s2 + $0x18] sm:$0xf]
          %v3201 = vld [vmem:[%s2 + $0x1c] sm:$0xf]
          %v3202 = vld [vmem:[%s2 + $0x20] sm:$0xf]
          %s3203 = scalar_lea.vmem %s2, 36
          %v3204 = vld [vmem:[%s3203] sm:$0xf]
          %v3205 = vld [vmem:[%s3203 + $0x4] sm:$0xf]
          %v3206 = vld [vmem:[%s3203 + $0x8] sm:$0xf]
          %v3207 = vld [vmem:[%s3203 + $0xc] sm:$0xf]
          %v3208 = vld [vmem:[%s3203 + $0x10] sm:$0xf]
          %v3209 = vld [vmem:[%s3203 + $0x14] sm:$0xf]
          %v3210 = vld [vmem:[%s3203 + $0x18] sm:$0xf]
          %v3211 = vld [vmem:[%s3203 + $0x1c] sm:$0xf]
          %v3212 = vld [vmem:[%s3203 + $0x20] sm:$0xf]
          %v3222 = vunpack.c.l.b16 %v3194
          %v3223 = vunpack.c.l.b16 %v3195
          %v3224 = vunpack.c.l.b16 %v3196
          %v3225 = vunpack.c.l.b16 %v3197
          %v3226 = vunpack.c.l.b16 %v3198
          %v3227 = vunpack.c.l.b16 %v3199
          %v3228 = vunpack.c.l.b16 %v3200
          %v3229 = vunpack.c.l.b16 %v3201
          %v3230 = vunpack.c.l.b16 %v3202
          %v3231 = vpack.c.b16 %v3223, %v3222
          %v3232 = vpack.c.b16 %v3225, %v3224
          %v3233 = vpack.c.b16 %v3227, %v3226
          %v3234 = vpack.c.b16 %v3229, %v3228
          %v3235 = vpack.c.b16 %v3230, %v3230
          %vm3240 = vcmask 588800
          %v3242 = vsel %vm3240, %v3178, 0
          %v3245 = vsel %vm3240, %v3179, 0
          %v3248 = vsel %vm3240, %v3180, 0
          %v3251 = vsel %vm3240, %v3181, 0
          %v3254 = vsel %vm3240, %v3182, 0
          %v3257 = vsel %vm3240, %v3183, 0
          %v3260 = vsel %vm3240, %v3184, 0
          %v3263 = vsel %vm3240, %v3185, 0
          %v3266 = vsel %vm3240, %v3186, 0
          %v3269 = vsel %vm3240, %v3187, 0
          %v3272 = vsel %vm3240, %v3188, 0
          %v3275 = vsel %vm3240, %v3189, 0
          %v3278 = vsel %vm3240, %v3190, 0
          %v3281 = vsel %vm3240, %v3191, 0
          %v3284 = vsel %vm3240, %v3192, 0
          %v3287 = vsel %vm3240, %v3193, 0
          %vm3289 = vcmask 1043456
          %v3291 = vsel %vm3289, %v3235, 0
          %3293 = vmatpush.bf16.msra.mxu0 0
          %3294 = vmatpush.bf16.msra.mxu0 0
          %3295 = vmatpush.bf16.msra.mxu0 0
          %3296 = vmatpush.bf16.msra.mxu0 %v3291
          %3297 = vmatpush.bf16.msra.mxu0 %v3234
          %3298 = vmatpush.bf16.msra.mxu0 %v3233
          %3299 = vmatpush.bf16.msra.mxu0 %v3232
          %3300 = vmatpush.bf16.msra.mxu0 %v3231
          %3301 = vmatmul.bf16.gmra.mxu0 %v3242
          %v3302 = vpop.f32.mrf.mxu0
          %v3303 = vadd.f32 0.0, %v3302
          %v3304 = vpop.f32.mrf.mxu0
          %v3305 = vadd.f32 0.0, %v3304
          %3306 = vmatmul.bf16.gmra.mxu0 %v3245
          %v3307 = vpop.f32.mrf.mxu0
          %v3308 = vadd.f32 0.0, %v3307
          %v3309 = vpop.f32.mrf.mxu0
          %v3310 = vadd.f32 0.0, %v3309
          %3311 = vmatmul.bf16.gmra.mxu0 %v3248
          %v3312 = vpop.f32.mrf.mxu0
          %v3313 = vadd.f32 0.0, %v3312
          %v3314 = vpop.f32.mrf.mxu0
          %v3315 = vadd.f32 0.0, %v3314
          %3316 = vmatmul.bf16.gmra.mxu0 %v3251
          %v3317 = vpop.f32.mrf.mxu0
          %v3318 = vadd.f32 0.0, %v3317
          %v3319 = vpop.f32.mrf.mxu0
          %v3320 = vadd.f32 0.0, %v3319
          %3321 = vmatmul.bf16.gmra.mxu0 %v3254
          %v3322 = vpop.f32.mrf.mxu0
          %v3323 = vadd.f32 0.0, %v3322
          %v3324 = vpop.f32.mrf.mxu0
          %v3325 = vadd.f32 0.0, %v3324
          %3326 = vmatmul.bf16.gmra.mxu0 %v3257
          %v3327 = vpop.f32.mrf.mxu0
          %v3328 = vadd.f32 0.0, %v3327
          %v3329 = vpop.f32.mrf.mxu0
          %v3330 = vadd.f32 0.0, %v3329
          %3331 = vmatmul.bf16.gmra.mxu0 %v3260
          %v3332 = vpop.f32.mrf.mxu0
          %v3333 = vadd.f32 0.0, %v3332
          %v3334 = vpop.f32.mrf.mxu0
          %v3335 = vadd.f32 0.0, %v3334
          %3336 = vmatmul.bf16.gmra.mxu0 %v3263
          %v3337 = vpop.f32.mrf.mxu0
          %v3338 = vadd.f32 0.0, %v3337
          %v3339 = vpop.f32.mrf.mxu0
          %v3340 = vadd.f32 0.0, %v3339
          %3341 = vmatmul.bf16.gmra.mxu0 %v3266
          %v3342 = vpop.f32.mrf.mxu0
          %v3343 = vadd.f32 0.0, %v3342
          %v3344 = vpop.f32.mrf.mxu0
          %v3345 = vadd.f32 0.0, %v3344
          %3346 = vmatmul.bf16.gmra.mxu0 %v3269
          %v3347 = vpop.f32.mrf.mxu0
          %v3348 = vadd.f32 0.0, %v3347
          %v3349 = vpop.f32.mrf.mxu0
          %v3350 = vadd.f32 0.0, %v3349
          %3351 = vmatmul.bf16.gmra.mxu0 %v3272
          %v3352 = vpop.f32.mrf.mxu0
          %v3353 = vadd.f32 0.0, %v3352
          %v3354 = vpop.f32.mrf.mxu0
          %v3355 = vadd.f32 0.0, %v3354
          %3356 = vmatmul.bf16.gmra.mxu0 %v3275
          %v3357 = vpop.f32.mrf.mxu0
          %v3358 = vadd.f32 0.0, %v3357
          %v3359 = vpop.f32.mrf.mxu0
          %v3360 = vadd.f32 0.0, %v3359
          %3361 = vmatmul.bf16.gmra.mxu0 %v3278
          %v3362 = vpop.f32.mrf.mxu0
          %v3363 = vadd.f32 0.0, %v3362
          %v3364 = vpop.f32.mrf.mxu0
          %v3365 = vadd.f32 0.0, %v3364
          %3366 = vmatmul.bf16.gmra.mxu0 %v3281
          %v3367 = vpop.f32.mrf.mxu0
          %v3368 = vadd.f32 0.0, %v3367
          %v3369 = vpop.f32.mrf.mxu0
          %v3370 = vadd.f32 0.0, %v3369
          %3371 = vmatmul.bf16.gmra.mxu0 %v3284
          %v3372 = vpop.f32.mrf.mxu0
          %v3373 = vadd.f32 0.0, %v3372
          %v3374 = vpop.f32.mrf.mxu0
          %v3375 = vadd.f32 0.0, %v3374
          %3376 = vmatmul.bf16.gmra.mxu0 %v3287
          %v3377 = vpop.f32.mrf.mxu0
          %v3378 = vadd.f32 0.0, %v3377
          %v3379 = vpop.f32.mrf.mxu0
          %v3380 = vadd.f32 0.0, %v3379
          %3381 = vdwg.mxu0
          %v3414 = vunpack.c.l.b16 %v3082
          %v3415 = vunpack.c.l.b16 %v3083
          %v3416 = vunpack.c.l.b16 %v3084
          %v3417 = vunpack.c.l.b16 %v3085
          %v3418 = vunpack.c.l.b16 %v3086
          %v3419 = vunpack.c.l.b16 %v3087
          %v3420 = vunpack.c.l.b16 %v3088
          %v3421 = vunpack.c.l.b16 %v3089
          %v3422 = vunpack.c.l.b16 %v3090
          %v3423 = vunpack.c.l.b16 %v3091
          %v3424 = vunpack.c.l.b16 %v3092
          %v3425 = vunpack.c.l.b16 %v3093
          %v3426 = vunpack.c.l.b16 %v3094
          %v3427 = vunpack.c.l.b16 %v3095
          %v3428 = vunpack.c.l.b16 %v3096
          %v3429 = vunpack.c.l.b16 %v3097
          %v3430 = vunpack.c.l.b16 %v3098
          %v3431 = vunpack.c.l.b16 %v3099
          %v3432 = vunpack.c.l.b16 %v3100
          %v3433 = vunpack.c.l.b16 %v3101
          %v3434 = vunpack.c.l.b16 %v3102
          %v3435 = vunpack.c.l.b16 %v3103
          %v3436 = vunpack.c.l.b16 %v3104
          %v3437 = vunpack.c.l.b16 %v3105
          %v3438 = vunpack.c.l.b16 %v3106
          %v3439 = vunpack.c.l.b16 %v3107
          %v3440 = vunpack.c.l.b16 %v3108
          %v3441 = vunpack.c.l.b16 %v3109
          %v3442 = vunpack.c.l.b16 %v3110
          %v3443 = vunpack.c.l.b16 %v3111
          %v3444 = vunpack.c.l.b16 %v3112
          %v3445 = vunpack.c.l.b16 %v3113
          %v3446 = vpack.c.b16 %v3415, %v3414
          %v3447 = vpack.c.b16 %v3417, %v3416
          %v3448 = vpack.c.b16 %v3419, %v3418
          %v3449 = vpack.c.b16 %v3421, %v3420
          %v3450 = vpack.c.b16 %v3423, %v3422
          %v3451 = vpack.c.b16 %v3425, %v3424
          %v3452 = vpack.c.b16 %v3427, %v3426
          %v3453 = vpack.c.b16 %v3429, %v3428
          %v3454 = vpack.c.b16 %v3431, %v3430
          %v3455 = vpack.c.b16 %v3433, %v3432
          %v3456 = vpack.c.b16 %v3435, %v3434
          %v3457 = vpack.c.b16 %v3437, %v3436
          %v3458 = vpack.c.b16 %v3439, %v3438
          %v3459 = vpack.c.b16 %v3441, %v3440
          %v3460 = vpack.c.b16 %v3443, %v3442
          %v3461 = vpack.c.b16 %v3445, %v3444
          %v3463 = vsel %vm3240, %v3446, 0
          %v3466 = vsel %vm3240, %v3447, 0
          %v3469 = vsel %vm3240, %v3448, 0
          %v3472 = vsel %vm3240, %v3449, 0
          %v3475 = vsel %vm3240, %v3450, 0
          %v3478 = vsel %vm3240, %v3451, 0
          %v3481 = vsel %vm3240, %v3452, 0
          %v3484 = vsel %vm3240, %v3453, 0
          %v3487 = vsel %vm3240, %v3454, 0
          %v3490 = vsel %vm3240, %v3455, 0
          %v3493 = vsel %vm3240, %v3456, 0
          %v3496 = vsel %vm3240, %v3457, 0
          %v3499 = vsel %vm3240, %v3458, 0
          %v3502 = vsel %vm3240, %v3459, 0
          %v3505 = vsel %vm3240, %v3460, 0
          %v3508 = vsel %vm3240, %v3461, 0
          %3510 = vmatpush.bf16.msra.mxu0 0
          %3511 = vmatpush.bf16.msra.mxu0 0
          %3512 = vmatpush.bf16.msra.mxu0 0
          %3513 = vmatpush.bf16.msra.mxu0 %v3291
          %3514 = vmatpush.bf16.msra.mxu0 %v3234
          %3515 = vmatpush.bf16.msra.mxu0 %v3233
          %3516 = vmatpush.bf16.msra.mxu0 %v3232
          %3517 = vmatpush.bf16.msra.mxu0 %v3231
          %3518 = vmatmul.bf16.gmra.mxu0 %v3463
          %v3519 = vpop.f32.mrf.mxu0
          %v3520 = vadd.f32 %v3303, %v3519
          %v3521 = vpop.f32.mrf.mxu0
          %v3522 = vadd.f32 %v3305, %v3521
          %3523 = vmatmul.bf16.gmra.mxu0 %v3466
          %v3524 = vpop.f32.mrf.mxu0
          %v3525 = vadd.f32 %v3308, %v3524
          %v3526 = vpop.f32.mrf.mxu0
          %v3527 = vadd.f32 %v3310, %v3526
          %3528 = vmatmul.bf16.gmra.mxu0 %v3469
          %v3529 = vpop.f32.mrf.mxu0
          %v3530 = vadd.f32 %v3313, %v3529
          %v3531 = vpop.f32.mrf.mxu0
          %v3532 = vadd.f32 %v3315, %v3531
          %3533 = vmatmul.bf16.gmra.mxu0 %v3472
          %v3534 = vpop.f32.mrf.mxu0
          %v3535 = vadd.f32 %v3318, %v3534
          %v3536 = vpop.f32.mrf.mxu0
          %v3537 = vadd.f32 %v3320, %v3536
          %3538 = vmatmul.bf16.gmra.mxu0 %v3475
          %v3539 = vpop.f32.mrf.mxu0
          %v3540 = vadd.f32 %v3323, %v3539
          %v3541 = vpop.f32.mrf.mxu0
          %v3542 = vadd.f32 %v3325, %v3541
          %3543 = vmatmul.bf16.gmra.mxu0 %v3478
          %v3544 = vpop.f32.mrf.mxu0
          %v3545 = vadd.f32 %v3328, %v3544
          %v3546 = vpop.f32.mrf.mxu0
          %v3547 = vadd.f32 %v3330, %v3546
          %3548 = vmatmul.bf16.gmra.mxu0 %v3481
          %v3549 = vpop.f32.mrf.mxu0
          %v3550 = vadd.f32 %v3333, %v3549
          %v3551 = vpop.f32.mrf.mxu0
          %v3552 = vadd.f32 %v3335, %v3551
          %3553 = vmatmul.bf16.gmra.mxu0 %v3484
          %v3554 = vpop.f32.mrf.mxu0
          %v3555 = vadd.f32 %v3338, %v3554
          %v3556 = vpop.f32.mrf.mxu0
          %v3557 = vadd.f32 %v3340, %v3556
          %3558 = vmatmul.bf16.gmra.mxu0 %v3487
          %v3559 = vpop.f32.mrf.mxu0
          %v3560 = vadd.f32 %v3343, %v3559
          %v3561 = vpop.f32.mrf.mxu0
          %v3562 = vadd.f32 %v3345, %v3561
          %3563 = vmatmul.bf16.gmra.mxu0 %v3490
          %v3564 = vpop.f32.mrf.mxu0
          %v3565 = vadd.f32 %v3348, %v3564
          %v3566 = vpop.f32.mrf.mxu0
          %v3567 = vadd.f32 %v3350, %v3566
          %3568 = vmatmul.bf16.gmra.mxu0 %v3493
          %v3569 = vpop.f32.mrf.mxu0
          %v3570 = vadd.f32 %v3353, %v3569
          %v3571 = vpop.f32.mrf.mxu0
          %v3572 = vadd.f32 %v3355, %v3571
          %3573 = vmatmul.bf16.gmra.mxu0 %v3496
          %v3574 = vpop.f32.mrf.mxu0
          %v3575 = vadd.f32 %v3358, %v3574
          %v3576 = vpop.f32.mrf.mxu0
          %v3577 = vadd.f32 %v3360, %v3576
          %3578 = vmatmul.bf16.gmra.mxu0 %v3499
          %v3579 = vpop.f32.mrf.mxu0
          %v3580 = vadd.f32 %v3363, %v3579
          %v3581 = vpop.f32.mrf.mxu0
          %v3582 = vadd.f32 %v3365, %v3581
          %3583 = vmatmul.bf16.gmra.mxu0 %v3502
          %v3584 = vpop.f32.mrf.mxu0
          %v3585 = vadd.f32 %v3368, %v3584
          %v3586 = vpop.f32.mrf.mxu0
          %v3587 = vadd.f32 %v3370, %v3586
          %3588 = vmatmul.bf16.gmra.mxu0 %v3505
          %v3589 = vpop.f32.mrf.mxu0
          %v3590 = vadd.f32 %v3373, %v3589
          %v3591 = vpop.f32.mrf.mxu0
          %v3592 = vadd.f32 %v3375, %v3591
          %3593 = vmatmul.bf16.gmra.mxu0 %v3508
          %v3594 = vpop.f32.mrf.mxu0
          %v3595 = vadd.f32 %v3378, %v3594
          %v3596 = vpop.f32.mrf.mxu0
          %v3597 = vadd.f32 %v3380, %v3596
          %3598 = vdwg.mxu0
          %v3608 = vunpack.c.l.b16 %v3204
          %v3609 = vunpack.c.l.b16 %v3205
          %v3610 = vunpack.c.l.b16 %v3206
          %v3611 = vunpack.c.l.b16 %v3207
          %v3612 = vunpack.c.l.b16 %v3208
          %v3613 = vunpack.c.l.b16 %v3209
          %v3614 = vunpack.c.l.b16 %v3210
          %v3615 = vunpack.c.l.b16 %v3211
          %v3616 = vunpack.c.l.b16 %v3212
          %v3617 = vpack.c.b16 %v3609, %v3608
          %v3618 = vpack.c.b16 %v3611, %v3610
          %v3619 = vpack.c.b16 %v3613, %v3612
          %v3620 = vpack.c.b16 %v3615, %v3614
          %v3621 = vpack.c.b16 %v3616, %v3616
          %v3627 = vsel %vm3289, %v3621, 0
          %3629 = vmatpush.bf16.msra.mxu0 0
          %3630 = vmatpush.bf16.msra.mxu0 0
          %3631 = vmatpush.bf16.msra.mxu0 0
          %3632 = vmatpush.bf16.msra.mxu0 %v3627
          %3633 = vmatpush.bf16.msra.mxu0 %v3620
          %3634 = vmatpush.bf16.msra.mxu0 %v3619
          %3635 = vmatpush.bf16.msra.mxu0 %v3618
          %3636 = vmatpush.bf16.msra.mxu0 %v3617
          %3637 = vmatmul.bf16.gmra.mxu0 %v3463
          %v3638 = vpop.f32.mrf.mxu0
          %v3639 = vadd.f32 0.0, %v3638
          %v3640 = vpop.f32.mrf.mxu0
          %v3641 = vadd.f32 0.0, %v3640
          %3642 = vmatmul.bf16.gmra.mxu0 %v3466
          %v3643 = vpop.f32.mrf.mxu0
          %v3644 = vadd.f32 0.0, %v3643
          %v3645 = vpop.f32.mrf.mxu0
          %v3646 = vadd.f32 0.0, %v3645
          %3647 = vmatmul.bf16.gmra.mxu0 %v3469
          %v3648 = vpop.f32.mrf.mxu0
          %v3649 = vadd.f32 0.0, %v3648
          %v3650 = vpop.f32.mrf.mxu0
          %v3651 = vadd.f32 0.0, %v3650
          %3652 = vmatmul.bf16.gmra.mxu0 %v3472
          %v3653 = vpop.f32.mrf.mxu0
          %v3654 = vadd.f32 0.0, %v3653
          %v3655 = vpop.f32.mrf.mxu0
          %v3656 = vadd.f32 0.0, %v3655
          %3657 = vmatmul.bf16.gmra.mxu0 %v3475
          %v3658 = vpop.f32.mrf.mxu0
          %v3659 = vadd.f32 0.0, %v3658
          %v3660 = vpop.f32.mrf.mxu0
          %v3661 = vadd.f32 0.0, %v3660
          %3662 = vmatmul.bf16.gmra.mxu0 %v3478
          %v3663 = vpop.f32.mrf.mxu0
          %v3664 = vadd.f32 0.0, %v3663
          %v3665 = vpop.f32.mrf.mxu0
          %v3666 = vadd.f32 0.0, %v3665
          %3667 = vmatmul.bf16.gmra.mxu0 %v3481
          %v3668 = vpop.f32.mrf.mxu0
          %v3669 = vadd.f32 0.0, %v3668
          %v3670 = vpop.f32.mrf.mxu0
          %v3671 = vadd.f32 0.0, %v3670
          %3672 = vmatmul.bf16.gmra.mxu0 %v3484
          %v3673 = vpop.f32.mrf.mxu0
          %v3674 = vadd.f32 0.0, %v3673
          %v3675 = vpop.f32.mrf.mxu0
          %v3676 = vadd.f32 0.0, %v3675
          %3677 = vmatmul.bf16.gmra.mxu0 %v3487
          %v3678 = vpop.f32.mrf.mxu0
          %v3679 = vadd.f32 0.0, %v3678
          %v3680 = vpop.f32.mrf.mxu0
          %v3681 = vadd.f32 0.0, %v3680
          %3682 = vmatmul.bf16.gmra.mxu0 %v3490
          %v3683 = vpop.f32.mrf.mxu0
          %v3684 = vadd.f32 0.0, %v3683
          %v3685 = vpop.f32.mrf.mxu0
          %v3686 = vadd.f32 0.0, %v3685
          %3687 = vmatmul.bf16.gmra.mxu0 %v3493
          %v3688 = vpop.f32.mrf.mxu0
          %v3689 = vadd.f32 0.0, %v3688
          %v3690 = vpop.f32.mrf.mxu0
          %v3691 = vadd.f32 0.0, %v3690
          %3692 = vmatmul.bf16.gmra.mxu0 %v3496
          %v3693 = vpop.f32.mrf.mxu0
          %v3694 = vadd.f32 0.0, %v3693
          %v3695 = vpop.f32.mrf.mxu0
          %v3696 = vadd.f32 0.0, %v3695
          %3697 = vmatmul.bf16.gmra.mxu0 %v3499
          %v3698 = vpop.f32.mrf.mxu0
          %v3699 = vadd.f32 0.0, %v3698
          %v3700 = vpop.f32.mrf.mxu0
          %v3701 = vadd.f32 0.0, %v3700
          %3702 = vmatmul.bf16.gmra.mxu0 %v3502
          %v3703 = vpop.f32.mrf.mxu0
          %v3704 = vadd.f32 0.0, %v3703
          %v3705 = vpop.f32.mrf.mxu0
          %v3706 = vadd.f32 0.0, %v3705
          %3707 = vmatmul.bf16.gmra.mxu0 %v3505
          %v3708 = vpop.f32.mrf.mxu0
          %v3709 = vadd.f32 0.0, %v3708
          %v3710 = vpop.f32.mrf.mxu0
          %v3711 = vadd.f32 0.0, %v3710
          %3712 = vmatmul.bf16.gmra.mxu0 %v3508
          %v3713 = vpop.f32.mrf.mxu0
          %v3714 = vadd.f32 0.0, %v3713
          %v3715 = vpop.f32.mrf.mxu0
          %v3716 = vadd.f32 0.0, %v3715
          %3717 = vdwg.mxu0
          %v3718 = vadd.f32 %v3520, %v3639
          %v3719 = vadd.f32 %v3522, %v3641
          %v3720 = vadd.f32 %v3525, %v3644
          %v3721 = vadd.f32 %v3527, %v3646
          %v3722 = vadd.f32 %v3530, %v3649
          %v3723 = vadd.f32 %v3532, %v3651
          %v3724 = vadd.f32 %v3535, %v3654
          %v3725 = vadd.f32 %v3537, %v3656
          %v3726 = vadd.f32 %v3540, %v3659
          %v3727 = vadd.f32 %v3542, %v3661
          %v3728 = vadd.f32 %v3545, %v3664
          %v3729 = vadd.f32 %v3547, %v3666
          %v3730 = vadd.f32 %v3550, %v3669
          %v3731 = vadd.f32 %v3552, %v3671
          %v3732 = vadd.f32 %v3555, %v3674
          %v3733 = vadd.f32 %v3557, %v3676
          %v3734 = vadd.f32 %v3560, %v3679
          %v3735 = vadd.f32 %v3562, %v3681
          %v3736 = vadd.f32 %v3565, %v3684
          %v3737 = vadd.f32 %v3567, %v3686
          %v3738 = vadd.f32 %v3570, %v3689
          %v3739 = vadd.f32 %v3572, %v3691
          %v3740 = vadd.f32 %v3575, %v3694
          %v3741 = vadd.f32 %v3577, %v3696
          %v3742 = vadd.f32 %v3580, %v3699
          %v3743 = vadd.f32 %v3582, %v3701
          %v3744 = vadd.f32 %v3585, %v3704
          %v3745 = vadd.f32 %v3587, %v3706
          %v3746 = vadd.f32 %v3590, %v3709
          %v3747 = vadd.f32 %v3592, %v3711
          %v3748 = vadd.f32 %v3595, %v3714
          %v3749 = vadd.f32 %v3597, %v3716
          %s3750 = smul.u32 %s22, 256
          %s3751 = scalar_lea.vmem [#allocation2], %s3750
          %3752 = vst [vmem:[%s3751] sm:$0xff] %v3718
          %3753 = vst [vmem:[%s3751 + $0x8] sm:$0xff] %v3719
          %3754 = vst [vmem:[%s3751 + $0x10] sm:$0xff] %v3720
          %3755 = vst [vmem:[%s3751 + $0x18] sm:$0xff] %v3721
          %3756 = vst [vmem:[%s3751 + $0x20] sm:$0xff] %v3722
          %3757 = vst [vmem:[%s3751 + $0x28] sm:$0xff] %v3723
          %3758 = vst [vmem:[%s3751 + $0x30] sm:$0xff] %v3724
          %3759 = vst [vmem:[%s3751 + $0x38] sm:$0xff] %v3725
          %3760 = vst [vmem:[%s3751 + $0x40] sm:$0xff] %v3726
          %3761 = vst [vmem:[%s3751 + $0x48] sm:$0xff] %v3727
          %3762 = vst [vmem:[%s3751 + $0x50] sm:$0xff] %v3728
          %3763 = vst [vmem:[%s3751 + $0x58] sm:$0xff] %v3729
          %3764 = vst [vmem:[%s3751 + $0x60] sm:$0xff] %v3730
          %3765 = vst [vmem:[%s3751 + $0x68] sm:$0xff] %v3731
          %3766 = vst [vmem:[%s3751 + $0x70] sm:$0xff] %v3732
          %3767 = vst [vmem:[%s3751 + $0x78] sm:$0xff] %v3733
          %3768 = vst [vmem:[%s3751 + $0x80] sm:$0xff] %v3734
          %3769 = vst [vmem:[%s3751 + $0x88] sm:$0xff] %v3735
          %3770 = vst [vmem:[%s3751 + $0x90] sm:$0xff] %v3736
          %3771 = vst [vmem:[%s3751 + $0x98] sm:$0xff] %v3737
          %3772 = vst [vmem:[%s3751 + $0xa0] sm:$0xff] %v3738
          %3773 = vst [vmem:[%s3751 + $0xa8] sm:$0xff] %v3739
          %3774 = vst [vmem:[%s3751 + $0xb0] sm:$0xff] %v3740
          %3775 = vst [vmem:[%s3751 + $0xb8] sm:$0xff] %v3741
          %3776 = vst [vmem:[%s3751 + $0xc0] sm:$0xff] %v3742
          %3777 = vst [vmem:[%s3751 + $0xc8] sm:$0xff] %v3743
          %3778 = vst [vmem:[%s3751 + $0xd0] sm:$0xff] %v3744
          %3779 = vst [vmem:[%s3751 + $0xd8] sm:$0xff] %v3745
          %3780 = vst [vmem:[%s3751 + $0xe0] sm:$0xff] %v3746
          %3781 = vst [vmem:[%s3751 + $0xe8] sm:$0xff] %v3747
          %3782 = vst [vmem:[%s3751 + $0xf0] sm:$0xff] %v3748
          %3783 = vst [vmem:[%s3751 + $0xf8] sm:$0xff] %v3749
        $region44: #{tpu_custom_call.1} parent=39 // pred_fallthru
          _
        %p3784 = scmp.eq.s32.totalorder %s21, 1
        // Predicated region
        $region45: #{tpu_custom_call.1} parent=39 // pred_check
          %p3785 = pneg %p3784
        $region46: #{tpu_custom_call.1} parent=39 // pred_check_branch
          %3787 = sbr.rel (%p3785) target = $region48
        $region47: #{tpu_custom_call.1} parent=39 // pred_region
          %p3788 = scmp.eq.s32.totalorder %s22, 0
          // Predicated region
          $region49: #{tpu_custom_call.1} parent=47 // pred_check
            %p3789 = pneg %p3788
          $region50: #{tpu_custom_call.1} parent=47 // pred_check_branch
            %3791 = sbr.rel (%p3789) target = $region52
          $region51: #{tpu_custom_call.1} parent=47 // pred_region
            %v3792 = vld [vmem:[%s4] sm:$0x1]
            %v3793 = vld [vmem:[%s4 + $0x1] sm:$0x1]
            %v3794 = vld [vmem:[#allocation2] sm:$0xff]
            %v3795 = vld [vmem:[#allocation2 + $0x8] sm:$0xff]
            %v3796 = vld [vmem:[#allocation2 + $0x10] sm:$0xff]
            %v3797 = vld [vmem:[#allocation2 + $0x18] sm:$0xff]
            %v3798 = vld [vmem:[#allocation2 + $0x20] sm:$0xff]
            %v3799 = vld [vmem:[#allocation2 + $0x28] sm:$0xff]
            %v3800 = vld [vmem:[#allocation2 + $0x30] sm:$0xff]
            %v3801 = vld [vmem:[#allocation2 + $0x38] sm:$0xff]
            %v3802 = vld [vmem:[#allocation2 + $0x40] sm:$0xff]
            %v3803 = vld [vmem:[#allocation2 + $0x48] sm:$0xff]
            %v3804 = vld [vmem:[#allocation2 + $0x50] sm:$0xff]
            %v3805 = vld [vmem:[#allocation2 + $0x58] sm:$0xff]
            %v3806 = vld [vmem:[#allocation2 + $0x60] sm:$0xff]
            %v3807 = vld [vmem:[#allocation2 + $0x68] sm:$0xff]
            %v3808 = vld [vmem:[#allocation2 + $0x70] sm:$0xff]
            %v3809 = vld [vmem:[#allocation2 + $0x78] sm:$0xff]
            %v3810 = vld [vmem:[#allocation2 + $0x80] sm:$0xff]
            %v3811 = vld [vmem:[#allocation2 + $0x88] sm:$0xff]
            %v3812 = vld [vmem:[#allocation2 + $0x90] sm:$0xff]
            %v3813 = vld [vmem:[#allocation2 + $0x98] sm:$0xff]
            %v3814 = vld [vmem:[#allocation2 + $0xa0] sm:$0xff]
            %v3815 = vld [vmem:[#allocation2 + $0xa8] sm:$0xff]
            %v3816 = vld [vmem:[#allocation2 + $0xb0] sm:$0xff]
            %v3817 = vld [vmem:[#allocation2 + $0xb8] sm:$0xff]
            %v3818 = vld [vmem:[#allocation2 + $0xc0] sm:$0xff]
            %v3819 = vld [vmem:[#allocation2 + $0xc8] sm:$0xff]
            %v3820 = vld [vmem:[#allocation2 + $0xd0] sm:$0xff]
            %v3821 = vld [vmem:[#allocation2 + $0xd8] sm:$0xff]
            %v3822 = vld [vmem:[#allocation2 + $0xe0] sm:$0xff]
            %v3823 = vld [vmem:[#allocation2 + $0xe8] sm:$0xff]
            %v3824 = vld [vmem:[#allocation2 + $0xf0] sm:$0xff]
            %v3825 = vld [vmem:[#allocation2 + $0xf8] sm:$0xff]
            %v3826 = vld [vmem:[#allocation2 + $0x100] sm:$0xff]
            %v3827 = vld [vmem:[#allocation2 + $0x108] sm:$0xff]
            %v3828 = vld [vmem:[#allocation2 + $0x110] sm:$0xff]
            %v3829 = vld [vmem:[#allocation2 + $0x118] sm:$0xff]
            %v3830 = vld [vmem:[#allocation2 + $0x120] sm:$0xff]
            %v3831 = vld [vmem:[#allocation2 + $0x128] sm:$0xff]
            %v3832 = vld [vmem:[#allocation2 + $0x130] sm:$0xff]
            %v3833 = vld [vmem:[#allocation2 + $0x138] sm:$0xff]
            %v3834 = vld [vmem:[#allocation2 + $0x140] sm:$0xff]
            %v3835 = vld [vmem:[#allocation2 + $0x148] sm:$0xff]
            %v3836 = vld [vmem:[#allocation2 + $0x150] sm:$0xff]
            %v3837 = vld [vmem:[#allocation2 + $0x158] sm:$0xff]
            %v3838 = vld [vmem:[#allocation2 + $0x160] sm:$0xff]
            %v3839 = vld [vmem:[#allocation2 + $0x168] sm:$0xff]
            %v3840 = vld [vmem:[#allocation2 + $0x170] sm:$0xff]
            %v3841 = vld [vmem:[#allocation2 + $0x178] sm:$0xff]
            %v3842 = vld [vmem:[#allocation2 + $0x180] sm:$0xff]
            %v3843 = vld [vmem:[#allocation2 + $0x188] sm:$0xff]
            %v3844 = vld [vmem:[#allocation2 + $0x190] sm:$0xff]
            %v3845 = vld [vmem:[#allocation2 + $0x198] sm:$0xff]
            %v3846 = vld [vmem:[#allocation2 + $0x1a0] sm:$0xff]
            %v3847 = vld [vmem:[#allocation2 + $0x1a8] sm:$0xff]
            %v3848 = vld [vmem:[#allocation2 + $0x1b0] sm:$0xff]
            %v3849 = vld [vmem:[#allocation2 + $0x1b8] sm:$0xff]
            %v3850 = vld [vmem:[#allocation2 + $0x1c0] sm:$0xff]
            %v3851 = vld [vmem:[#allocation2 + $0x1c8] sm:$0xff]
            %v3852 = vld [vmem:[#allocation2 + $0x1d0] sm:$0xff]
            %v3853 = vld [vmem:[#allocation2 + $0x1d8] sm:$0xff]
            %v3854 = vld [vmem:[#allocation2 + $0x1e0] sm:$0xff]
            %v3855 = vld [vmem:[#allocation2 + $0x1e8] sm:$0xff]
            %v3856 = vld [vmem:[#allocation2 + $0x1f0] sm:$0xff]
            %v3857 = vld [vmem:[#allocation2 + $0x1f8] sm:$0xff]
            %v3858 = vadd.f32 %v3794, %v3795
            %v3859 = vadd.f32 %v3858, %v3796
            %v3860 = vadd.f32 %v3859, %v3797
            %v3861 = vadd.f32 %v3860, %v3798
            %v3862 = vadd.f32 %v3861, %v3799
            %v3863 = vadd.f32 %v3862, %v3800
            %v3864 = vadd.f32 %v3863, %v3801
            %v3865 = vadd.f32 %v3864, %v3802
            %v3866 = vadd.f32 %v3865, %v3803
            %v3867 = vadd.f32 %v3866, %v3804
            %v3868 = vadd.f32 %v3867, %v3805
            %v3869 = vadd.f32 %v3868, %v3806
            %v3870 = vadd.f32 %v3869, %v3807
            %v3871 = vadd.f32 %v3870, %v3808
            %v3872 = vadd.f32 %v3871, %v3809
            %v3873 = vadd.f32 %v3872, %v3810
            %v3874 = vadd.f32 %v3873, %v3811
            %v3875 = vadd.f32 %v3874, %v3812
            %v3876 = vadd.f32 %v3875, %v3813
            %v3877 = vadd.f32 %v3876, %v3814
            %v3878 = vadd.f32 %v3877, %v3815
            %v3879 = vadd.f32 %v3878, %v3816
            %v3880 = vadd.f32 %v3879, %v3817
            %v3881 = vadd.f32 %v3880, %v3818
            %v3882 = vadd.f32 %v3881, %v3819
            %v3883 = vadd.f32 %v3882, %v3820
            %v3884 = vadd.f32 %v3883, %v3821
            %v3885 = vadd.f32 %v3884, %v3822
            %v3886 = vadd.f32 %v3885, %v3823
            %v3887 = vadd.f32 %v3886, %v3824
            %v3888 = vadd.f32 %v3887, %v3825
            %v3889 = vadd.f32 %v3888, %v3826
            %v3890 = vadd.f32 %v3889, %v3827
            %v3891 = vadd.f32 %v3890, %v3828
            %v3892 = vadd.f32 %v3891, %v3829
            %v3893 = vadd.f32 %v3892, %v3830
            %v3894 = vadd.f32 %v3893, %v3831
            %v3895 = vadd.f32 %v3894, %v3832
            %v3896 = vadd.f32 %v3895, %v3833
            %v3897 = vadd.f32 %v3896, %v3834
            %v3898 = vadd.f32 %v3897, %v3835
            %v3899 = vadd.f32 %v3898, %v3836
            %v3900 = vadd.f32 %v3899, %v3837
            %v3901 = vadd.f32 %v3900, %v3838
            %v3902 = vadd.f32 %v3901, %v3839
            %v3903 = vadd.f32 %v3902, %v3840
            %v3904 = vadd.f32 %v3903, %v3841
            %v3905 = vadd.f32 %v3904, %v3842
            %v3906 = vadd.f32 %v3905, %v3843
            %v3907 = vadd.f32 %v3906, %v3844
            %v3908 = vadd.f32 %v3907, %v3845
            %v3909 = vadd.f32 %v3908, %v3846
            %v3910 = vadd.f32 %v3909, %v3847
            %v3911 = vadd.f32 %v3910, %v3848
            %v3912 = vadd.f32 %v3911, %v3849
            %v3913 = vadd.f32 %v3912, %v3850
            %v3914 = vadd.f32 %v3913, %v3851
            %v3915 = vadd.f32 %v3914, %v3852
            %v3916 = vadd.f32 %v3915, %v3853
            %v3917 = vadd.f32 %v3916, %v3854
            %v3918 = vadd.f32 %v3917, %v3855
            %v3919 = vadd.f32 %v3918, %v3856
            %v3920 = vadd.f32 %v3919, %v3857
            %v3921 = vrot.slane %v3920, 4
            %v3922 = vadd.f32 %v3920, %v3921
            %v3923 = vrot.slane %v3922, 2
            %v3924 = vadd.f32 %v3922, %v3923
            %v3925 = vrot.slane %v3924, 1
            %v3926 = vadd.f32 %v3924, %v3925
            %v3927 = vrcp.pop 512.0
            %v3928 = vmul.f32 512.0, %v3927
            %v3929 = vsub.f32 1.0, %v3928
            %v3930 = vmul.f32 %v3927, %v3929
            %v3931 = vadd.f32 %v3927, %v3930
            %vm3932 = vweird.f32 %v3927
            %v3933 = vsel %vm3932, %v3927, %v3931
            %v3934 = vmul.f32 %v3926, %v3933
            %v3935 = vsub.f32 %v3794, %v3934
            %v3936 = vsub.f32 %v3795, %v3934
            %v3937 = vsub.f32 %v3796, %v3934
            %v3938 = vsub.f32 %v3797, %v3934
            %v3939 = vsub.f32 %v3798, %v3934
            %v3940 = vsub.f32 %v3799, %v3934
            %v3941 = vsub.f32 %v3800, %v3934
            %v3942 = vsub.f32 %v3801, %v3934
            %v3943 = vsub.f32 %v3802, %v3934
            %v3944 = vsub.f32 %v3803, %v3934
            %v3945 = vsub.f32 %v3804, %v3934
            %v3946 = vsub.f32 %v3805, %v3934
            %v3947 = vsub.f32 %v3806, %v3934
            %v3948 = vsub.f32 %v3807, %v3934
            %v3949 = vsub.f32 %v3808, %v3934
            %v3950 = vsub.f32 %v3809, %v3934
            %v3951 = vsub.f32 %v3810, %v3934
            %v3952 = vsub.f32 %v3811, %v3934
            %v3953 = vsub.f32 %v3812, %v3934
            %v3954 = vsub.f32 %v3813, %v3934
            %v3955 = vsub.f32 %v3814, %v3934
            %v3956 = vsub.f32 %v3815, %v3934
            %v3957 = vsub.f32 %v3816, %v3934
            %v3958 = vsub.f32 %v3817, %v3934
            %v3959 = vsub.f32 %v3818, %v3934
            %v3960 = vsub.f32 %v3819, %v3934
            %v3961 = vsub.f32 %v3820, %v3934
            %v3962 = vsub.f32 %v3821, %v3934
            %v3963 = vsub.f32 %v3822, %v3934
            %v3964 = vsub.f32 %v3823, %v3934
            %v3965 = vsub.f32 %v3824, %v3934
            %v3966 = vsub.f32 %v3825, %v3934
            %v3967 = vsub.f32 %v3826, %v3934
            %v3968 = vsub.f32 %v3827, %v3934
            %v3969 = vsub.f32 %v3828, %v3934
            %v3970 = vsub.f32 %v3829, %v3934
            %v3971 = vsub.f32 %v3830, %v3934
            %v3972 = vsub.f32 %v3831, %v3934
            %v3973 = vsub.f32 %v3832, %v3934
            %v3974 = vsub.f32 %v3833, %v3934
            %v3975 = vsub.f32 %v3834, %v3934
            %v3976 = vsub.f32 %v3835, %v3934
            %v3977 = vsub.f32 %v3836, %v3934
            %v3978 = vsub.f32 %v3837, %v3934
            %v3979 = vsub.f32 %v3838, %v3934
            %v3980 = vsub.f32 %v3839, %v3934
            %v3981 = vsub.f32 %v3840, %v3934
            %v3982 = vsub.f32 %v3841, %v3934
            %v3983 = vsub.f32 %v3842, %v3934
            %v3984 = vsub.f32 %v3843, %v3934
            %v3985 = vsub.f32 %v3844, %v3934
            %v3986 = vsub.f32 %v3845, %v3934
            %v3987 = vsub.f32 %v3846, %v3934
            %v3988 = vsub.f32 %v3847, %v3934
            %v3989 = vsub.f32 %v3848, %v3934
            %v3990 = vsub.f32 %v3849, %v3934
            %v3991 = vsub.f32 %v3850, %v3934
            %v3992 = vsub.f32 %v3851, %v3934
            %v3993 = vsub.f32 %v3852, %v3934
            %v3994 = vsub.f32 %v3853, %v3934
            %v3995 = vsub.f32 %v3854, %v3934
            %v3996 = vsub.f32 %v3855, %v3934
            %v3997 = vsub.f32 %v3856, %v3934
            %v3998 = vsub.f32 %v3857, %v3934
            %v3999 = vmul.f32 %v3935, %v3935
            %v4000 = vmul.f32 %v3936, %v3936
            %v4001 = vmul.f32 %v3937, %v3937
            %v4002 = vmul.f32 %v3938, %v3938
            %v4003 = vmul.f32 %v3939, %v3939
            %v4004 = vmul.f32 %v3940, %v3940
            %v4005 = vmul.f32 %v3941, %v3941
            %v4006 = vmul.f32 %v3942, %v3942
            %v4007 = vmul.f32 %v3943, %v3943
            %v4008 = vmul.f32 %v3944, %v3944
            %v4009 = vmul.f32 %v3945, %v3945
            %v4010 = vmul.f32 %v3946, %v3946
            %v4011 = vmul.f32 %v3947, %v3947
            %v4012 = vmul.f32 %v3948, %v3948
            %v4013 = vmul.f32 %v3949, %v3949
            %v4014 = vmul.f32 %v3950, %v3950
            %v4015 = vmul.f32 %v3951, %v3951
            %v4016 = vmul.f32 %v3952, %v3952
            %v4017 = vmul.f32 %v3953, %v3953
            %v4018 = vmul.f32 %v3954, %v3954
            %v4019 = vmul.f32 %v3955, %v3955
            %v4020 = vmul.f32 %v3956, %v3956
            %v4021 = vmul.f32 %v3957, %v3957
            %v4022 = vmul.f32 %v3958, %v3958
            %v4023 = vmul.f32 %v3959, %v3959
            %v4024 = vmul.f32 %v3960, %v3960
            %v4025 = vmul.f32 %v3961, %v3961
            %v4026 = vmul.f32 %v3962, %v3962
            %v4027 = vmul.f32 %v3963, %v3963
            %v4028 = vmul.f32 %v3964, %v3964
            %v4029 = vmul.f32 %v3965, %v3965
            %v4030 = vmul.f32 %v3966, %v3966
            %v4031 = vmul.f32 %v3967, %v3967
            %v4032 = vmul.f32 %v3968, %v3968
            %v4033 = vmul.f32 %v3969, %v3969
            %v4034 = vmul.f32 %v3970, %v3970
            %v4035 = vmul.f32 %v3971, %v3971
            %v4036 = vmul.f32 %v3972, %v3972
            %v4037 = vmul.f32 %v3973, %v3973
            %v4038 = vmul.f32 %v3974, %v3974
            %v4039 = vmul.f32 %v3975, %v3975
            %v4040 = vmul.f32 %v3976, %v3976
            %v4041 = vmul.f32 %v3977, %v3977
            %v4042 = vmul.f32 %v3978, %v3978
            %v4043 = vmul.f32 %v3979, %v3979
            %v4044 = vmul.f32 %v3980, %v3980
            %v4045 = vmul.f32 %v3981, %v3981
            %v4046 = vmul.f32 %v3982, %v3982
            %v4047 = vmul.f32 %v3983, %v3983
            %v4048 = vmul.f32 %v3984, %v3984
            %v4049 = vmul.f32 %v3985, %v3985
            %v4050 = vmul.f32 %v3986, %v3986
            %v4051 = vmul.f32 %v3987, %v3987
            %v4052 = vmul.f32 %v3988, %v3988
            %v4053 = vmul.f32 %v3989, %v3989
            %v4054 = vmul.f32 %v3990, %v3990
            %v4055 = vmul.f32 %v3991, %v3991
            %v4056 = vmul.f32 %v3992, %v3992
            %v4057 = vmul.f32 %v3993, %v3993
            %v4058 = vmul.f32 %v3994, %v3994
            %v4059 = vmul.f32 %v3995, %v3995
            %v4060 = vmul.f32 %v3996, %v3996
            %v4061 = vmul.f32 %v3997, %v3997
            %v4062 = vmul.f32 %v3998, %v3998
            %v4063 = vadd.f32 %v3999, %v4000
            %v4064 = vadd.f32 %v4063, %v4001
            %v4065 = vadd.f32 %v4064, %v4002
            %v4066 = vadd.f32 %v4065, %v4003
            %v4067 = vadd.f32 %v4066, %v4004
            %v4068 = vadd.f32 %v4067, %v4005
            %v4069 = vadd.f32 %v4068, %v4006
            %v4070 = vadd.f32 %v4069, %v4007
            %v4071 = vadd.f32 %v4070, %v4008
            %v4072 = vadd.f32 %v4071, %v4009
            %v4073 = vadd.f32 %v4072, %v4010
            %v4074 = vadd.f32 %v4073, %v4011
            %v4075 = vadd.f32 %v4074, %v4012
            %v4076 = vadd.f32 %v4075, %v4013
            %v4077 = vadd.f32 %v4076, %v4014
            %v4078 = vadd.f32 %v4077, %v4015
            %v4079 = vadd.f32 %v4078, %v4016
            %v4080 = vadd.f32 %v4079, %v4017
            %v4081 = vadd.f32 %v4080, %v4018
            %v4082 = vadd.f32 %v4081, %v4019
            %v4083 = vadd.f32 %v4082, %v4020
            %v4084 = vadd.f32 %v4083, %v4021
            %v4085 = vadd.f32 %v4084, %v4022
            %v4086 = vadd.f32 %v4085, %v4023
            %v4087 = vadd.f32 %v4086, %v4024
            %v4088 = vadd.f32 %v4087, %v4025
            %v4089 = vadd.f32 %v4088, %v4026
            %v4090 = vadd.f32 %v4089, %v4027
            %v4091 = vadd.f32 %v4090, %v4028
            %v4092 = vadd.f32 %v4091, %v4029
            %v4093 = vadd.f32 %v4092, %v4030
            %v4094 = vadd.f32 %v4093, %v4031
            %v4095 = vadd.f32 %v4094, %v4032
            %v4096 = vadd.f32 %v4095, %v4033
            %v4097 = vadd.f32 %v4096, %v4034
            %v4098 = vadd.f32 %v4097, %v4035
            %v4099 = vadd.f32 %v4098, %v4036
            %v4100 = vadd.f32 %v4099, %v4037
            %v4101 = vadd.f32 %v4100, %v4038
            %v4102 = vadd.f32 %v4101, %v4039
            %v4103 = vadd.f32 %v4102, %v4040
            %v4104 = vadd.f32 %v4103, %v4041
            %v4105 = vadd.f32 %v4104, %v4042
            %v4106 = vadd.f32 %v4105, %v4043
            %v4107 = vadd.f32 %v4106, %v4044
            %v4108 = vadd.f32 %v4107, %v4045
            %v4109 = vadd.f32 %v4108, %v4046
            %v4110 = vadd.f32 %v4109, %v4047
            %v4111 = vadd.f32 %v4110, %v4048
            %v4112 = vadd.f32 %v4111, %v4049
            %v4113 = vadd.f32 %v4112, %v4050
            %v4114 = vadd.f32 %v4113, %v4051
            %v4115 = vadd.f32 %v4114, %v4052
            %v4116 = vadd.f32 %v4115, %v4053
            %v4117 = vadd.f32 %v4116, %v4054
            %v4118 = vadd.f32 %v4117, %v4055
            %v4119 = vadd.f32 %v4118, %v4056
            %v4120 = vadd.f32 %v4119, %v4057
            %v4121 = vadd.f32 %v4120, %v4058
            %v4122 = vadd.f32 %v4121, %v4059
            %v4123 = vadd.f32 %v4122, %v4060
            %v4124 = vadd.f32 %v4123, %v4061
            %v4125 = vadd.f32 %v4124, %v4062
            %v4126 = vrot.slane %v4125, 4
            %v4127 = vadd.f32 %v4125, %v4126
            %v4128 = vrot.slane %v4127, 2
            %v4129 = vadd.f32 %v4127, %v4128
            %v4130 = vrot.slane %v4129, 1
            %v4131 = vadd.f32 %v4129, %v4130
            %v4132 = vmul.f32 %v4131, %v3933
            %v4133 = vadd.f32 %v4132, 1e-05
            %v4134 = vrsqrt.pop %v4133
            %v4135 = vmul.f32 %v4134, %v4133
            %v4136 = vmul.f32 %v4135, %v4134
            %v4137 = vmul.f32 0.5, %v4136
            %v4138 = vsub.f32 1.5, %v4137
            %v4139 = vmul.f32 %v4134, %v4138
            %vm4140 = vweird.f32 %v4133
            %vm4141 = vweird.f32 %v4134
            %vm4142 = vmor %vm4140, %vm4141
            %v4143 = vsel %vm4142, %v4134, %v4139
            %v4144 = vmul.f32 %v3792, %v4143
            %v4145 = vmul.f32 %v3934, %v4144
            %v4146 = vsub.f32 %v3793, %v4145
            %4147 = vst [vmem:[#allocation4] sm:$0x1] %v4144
            %4148 = vst [vmem:[#allocation4 + $0x1] sm:$0x1] %v4146
          $region52: #{tpu_custom_call.1} parent=47 // pred_fallthru
            _
          %s4149 = smul.u32 %s22, 256
          %s4150 = scalar_lea.vmem [#allocation2], %s4149
          %v4151 = vld [vmem:[%s4150] sm:$0xff]
          %v4152 = vld [vmem:[%s4150 + $0x8] sm:$0xff]
          %v4153 = vld [vmem:[%s4150 + $0x10] sm:$0xff]
          %v4154 = vld [vmem:[%s4150 + $0x18] sm:$0xff]
          %v4155 = vld [vmem:[%s4150 + $0x20] sm:$0xff]
          %v4156 = vld [vmem:[%s4150 + $0x28] sm:$0xff]
          %v4157 = vld [vmem:[%s4150 + $0x30] sm:$0xff]
          %v4158 = vld [vmem:[%s4150 + $0x38] sm:$0xff]
          %v4159 = vld [vmem:[%s4150 + $0x40] sm:$0xff]
          %v4160 = vld [vmem:[%s4150 + $0x48] sm:$0xff]
          %v4161 = vld [vmem:[%s4150 + $0x50] sm:$0xff]
          %v4162 = vld [vmem:[%s4150 + $0x58] sm:$0xff]
          %v4163 = vld [vmem:[%s4150 + $0x60] sm:$0xff]
          %v4164 = vld [vmem:[%s4150 + $0x68] sm:$0xff]
          %v4165 = vld [vmem:[%s4150 + $0x70] sm:$0xff]
          %v4166 = vld [vmem:[%s4150 + $0x78] sm:$0xff]
          %v4167 = vld [vmem:[%s4150 + $0x80] sm:$0xff]
          %v4168 = vld [vmem:[%s4150 + $0x88] sm:$0xff]
          %v4169 = vld [vmem:[%s4150 + $0x90] sm:$0xff]
          %v4170 = vld [vmem:[%s4150 + $0x98] sm:$0xff]
          %v4171 = vld [vmem:[%s4150 + $0xa0] sm:$0xff]
          %v4172 = vld [vmem:[%s4150 + $0xa8] sm:$0xff]
          %v4173 = vld [vmem:[%s4150 + $0xb0] sm:$0xff]
          %v4174 = vld [vmem:[%s4150 + $0xb8] sm:$0xff]
          %v4175 = vld [vmem:[%s4150 + $0xc0] sm:$0xff]
          %v4176 = vld [vmem:[%s4150 + $0xc8] sm:$0xff]
          %v4177 = vld [vmem:[%s4150 + $0xd0] sm:$0xff]
          %v4178 = vld [vmem:[%s4150 + $0xd8] sm:$0xff]
          %v4179 = vld [vmem:[%s4150 + $0xe0] sm:$0xff]
          %v4180 = vld [vmem:[%s4150 + $0xe8] sm:$0xff]
          %v4181 = vld [vmem:[%s4150 + $0xf0] sm:$0xff]
          %v4182 = vld [vmem:[%s4150 + $0xf8] sm:$0xff]
          %v4183 = vld [vmem:[#allocation4] sm:$0x1]
          %v4184 = vperm.slane %v4183, 0
          %v4185 = vmul.f32 %v4151, %v4184
          %v4186 = vmul.f32 %v4152, %v4184
          %v4187 = vmul.f32 %v4153, %v4184
          %v4188 = vmul.f32 %v4154, %v4184
          %v4189 = vmul.f32 %v4155, %v4184
          %v4190 = vmul.f32 %v4156, %v4184
          %v4191 = vmul.f32 %v4157, %v4184
          %v4192 = vmul.f32 %v4158, %v4184
          %v4193 = vmul.f32 %v4159, %v4184
          %v4194 = vmul.f32 %v4160, %v4184
          %v4195 = vmul.f32 %v4161, %v4184
          %v4196 = vmul.f32 %v4162, %v4184
          %v4197 = vmul.f32 %v4163, %v4184
          %v4198 = vmul.f32 %v4164, %v4184
          %v4199 = vmul.f32 %v4165, %v4184
          %v4200 = vmul.f32 %v4166, %v4184
          %v4201 = vmul.f32 %v4167, %v4184
          %v4202 = vmul.f32 %v4168, %v4184
          %v4203 = vmul.f32 %v4169, %v4184
          %v4204 = vmul.f32 %v4170, %v4184
          %v4205 = vmul.f32 %v4171, %v4184
          %v4206 = vmul.f32 %v4172, %v4184
          %v4207 = vmul.f32 %v4173, %v4184
          %v4208 = vmul.f32 %v4174, %v4184
          %v4209 = vmul.f32 %v4175, %v4184
          %v4210 = vmul.f32 %v4176, %v4184
          %v4211 = vmul.f32 %v4177, %v4184
          %v4212 = vmul.f32 %v4178, %v4184
          %v4213 = vmul.f32 %v4179, %v4184
          %v4214 = vmul.f32 %v4180, %v4184
          %v4215 = vmul.f32 %v4181, %v4184
          %v4216 = vmul.f32 %v4182, %v4184
          %v4217 = vld [vmem:[#allocation4 + $0x1] sm:$0x1]
          %v4218 = vperm.slane %v4217, 0
          %v4219 = vadd.f32 %v4185, %v4218
          %v4220 = vadd.f32 %v4186, %v4218
          %v4221 = vadd.f32 %v4187, %v4218
          %v4222 = vadd.f32 %v4188, %v4218
          %v4223 = vadd.f32 %v4189, %v4218
          %v4224 = vadd.f32 %v4190, %v4218
          %v4225 = vadd.f32 %v4191, %v4218
          %v4226 = vadd.f32 %v4192, %v4218
          %v4227 = vadd.f32 %v4193, %v4218
          %v4228 = vadd.f32 %v4194, %v4218
          %v4229 = vadd.f32 %v4195, %v4218
          %v4230 = vadd.f32 %v4196, %v4218
          %v4231 = vadd.f32 %v4197, %v4218
          %v4232 = vadd.f32 %v4198, %v4218
          %v4233 = vadd.f32 %v4199, %v4218
          %v4234 = vadd.f32 %v4200, %v4218
          %v4235 = vadd.f32 %v4201, %v4218
          %v4236 = vadd.f32 %v4202, %v4218
          %v4237 = vadd.f32 %v4203, %v4218
          %v4238 = vadd.f32 %v4204, %v4218
          %v4239 = vadd.f32 %v4205, %v4218
          %v4240 = vadd.f32 %v4206, %v4218
          %v4241 = vadd.f32 %v4207, %v4218
          %v4242 = vadd.f32 %v4208, %v4218
          %v4243 = vadd.f32 %v4209, %v4218
          %v4244 = vadd.f32 %v4210, %v4218
          %v4245 = vadd.f32 %v4211, %v4218
          %v4246 = vadd.f32 %v4212, %v4218
          %v4247 = vadd.f32 %v4213, %v4218
          %v4248 = vadd.f32 %v4214, %v4218
          %v4249 = vadd.f32 %v4215, %v4218
          %v4250 = vadd.f32 %v4216, %v4218
          %v4251 = vmax.f32 %v4219, 0.0
          %v4252 = vmax.f32 %v4220, 0.0
          %v4253 = vmax.f32 %v4221, 0.0
          %v4254 = vmax.f32 %v4222, 0.0
          %v4255 = vmax.f32 %v4223, 0.0
          %v4256 = vmax.f32 %v4224, 0.0
          %v4257 = vmax.f32 %v4225, 0.0
          %v4258 = vmax.f32 %v4226, 0.0
          %v4259 = vmax.f32 %v4227, 0.0
          %v4260 = vmax.f32 %v4228, 0.0
          %v4261 = vmax.f32 %v4229, 0.0
          %v4262 = vmax.f32 %v4230, 0.0
          %v4263 = vmax.f32 %v4231, 0.0
          %v4264 = vmax.f32 %v4232, 0.0
          %v4265 = vmax.f32 %v4233, 0.0
          %v4266 = vmax.f32 %v4234, 0.0
          %v4267 = vmax.f32 %v4235, 0.0
          %v4268 = vmax.f32 %v4236, 0.0
          %v4269 = vmax.f32 %v4237, 0.0
          %v4270 = vmax.f32 %v4238, 0.0
          %v4271 = vmax.f32 %v4239, 0.0
          %v4272 = vmax.f32 %v4240, 0.0
          %v4273 = vmax.f32 %v4241, 0.0
          %v4274 = vmax.f32 %v4242, 0.0
          %v4275 = vmax.f32 %v4243, 0.0
          %v4276 = vmax.f32 %v4244, 0.0
          %v4277 = vmax.f32 %v4245, 0.0
          %v4278 = vmax.f32 %v4246, 0.0
          %v4279 = vmax.f32 %v4247, 0.0
          %v4280 = vmax.f32 %v4248, 0.0
          %v4281 = vmax.f32 %v4249, 0.0
          %v4282 = vmax.f32 %v4250, 0.0
          %vm4315 = vcmask 1040384
          %v4316 = vrot.slane %v4251, 7
          %v4317 = vrot.slane %v4252, 7
          %v4318 = vsel %vm4315, %v4316, %v4317
          %v4319 = vrot.slane %v4253, 7
          %v4320 = vrot.slane %v4254, 7
          %v4321 = vsel %vm4315, %v4319, %v4320
          %v4322 = vrot.slane %v4255, 7
          %v4323 = vrot.slane %v4256, 7
          %v4324 = vsel %vm4315, %v4322, %v4323
          %v4325 = vrot.slane %v4257, 7
          %v4326 = vrot.slane %v4258, 7
          %v4327 = vsel %vm4315, %v4325, %v4326
          %v4328 = vrot.slane %v4259, 7
          %v4329 = vrot.slane %v4260, 7
          %v4330 = vsel %vm4315, %v4328, %v4329
          %v4331 = vrot.slane %v4261, 7
          %v4332 = vrot.slane %v4262, 7
          %v4333 = vsel %vm4315, %v4331, %v4332
          %v4334 = vrot.slane %v4263, 7
          %v4335 = vrot.slane %v4264, 7
          %v4336 = vsel %vm4315, %v4334, %v4335
          %v4337 = vrot.slane %v4265, 7
          %v4338 = vrot.slane %v4266, 7
          %v4339 = vsel %vm4315, %v4337, %v4338
          %v4340 = vrot.slane %v4267, 7
          %v4341 = vrot.slane %v4268, 7
          %v4342 = vsel %vm4315, %v4340, %v4341
          %v4343 = vrot.slane %v4269, 7
          %v4344 = vrot.slane %v4270, 7
          %v4345 = vsel %vm4315, %v4343, %v4344
          %v4346 = vrot.slane %v4271, 7
          %v4347 = vrot.slane %v4272, 7
          %v4348 = vsel %vm4315, %v4346, %v4347
          %v4349 = vrot.slane %v4273, 7
          %v4350 = vrot.slane %v4274, 7
          %v4351 = vsel %vm4315, %v4349, %v4350
          %v4352 = vrot.slane %v4275, 7
          %v4353 = vrot.slane %v4276, 7
          %v4354 = vsel %vm4315, %v4352, %v4353
          %v4355 = vrot.slane %v4277, 7
          %v4356 = vrot.slane %v4278, 7
          %v4357 = vsel %vm4315, %v4355, %v4356
          %v4358 = vrot.slane %v4279, 7
          %v4359 = vrot.slane %v4280, 7
          %v4360 = vsel %vm4315, %v4358, %v4359
          %v4361 = vrot.slane %v4281, 7
          %v4362 = vrot.slane %v4282, 7
          %v4363 = vsel %vm4315, %v4361, %v4362
          %v4411 = vsel %vm4315, 0.0, %v4316
          %v4412 = vsel %vm4315, 0.0, %v4319
          %v4413 = vsel %vm4315, 0.0, %v4322
          %v4414 = vsel %vm4315, 0.0, %v4325
          %v4415 = vsel %vm4315, 0.0, %v4328
          %v4416 = vsel %vm4315, 0.0, %v4331
          %v4417 = vsel %vm4315, 0.0, %v4334
          %v4418 = vsel %vm4315, 0.0, %v4337
          %v4419 = vsel %vm4315, 0.0, %v4340
          %v4420 = vsel %vm4315, 0.0, %v4343
          %v4421 = vsel %vm4315, 0.0, %v4346
          %v4422 = vsel %vm4315, 0.0, %v4349
          %v4423 = vsel %vm4315, 0.0, %v4352
          %v4424 = vsel %vm4315, 0.0, %v4355
          %v4425 = vsel %vm4315, 0.0, %v4358
          %v4426 = vsel %vm4315, 0.0, %v4361
          %v4427 = vsel %vm4315, %v4317, 0.0
          %v4428 = vsel %vm4315, %v4320, 0.0
          %v4429 = vsel %vm4315, %v4323, 0.0
          %v4430 = vsel %vm4315, %v4326, 0.0
          %v4431 = vsel %vm4315, %v4329, 0.0
          %v4432 = vsel %vm4315, %v4332, 0.0
          %v4433 = vsel %vm4315, %v4335, 0.0
          %v4434 = vsel %vm4315, %v4338, 0.0
          %v4435 = vsel %vm4315, %v4341, 0.0
          %v4436 = vsel %vm4315, %v4344, 0.0
          %v4437 = vsel %vm4315, %v4347, 0.0
          %v4438 = vsel %vm4315, %v4350, 0.0
          %v4439 = vsel %vm4315, %v4353, 0.0
          %v4440 = vsel %vm4315, %v4356, 0.0
          %v4441 = vsel %vm4315, %v4359, 0.0
          %v4442 = vsel %vm4315, %v4362, 0.0
          %vm4474 = vcmask 1046528
          %v4475 = vrot.slane 0.0, 1
          %v4476 = vsel %vm4474, %v4475, %v4475
          %v4477 = vrot.slane %v4411, 1
          %v4478 = vrot.slane %v4318, 1
          %v4479 = vsel %vm4474, %v4477, %v4478
          %v4480 = vrot.slane %v4427, 1
          %v4481 = vsel %vm4474, %v4478, %v4480
          %v4482 = vrot.slane %v4412, 1
          %v4483 = vrot.slane %v4321, 1
          %v4484 = vsel %vm4474, %v4482, %v4483
          %v4485 = vrot.slane %v4428, 1
          %v4486 = vsel %vm4474, %v4483, %v4485
          %v4487 = vrot.slane %v4413, 1
          %v4488 = vrot.slane %v4324, 1
          %v4489 = vsel %vm4474, %v4487, %v4488
          %v4490 = vrot.slane %v4429, 1
          %v4491 = vsel %vm4474, %v4488, %v4490
          %v4492 = vrot.slane %v4414, 1
          %v4493 = vrot.slane %v4327, 1
          %v4494 = vsel %vm4474, %v4492, %v4493
          %v4495 = vrot.slane %v4430, 1
          %v4496 = vsel %vm4474, %v4493, %v4495
          %v4497 = vrot.slane %v4415, 1
          %v4498 = vrot.slane %v4330, 1
          %v4499 = vsel %vm4474, %v4497, %v4498
          %v4500 = vrot.slane %v4431, 1
          %v4501 = vsel %vm4474, %v4498, %v4500
          %v4502 = vrot.slane %v4416, 1
          %v4503 = vrot.slane %v4333, 1
          %v4504 = vsel %vm4474, %v4502, %v4503
          %v4505 = vrot.slane %v4432, 1
          %v4506 = vsel %vm4474, %v4503, %v4505
          %v4507 = vrot.slane %v4417, 1
          %v4508 = vrot.slane %v4336, 1
          %v4509 = vsel %vm4474, %v4507, %v4508
          %v4510 = vrot.slane %v4433, 1
          %v4511 = vsel %vm4474, %v4508, %v4510
          %v4512 = vrot.slane %v4418, 1
          %v4513 = vrot.slane %v4339, 1
          %v4514 = vsel %vm4474, %v4512, %v4513
          %v4515 = vrot.slane %v4434, 1
          %v4516 = vsel %vm4474, %v4513, %v4515
          %v4517 = vrot.slane %v4419, 1
          %v4518 = vrot.slane %v4342, 1
          %v4519 = vsel %vm4474, %v4517, %v4518
          %v4520 = vrot.slane %v4435, 1
          %v4521 = vsel %vm4474, %v4518, %v4520
          %v4522 = vrot.slane %v4420, 1
          %v4523 = vrot.slane %v4345, 1
          %v4524 = vsel %vm4474, %v4522, %v4523
          %v4525 = vrot.slane %v4436, 1
          %v4526 = vsel %vm4474, %v4523, %v4525
          %v4527 = vrot.slane %v4421, 1
          %v4528 = vrot.slane %v4348, 1
          %v4529 = vsel %vm4474, %v4527, %v4528
          %v4530 = vrot.slane %v4437, 1
          %v4531 = vsel %vm4474, %v4528, %v4530
          %v4532 = vrot.slane %v4422, 1
          %v4533 = vrot.slane %v4351, 1
          %v4534 = vsel %vm4474, %v4532, %v4533
          %v4535 = vrot.slane %v4438, 1
          %v4536 = vsel %vm4474, %v4533, %v4535
          %v4537 = vrot.slane %v4423, 1
          %v4538 = vrot.slane %v4354, 1
          %v4539 = vsel %vm4474, %v4537, %v4538
          %v4540 = vrot.slane %v4439, 1
          %v4541 = vsel %vm4474, %v4538, %v4540
          %v4542 = vrot.slane %v4424, 1
          %v4543 = vrot.slane %v4357, 1
          %v4544 = vsel %vm4474, %v4542, %v4543
          %v4545 = vrot.slane %v4440, 1
          %v4546 = vsel %vm4474, %v4543, %v4545
          %v4547 = vrot.slane %v4425, 1
          %v4548 = vrot.slane %v4360, 1
          %v4549 = vsel %vm4474, %v4547, %v4548
          %v4550 = vrot.slane %v4441, 1
          %v4551 = vsel %vm4474, %v4548, %v4550
          %vm4552 = vcmask 1045504
          %v4553 = vrot.slane 0.0, 2
          %v4554 = vsel %vm4552, %v4553, %v4553
          %v4555 = vrot.slane %v4411, 2
          %v4556 = vrot.slane %v4318, 2
          %v4557 = vsel %vm4552, %v4555, %v4556
          %v4558 = vrot.slane %v4427, 2
          %v4559 = vsel %vm4552, %v4556, %v4558
          %v4560 = vrot.slane %v4412, 2
          %v4561 = vrot.slane %v4321, 2
          %v4562 = vsel %vm4552, %v4560, %v4561
          %v4563 = vrot.slane %v4428, 2
          %v4564 = vsel %vm4552, %v4561, %v4563
          %v4565 = vrot.slane %v4413, 2
          %v4566 = vrot.slane %v4324, 2
          %v4567 = vsel %vm4552, %v4565, %v4566
          %v4568 = vrot.slane %v4429, 2
          %v4569 = vsel %vm4552, %v4566, %v4568
          %v4570 = vrot.slane %v4414, 2
          %v4571 = vrot.slane %v4327, 2
          %v4572 = vsel %vm4552, %v4570, %v4571
          %v4573 = vrot.slane %v4430, 2
          %v4574 = vsel %vm4552, %v4571, %v4573
          %v4575 = vrot.slane %v4415, 2
          %v4576 = vrot.slane %v4330, 2
          %v4577 = vsel %vm4552, %v4575, %v4576
          %v4578 = vrot.slane %v4431, 2
          %v4579 = vsel %vm4552, %v4576, %v4578
          %v4580 = vrot.slane %v4416, 2
          %v4581 = vrot.slane %v4333, 2
          %v4582 = vsel %vm4552, %v4580, %v4581
          %v4583 = vrot.slane %v4432, 2
          %v4584 = vsel %vm4552, %v4581, %v4583
          %v4585 = vrot.slane %v4417, 2
          %v4586 = vrot.slane %v4336, 2
          %v4587 = vsel %vm4552, %v4585, %v4586
          %v4588 = vrot.slane %v4433, 2
          %v4589 = vsel %vm4552, %v4586, %v4588
          %v4590 = vrot.slane %v4418, 2
          %v4591 = vrot.slane %v4339, 2
          %v4592 = vsel %vm4552, %v4590, %v4591
          %v4593 = vrot.slane %v4434, 2
          %v4594 = vsel %vm4552, %v4591, %v4593
          %v4595 = vrot.slane %v4419, 2
          %v4596 = vrot.slane %v4342, 2
          %v4597 = vsel %vm4552, %v4595, %v4596
          %v4598 = vrot.slane %v4435, 2
          %v4599 = vsel %vm4552, %v4596, %v4598
          %v4600 = vrot.slane %v4420, 2
          %v4601 = vrot.slane %v4345, 2
          %v4602 = vsel %vm4552, %v4600, %v4601
          %v4603 = vrot.slane %v4436, 2
          %v4604 = vsel %vm4552, %v4601, %v4603
          %v4605 = vrot.slane %v4421, 2
          %v4606 = vrot.slane %v4348, 2
          %v4607 = vsel %vm4552, %v4605, %v4606
          %v4608 = vrot.slane %v4437, 2
          %v4609 = vsel %vm4552, %v4606, %v4608
          %v4610 = vrot.slane %v4422, 2
          %v4611 = vrot.slane %v4351, 2
          %v4612 = vsel %vm4552, %v4610, %v4611
          %v4613 = vrot.slane %v4438, 2
          %v4614 = vsel %vm4552, %v4611, %v4613
          %v4615 = vrot.slane %v4423, 2
          %v4616 = vrot.slane %v4354, 2
          %v4617 = vsel %vm4552, %v4615, %v4616
          %v4618 = vrot.slane %v4439, 2
          %v4619 = vsel %vm4552, %v4616, %v4618
          %v4620 = vrot.slane %v4424, 2
          %v4621 = vrot.slane %v4357, 2
          %v4622 = vsel %vm4552, %v4620, %v4621
          %v4623 = vrot.slane %v4440, 2
          %v4624 = vsel %vm4552, %v4621, %v4623
          %v4625 = vrot.slane %v4425, 2
          %v4626 = vrot.slane %v4360, 2
          %v4627 = vsel %vm4552, %v4625, %v4626
          %v4628 = vrot.slane %v4441, 2
          %v4629 = vsel %vm4552, %v4626, %v4628
          %v4632 = vrot.slane %v4426, 1
          %v4633 = vrot.slane %v4363, 1
          %v4634 = vsel %vm4474, %v4632, %v4633
          %v4635 = vrot.slane %v4442, 1
          %v4636 = vsel %vm4474, %v4633, %v4635
          %v4637 = vrot.slane %v4426, 2
          %v4638 = vrot.slane %v4363, 2
          %v4639 = vsel %vm4552, %v4637, %v4638
          %v4640 = vrot.slane %v4442, 2
          %v4641 = vsel %vm4552, %v4638, %v4640
          %4642 = vrot.lane.b32.xlu0 %v4476, 4
          %v4643 = vpop.permute.xlu0 %4642
          %4644 = vrot.lane.b32.xlu0 %v4479, 4
          %v4645 = vpop.permute.xlu0 %4644
          %4646 = vrot.lane.b32.xlu0 %v4481, 4
          %v4647 = vpop.permute.xlu0 %4646
          %4648 = vrot.lane.b32.xlu0 %v4484, 4
          %v4649 = vpop.permute.xlu0 %4648
          %4650 = vrot.lane.b32.xlu0 %v4486, 4
          %v4651 = vpop.permute.xlu0 %4650
          %4652 = vrot.lane.b32.xlu0 %v4489, 4
          %v4653 = vpop.permute.xlu0 %4652
          %4654 = vrot.lane.b32.xlu0 %v4491, 4
          %v4655 = vpop.permute.xlu0 %4654
          %4656 = vrot.lane.b32.xlu0 %v4494, 4
          %v4657 = vpop.permute.xlu0 %4656
          %4658 = vrot.lane.b32.xlu0 %v4496, 4
          %v4659 = vpop.permute.xlu0 %4658
          %4660 = vrot.lane.b32.xlu0 %v4499, 4
          %v4661 = vpop.permute.xlu0 %4660
          %4662 = vrot.lane.b32.xlu0 %v4501, 4
          %v4663 = vpop.permute.xlu0 %4662
          %4664 = vrot.lane.b32.xlu0 %v4504, 4
          %v4665 = vpop.permute.xlu0 %4664
          %4666 = vrot.lane.b32.xlu0 %v4506, 4
          %v4667 = vpop.permute.xlu0 %4666
          %4668 = vrot.lane.b32.xlu0 %v4509, 4
          %v4669 = vpop.permute.xlu0 %4668
          %4670 = vrot.lane.b32.xlu0 %v4511, 4
          %v4671 = vpop.permute.xlu0 %4670
          %4672 = vrot.lane.b32.xlu0 %v4514, 4
          %v4673 = vpop.permute.xlu0 %4672
          %4674 = vrot.lane.b32.xlu0 %v4516, 4
          %v4675 = vpop.permute.xlu0 %4674
          %4676 = vrot.lane.b32.xlu0 %v4519, 4
          %v4677 = vpop.permute.xlu0 %4676
          %4678 = vrot.lane.b32.xlu0 %v4521, 4
          %v4679 = vpop.permute.xlu0 %4678
          %4680 = vrot.lane.b32.xlu0 %v4524, 4
          %v4681 = vpop.permute.xlu0 %4680
          %4682 = vrot.lane.b32.xlu0 %v4526, 4
          %v4683 = vpop.permute.xlu0 %4682
          %4684 = vrot.lane.b32.xlu0 %v4529, 4
          %v4685 = vpop.permute.xlu0 %4684
          %4686 = vrot.lane.b32.xlu0 %v4531, 4
          %v4687 = vpop.permute.xlu0 %4686
          %4688 = vrot.lane.b32.xlu0 %v4534, 4
          %v4689 = vpop.permute.xlu0 %4688
          %4690 = vrot.lane.b32.xlu0 %v4536, 4
          %v4691 = vpop.permute.xlu0 %4690
          %4692 = vrot.lane.b32.xlu0 %v4539, 4
          %v4693 = vpop.permute.xlu0 %4692
          %4694 = vrot.lane.b32.xlu0 %v4541, 4
          %v4695 = vpop.permute.xlu0 %4694
          %4696 = vrot.lane.b32.xlu0 %v4544, 4
          %v4697 = vpop.permute.xlu0 %4696
          %4698 = vrot.lane.b32.xlu0 %v4546, 4
          %v4699 = vpop.permute.xlu0 %4698
          %4700 = vrot.lane.b32.xlu0 %v4549, 4
          %v4701 = vpop.permute.xlu0 %4700
          %4702 = vrot.lane.b32.xlu0 %v4551, 4
          %v4703 = vpop.permute.xlu0 %4702
          %4735 = vrot.lane.b32.xlu0 %v4554, 8
          %v4736 = vpop.permute.xlu0 %4735
          %4737 = vrot.lane.b32.xlu0 %v4557, 8
          %v4738 = vpop.permute.xlu0 %4737
          %4739 = vrot.lane.b32.xlu0 %v4559, 8
          %v4740 = vpop.permute.xlu0 %4739
          %4741 = vrot.lane.b32.xlu0 %v4562, 8
          %v4742 = vpop.permute.xlu0 %4741
          %4743 = vrot.lane.b32.xlu0 %v4564, 8
          %v4744 = vpop.permute.xlu0 %4743
          %4745 = vrot.lane.b32.xlu0 %v4567, 8
          %v4746 = vpop.permute.xlu0 %4745
          %4747 = vrot.lane.b32.xlu0 %v4569, 8
          %v4748 = vpop.permute.xlu0 %4747
          %4749 = vrot.lane.b32.xlu0 %v4572, 8
          %v4750 = vpop.permute.xlu0 %4749
          %4751 = vrot.lane.b32.xlu0 %v4574, 8
          %v4752 = vpop.permute.xlu0 %4751
          %4753 = vrot.lane.b32.xlu0 %v4577, 8
          %v4754 = vpop.permute.xlu0 %4753
          %4755 = vrot.lane.b32.xlu0 %v4579, 8
          %v4756 = vpop.permute.xlu0 %4755
          %4757 = vrot.lane.b32.xlu0 %v4582, 8
          %v4758 = vpop.permute.xlu0 %4757
          %4759 = vrot.lane.b32.xlu0 %v4584, 8
          %v4760 = vpop.permute.xlu0 %4759
          %4761 = vrot.lane.b32.xlu0 %v4587, 8
          %v4762 = vpop.permute.xlu0 %4761
          %4763 = vrot.lane.b32.xlu0 %v4589, 8
          %v4764 = vpop.permute.xlu0 %4763
          %4765 = vrot.lane.b32.xlu0 %v4592, 8
          %v4766 = vpop.permute.xlu0 %4765
          %4767 = vrot.lane.b32.xlu0 %v4594, 8
          %v4768 = vpop.permute.xlu0 %4767
          %4769 = vrot.lane.b32.xlu0 %v4597, 8
          %v4770 = vpop.permute.xlu0 %4769
          %4771 = vrot.lane.b32.xlu0 %v4599, 8
          %v4772 = vpop.permute.xlu0 %4771
          %4773 = vrot.lane.b32.xlu0 %v4602, 8
          %v4774 = vpop.permute.xlu0 %4773
          %4775 = vrot.lane.b32.xlu0 %v4604, 8
          %v4776 = vpop.permute.xlu0 %4775
          %4777 = vrot.lane.b32.xlu0 %v4607, 8
          %v4778 = vpop.permute.xlu0 %4777
          %4779 = vrot.lane.b32.xlu0 %v4609, 8
          %v4780 = vpop.permute.xlu0 %4779
          %4781 = vrot.lane.b32.xlu0 %v4612, 8
          %v4782 = vpop.permute.xlu0 %4781
          %4783 = vrot.lane.b32.xlu0 %v4614, 8
          %v4784 = vpop.permute.xlu0 %4783
          %4785 = vrot.lane.b32.xlu0 %v4617, 8
          %v4786 = vpop.permute.xlu0 %4785
          %4787 = vrot.lane.b32.xlu0 %v4619, 8
          %v4788 = vpop.permute.xlu0 %4787
          %4789 = vrot.lane.b32.xlu0 %v4622, 8
          %v4790 = vpop.permute.xlu0 %4789
          %4791 = vrot.lane.b32.xlu0 %v4624, 8
          %v4792 = vpop.permute.xlu0 %4791
          %4793 = vrot.lane.b32.xlu0 %v4627, 8
          %v4794 = vpop.permute.xlu0 %4793
          %4795 = vrot.lane.b32.xlu0 %v4629, 8
          %v4796 = vpop.permute.xlu0 %4795
          %4828 = vrot.lane.b32.xlu0 %v4411, 12
          %v4829 = vpop.permute.xlu0 %4828
          %4830 = vrot.lane.b32.xlu0 %v4318, 12
          %v4831 = vpop.permute.xlu0 %4830
          %4832 = vrot.lane.b32.xlu0 %v4412, 12
          %v4833 = vpop.permute.xlu0 %4832
          %4834 = vrot.lane.b32.xlu0 %v4321, 12
          %v4835 = vpop.permute.xlu0 %4834
          %4836 = vrot.lane.b32.xlu0 %v4413, 12
          %v4837 = vpop.permute.xlu0 %4836
          %4838 = vrot.lane.b32.xlu0 %v4324, 12
          %v4839 = vpop.permute.xlu0 %4838
          %4840 = vrot.lane.b32.xlu0 %v4414, 12
          %v4841 = vpop.permute.xlu0 %4840
          %4842 = vrot.lane.b32.xlu0 %v4327, 12
          %v4843 = vpop.permute.xlu0 %4842
          %4844 = vrot.lane.b32.xlu0 %v4415, 12
          %v4845 = vpop.permute.xlu0 %4844
          %4846 = vrot.lane.b32.xlu0 %v4330, 12
          %v4847 = vpop.permute.xlu0 %4846
          %4848 = vrot.lane.b32.xlu0 %v4416, 12
          %v4849 = vpop.permute.xlu0 %4848
          %4850 = vrot.lane.b32.xlu0 %v4333, 12
          %v4851 = vpop.permute.xlu0 %4850
          %4852 = vrot.lane.b32.xlu0 %v4417, 12
          %v4853 = vpop.permute.xlu0 %4852
          %4854 = vrot.lane.b32.xlu0 %v4336, 12
          %v4855 = vpop.permute.xlu0 %4854
          %4856 = vrot.lane.b32.xlu0 %v4418, 12
          %v4857 = vpop.permute.xlu0 %4856
          %4858 = vrot.lane.b32.xlu0 %v4339, 12
          %v4859 = vpop.permute.xlu0 %4858
          %4860 = vrot.lane.b32.xlu0 %v4419, 12
          %v4861 = vpop.permute.xlu0 %4860
          %4862 = vrot.lane.b32.xlu0 %v4342, 12
          %v4863 = vpop.permute.xlu0 %4862
          %4864 = vrot.lane.b32.xlu0 %v4420, 12
          %v4865 = vpop.permute.xlu0 %4864
          %4866 = vrot.lane.b32.xlu0 %v4345, 12
          %v4867 = vpop.permute.xlu0 %4866
          %4868 = vrot.lane.b32.xlu0 %v4421, 12
          %v4869 = vpop.permute.xlu0 %4868
          %4870 = vrot.lane.b32.xlu0 %v4348, 12
          %v4871 = vpop.permute.xlu0 %4870
          %4872 = vrot.lane.b32.xlu0 %v4422, 12
          %v4873 = vpop.permute.xlu0 %4872
          %4874 = vrot.lane.b32.xlu0 %v4351, 12
          %v4875 = vpop.permute.xlu0 %4874
          %4876 = vrot.lane.b32.xlu0 %v4423, 12
          %v4877 = vpop.permute.xlu0 %4876
          %4878 = vrot.lane.b32.xlu0 %v4354, 12
          %v4879 = vpop.permute.xlu0 %4878
          %4880 = vrot.lane.b32.xlu0 %v4424, 12
          %v4881 = vpop.permute.xlu0 %4880
          %4882 = vrot.lane.b32.xlu0 %v4357, 12
          %v4883 = vpop.permute.xlu0 %4882
          %4884 = vrot.lane.b32.xlu0 %v4425, 12
          %v4885 = vpop.permute.xlu0 %4884
          %4886 = vrot.lane.b32.xlu0 %v4360, 12
          %v4887 = vpop.permute.xlu0 %4886
          %4888 = vrot.lane.b32.xlu0 %v4426, 12
          %v4889 = vpop.permute.xlu0 %4888
          %4890 = vrot.lane.b32.xlu0 %v4363, 12
          %v4891 = vpop.permute.xlu0 %4890
          %4924 = vrot.lane.b32.xlu0 %v4479, 16
          %v4925 = vpop.permute.xlu0 %4924
          %4926 = vrot.lane.b32.xlu0 %v4481, 16
          %v4927 = vpop.permute.xlu0 %4926
          %4928 = vrot.lane.b32.xlu0 %v4484, 16
          %v4929 = vpop.permute.xlu0 %4928
          %4930 = vrot.lane.b32.xlu0 %v4486, 16
          %v4931 = vpop.permute.xlu0 %4930
          %4932 = vrot.lane.b32.xlu0 %v4489, 16
          %v4933 = vpop.permute.xlu0 %4932
          %4934 = vrot.lane.b32.xlu0 %v4491, 16
          %v4935 = vpop.permute.xlu0 %4934
          %4936 = vrot.lane.b32.xlu0 %v4494, 16
          %v4937 = vpop.permute.xlu0 %4936
          %4938 = vrot.lane.b32.xlu0 %v4496, 16
          %v4939 = vpop.permute.xlu0 %4938
          %4940 = vrot.lane.b32.xlu0 %v4499, 16
          %v4941 = vpop.permute.xlu0 %4940
          %4942 = vrot.lane.b32.xlu0 %v4501, 16
          %v4943 = vpop.permute.xlu0 %4942
          %4944 = vrot.lane.b32.xlu0 %v4504, 16
          %v4945 = vpop.permute.xlu0 %4944
          %4946 = vrot.lane.b32.xlu0 %v4506, 16
          %v4947 = vpop.permute.xlu0 %4946
          %4948 = vrot.lane.b32.xlu0 %v4509, 16
          %v4949 = vpop.permute.xlu0 %4948
          %4950 = vrot.lane.b32.xlu0 %v4511, 16
          %v4951 = vpop.permute.xlu0 %4950
          %4952 = vrot.lane.b32.xlu0 %v4514, 16
          %v4953 = vpop.permute.xlu0 %4952
          %4954 = vrot.lane.b32.xlu0 %v4516, 16
          %v4955 = vpop.permute.xlu0 %4954
          %4956 = vrot.lane.b32.xlu0 %v4519, 16
          %v4957 = vpop.permute.xlu0 %4956
          %4958 = vrot.lane.b32.xlu0 %v4521, 16
          %v4959 = vpop.permute.xlu0 %4958
          %4960 = vrot.lane.b32.xlu0 %v4524, 16
          %v4961 = vpop.permute.xlu0 %4960
          %4962 = vrot.lane.b32.xlu0 %v4526, 16
          %v4963 = vpop.permute.xlu0 %4962
          %4964 = vrot.lane.b32.xlu0 %v4529, 16
          %v4965 = vpop.permute.xlu0 %4964
          %4966 = vrot.lane.b32.xlu0 %v4531, 16
          %v4967 = vpop.permute.xlu0 %4966
          %4968 = vrot.lane.b32.xlu0 %v4534, 16
          %v4969 = vpop.permute.xlu0 %4968
          %4970 = vrot.lane.b32.xlu0 %v4536, 16
          %v4971 = vpop.permute.xlu0 %4970
          %4972 = vrot.lane.b32.xlu0 %v4539, 16
          %v4973 = vpop.permute.xlu0 %4972
          %4974 = vrot.lane.b32.xlu0 %v4541, 16
          %v4975 = vpop.permute.xlu0 %4974
          %4976 = vrot.lane.b32.xlu0 %v4544, 16
          %v4977 = vpop.permute.xlu0 %4976
          %4978 = vrot.lane.b32.xlu0 %v4546, 16
          %v4979 = vpop.permute.xlu0 %4978
          %4980 = vrot.lane.b32.xlu0 %v4549, 16
          %v4981 = vpop.permute.xlu0 %4980
          %4982 = vrot.lane.b32.xlu0 %v4551, 16
          %v4983 = vpop.permute.xlu0 %4982
          %4984 = vrot.lane.b32.xlu0 %v4634, 16
          %v4985 = vpop.permute.xlu0 %4984
          %4986 = vrot.lane.b32.xlu0 %v4636, 16
          %v4987 = vpop.permute.xlu0 %4986
          %5020 = vrot.lane.b32.xlu0 %v4557, 20
          %v5021 = vpop.permute.xlu0 %5020
          %5022 = vrot.lane.b32.xlu0 %v4559, 20
          %v5023 = vpop.permute.xlu0 %5022
          %5024 = vrot.lane.b32.xlu0 %v4562, 20
          %v5025 = vpop.permute.xlu0 %5024
          %5026 = vrot.lane.b32.xlu0 %v4564, 20
          %v5027 = vpop.permute.xlu0 %5026
          %5028 = vrot.lane.b32.xlu0 %v4567, 20
          %v5029 = vpop.permute.xlu0 %5028
          %5030 = vrot.lane.b32.xlu0 %v4569, 20
          %v5031 = vpop.permute.xlu0 %5030
          %5032 = vrot.lane.b32.xlu0 %v4572, 20
          %v5033 = vpop.permute.xlu0 %5032
          %5034 = vrot.lane.b32.xlu0 %v4574, 20
          %v5035 = vpop.permute.xlu0 %5034
          %5036 = vrot.lane.b32.xlu0 %v4577, 20
          %v5037 = vpop.permute.xlu0 %5036
          %5038 = vrot.lane.b32.xlu0 %v4579, 20
          %v5039 = vpop.permute.xlu0 %5038
          %5040 = vrot.lane.b32.xlu0 %v4582, 20
          %v5041 = vpop.permute.xlu0 %5040
          %5042 = vrot.lane.b32.xlu0 %v4584, 20
          %v5043 = vpop.permute.xlu0 %5042
          %5044 = vrot.lane.b32.xlu0 %v4587, 20
          %v5045 = vpop.permute.xlu0 %5044
          %5046 = vrot.lane.b32.xlu0 %v4589, 20
          %v5047 = vpop.permute.xlu0 %5046
          %5048 = vrot.lane.b32.xlu0 %v4592, 20
          %v5049 = vpop.permute.xlu0 %5048
          %5050 = vrot.lane.b32.xlu0 %v4594, 20
          %v5051 = vpop.permute.xlu0 %5050
          %5052 = vrot.lane.b32.xlu0 %v4597, 20
          %v5053 = vpop.permute.xlu0 %5052
          %5054 = vrot.lane.b32.xlu0 %v4599, 20
          %v5055 = vpop.permute.xlu0 %5054
          %5056 = vrot.lane.b32.xlu0 %v4602, 20
          %v5057 = vpop.permute.xlu0 %5056
          %5058 = vrot.lane.b32.xlu0 %v4604, 20
          %v5059 = vpop.permute.xlu0 %5058
          %5060 = vrot.lane.b32.xlu0 %v4607, 20
          %v5061 = vpop.permute.xlu0 %5060
          %5062 = vrot.lane.b32.xlu0 %v4609, 20
          %v5063 = vpop.permute.xlu0 %5062
          %5064 = vrot.lane.b32.xlu0 %v4612, 20
          %v5065 = vpop.permute.xlu0 %5064
          %5066 = vrot.lane.b32.xlu0 %v4614, 20
          %v5067 = vpop.permute.xlu0 %5066
          %5068 = vrot.lane.b32.xlu0 %v4617, 20
          %v5069 = vpop.permute.xlu0 %5068
          %5070 = vrot.lane.b32.xlu0 %v4619, 20
          %v5071 = vpop.permute.xlu0 %5070
          %5072 = vrot.lane.b32.xlu0 %v4622, 20
          %v5073 = vpop.permute.xlu0 %5072
          %5074 = vrot.lane.b32.xlu0 %v4624, 20
          %v5075 = vpop.permute.xlu0 %5074
          %5076 = vrot.lane.b32.xlu0 %v4627, 20
          %v5077 = vpop.permute.xlu0 %5076
          %5078 = vrot.lane.b32.xlu0 %v4629, 20
          %v5079 = vpop.permute.xlu0 %5078
          %5080 = vrot.lane.b32.xlu0 %v4639, 20
          %v5081 = vpop.permute.xlu0 %5080
          %5082 = vrot.lane.b32.xlu0 %v4641, 20
          %v5083 = vpop.permute.xlu0 %5082
          %5116 = vrot.lane.b32.xlu0 %v4412, 24
          %v5117 = vpop.permute.xlu0 %5116
          %5118 = vrot.lane.b32.xlu0 %v4321, 24
          %v5119 = vpop.permute.xlu0 %5118
          %5120 = vrot.lane.b32.xlu0 %v4413, 24
          %v5121 = vpop.permute.xlu0 %5120
          %5122 = vrot.lane.b32.xlu0 %v4324, 24
          %v5123 = vpop.permute.xlu0 %5122
          %5124 = vrot.lane.b32.xlu0 %v4414, 24
          %v5125 = vpop.permute.xlu0 %5124
          %5126 = vrot.lane.b32.xlu0 %v4327, 24
          %v5127 = vpop.permute.xlu0 %5126
          %5128 = vrot.lane.b32.xlu0 %v4415, 24
          %v5129 = vpop.permute.xlu0 %5128
          %5130 = vrot.lane.b32.xlu0 %v4330, 24
          %v5131 = vpop.permute.xlu0 %5130
          %5132 = vrot.lane.b32.xlu0 %v4416, 24
          %v5133 = vpop.permute.xlu0 %5132
          %5134 = vrot.lane.b32.xlu0 %v4333, 24
          %v5135 = vpop.permute.xlu0 %5134
          %5136 = vrot.lane.b32.xlu0 %v4417, 24
          %v5137 = vpop.permute.xlu0 %5136
          %5138 = vrot.lane.b32.xlu0 %v4336, 24
          %v5139 = vpop.permute.xlu0 %5138
          %5140 = vrot.lane.b32.xlu0 %v4418, 24
          %v5141 = vpop.permute.xlu0 %5140
          %5142 = vrot.lane.b32.xlu0 %v4339, 24
          %v5143 = vpop.permute.xlu0 %5142
          %5144 = vrot.lane.b32.xlu0 %v4419, 24
          %v5145 = vpop.permute.xlu0 %5144
          %5146 = vrot.lane.b32.xlu0 %v4342, 24
          %v5147 = vpop.permute.xlu0 %5146
          %5148 = vrot.lane.b32.xlu0 %v4420, 24
          %v5149 = vpop.permute.xlu0 %5148
          %5150 = vrot.lane.b32.xlu0 %v4345, 24
          %v5151 = vpop.permute.xlu0 %5150
          %5152 = vrot.lane.b32.xlu0 %v4421, 24
          %v5153 = vpop.permute.xlu0 %5152
          %5154 = vrot.lane.b32.xlu0 %v4348, 24
          %v5155 = vpop.permute.xlu0 %5154
          %5156 = vrot.lane.b32.xlu0 %v4422, 24
          %v5157 = vpop.permute.xlu0 %5156
          %5158 = vrot.lane.b32.xlu0 %v4351, 24
          %v5159 = vpop.permute.xlu0 %5158
          %5160 = vrot.lane.b32.xlu0 %v4423, 24
          %v5161 = vpop.permute.xlu0 %5160
          %5162 = vrot.lane.b32.xlu0 %v4354, 24
          %v5163 = vpop.permute.xlu0 %5162
          %5164 = vrot.lane.b32.xlu0 %v4424, 24
          %v5165 = vpop.permute.xlu0 %5164
          %5166 = vrot.lane.b32.xlu0 %v4357, 24
          %v5167 = vpop.permute.xlu0 %5166
          %5168 = vrot.lane.b32.xlu0 %v4425, 24
          %v5169 = vpop.permute.xlu0 %5168
          %5170 = vrot.lane.b32.xlu0 %v4360, 24
          %v5171 = vpop.permute.xlu0 %5170
          %5172 = vrot.lane.b32.xlu0 %v4426, 24
          %v5173 = vpop.permute.xlu0 %5172
          %5174 = vrot.lane.b32.xlu0 %v4363, 24
          %v5175 = vpop.permute.xlu0 %5174
          %5176 = vrot.lane.b32.xlu0 0.0, 24
          %v5177 = vpop.permute.xlu0 %5176
          %5209 = vrot.lane.b32.xlu0 %v4484, 28
          %v5210 = vpop.permute.xlu0 %5209
          %5211 = vrot.lane.b32.xlu0 %v4486, 28
          %v5212 = vpop.permute.xlu0 %5211
          %5213 = vrot.lane.b32.xlu0 %v4489, 28
          %v5214 = vpop.permute.xlu0 %5213
          %5215 = vrot.lane.b32.xlu0 %v4491, 28
          %v5216 = vpop.permute.xlu0 %5215
          %5217 = vrot.lane.b32.xlu0 %v4494, 28
          %v5218 = vpop.permute.xlu0 %5217
          %5219 = vrot.lane.b32.xlu0 %v4496, 28
          %v5220 = vpop.permute.xlu0 %5219
          %5221 = vrot.lane.b32.xlu0 %v4499, 28
          %v5222 = vpop.permute.xlu0 %5221
          %5223 = vrot.lane.b32.xlu0 %v4501, 28
          %v5224 = vpop.permute.xlu0 %5223
          %5225 = vrot.lane.b32.xlu0 %v4504, 28
          %v5226 = vpop.permute.xlu0 %5225
          %5227 = vrot.lane.b32.xlu0 %v4506, 28
          %v5228 = vpop.permute.xlu0 %5227
          %5229 = vrot.lane.b32.xlu0 %v4509, 28
          %v5230 = vpop.permute.xlu0 %5229
          %5231 = vrot.lane.b32.xlu0 %v4511, 28
          %v5232 = vpop.permute.xlu0 %5231
          %5233 = vrot.lane.b32.xlu0 %v4514, 28
          %v5234 = vpop.permute.xlu0 %5233
          %5235 = vrot.lane.b32.xlu0 %v4516, 28
          %v5236 = vpop.permute.xlu0 %5235
          %5237 = vrot.lane.b32.xlu0 %v4519, 28
          %v5238 = vpop.permute.xlu0 %5237
          %5239 = vrot.lane.b32.xlu0 %v4521, 28
          %v5240 = vpop.permute.xlu0 %5239
          %5241 = vrot.lane.b32.xlu0 %v4524, 28
          %v5242 = vpop.permute.xlu0 %5241
          %5243 = vrot.lane.b32.xlu0 %v4526, 28
          %v5244 = vpop.permute.xlu0 %5243
          %5245 = vrot.lane.b32.xlu0 %v4529, 28
          %v5246 = vpop.permute.xlu0 %5245
          %5247 = vrot.lane.b32.xlu0 %v4531, 28
          %v5248 = vpop.permute.xlu0 %5247
          %5249 = vrot.lane.b32.xlu0 %v4534, 28
          %v5250 = vpop.permute.xlu0 %5249
          %5251 = vrot.lane.b32.xlu0 %v4536, 28
          %v5252 = vpop.permute.xlu0 %5251
          %5253 = vrot.lane.b32.xlu0 %v4539, 28
          %v5254 = vpop.permute.xlu0 %5253
          %5255 = vrot.lane.b32.xlu0 %v4541, 28
          %v5256 = vpop.permute.xlu0 %5255
          %5257 = vrot.lane.b32.xlu0 %v4544, 28
          %v5258 = vpop.permute.xlu0 %5257
          %5259 = vrot.lane.b32.xlu0 %v4546, 28
          %v5260 = vpop.permute.xlu0 %5259
          %5261 = vrot.lane.b32.xlu0 %v4549, 28
          %v5262 = vpop.permute.xlu0 %5261
          %5263 = vrot.lane.b32.xlu0 %v4551, 28
          %v5264 = vpop.permute.xlu0 %5263
          %5265 = vrot.lane.b32.xlu0 %v4634, 28
          %v5266 = vpop.permute.xlu0 %5265
          %5267 = vrot.lane.b32.xlu0 %v4636, 28
          %v5268 = vpop.permute.xlu0 %5267
          %5269 = vrot.lane.b32.xlu0 %v4476, 28
          %v5270 = vpop.permute.xlu0 %5269
          %5302 = vrot.lane.b32.xlu0 %v4562, 32
          %v5303 = vpop.permute.xlu0 %5302
          %5304 = vrot.lane.b32.xlu0 %v4564, 32
          %v5305 = vpop.permute.xlu0 %5304
          %5306 = vrot.lane.b32.xlu0 %v4567, 32
          %v5307 = vpop.permute.xlu0 %5306
          %5308 = vrot.lane.b32.xlu0 %v4569, 32
          %v5309 = vpop.permute.xlu0 %5308
          %5310 = vrot.lane.b32.xlu0 %v4572, 32
          %v5311 = vpop.permute.xlu0 %5310
          %5312 = vrot.lane.b32.xlu0 %v4574, 32
          %v5313 = vpop.permute.xlu0 %5312
          %5314 = vrot.lane.b32.xlu0 %v4577, 32
          %v5315 = vpop.permute.xlu0 %5314
          %5316 = vrot.lane.b32.xlu0 %v4579, 32
          %v5317 = vpop.permute.xlu0 %5316
          %5318 = vrot.lane.b32.xlu0 %v4582, 32
          %v5319 = vpop.permute.xlu0 %5318
          %5320 = vrot.lane.b32.xlu0 %v4584, 32
          %v5321 = vpop.permute.xlu0 %5320
          %5322 = vrot.lane.b32.xlu0 %v4587, 32
          %v5323 = vpop.permute.xlu0 %5322
          %5324 = vrot.lane.b32.xlu0 %v4589, 32
          %v5325 = vpop.permute.xlu0 %5324
          %5326 = vrot.lane.b32.xlu0 %v4592, 32
          %v5327 = vpop.permute.xlu0 %5326
          %5328 = vrot.lane.b32.xlu0 %v4594, 32
          %v5329 = vpop.permute.xlu0 %5328
          %5330 = vrot.lane.b32.xlu0 %v4597, 32
          %v5331 = vpop.permute.xlu0 %5330
          %5332 = vrot.lane.b32.xlu0 %v4599, 32
          %v5333 = vpop.permute.xlu0 %5332
          %5334 = vrot.lane.b32.xlu0 %v4602, 32
          %v5335 = vpop.permute.xlu0 %5334
          %5336 = vrot.lane.b32.xlu0 %v4604, 32
          %v5337 = vpop.permute.xlu0 %5336
          %5338 = vrot.lane.b32.xlu0 %v4607, 32
          %v5339 = vpop.permute.xlu0 %5338
          %5340 = vrot.lane.b32.xlu0 %v4609, 32
          %v5341 = vpop.permute.xlu0 %5340
          %5342 = vrot.lane.b32.xlu0 %v4612, 32
          %v5343 = vpop.permute.xlu0 %5342
          %5344 = vrot.lane.b32.xlu0 %v4614, 32
          %v5345 = vpop.permute.xlu0 %5344
          %5346 = vrot.lane.b32.xlu0 %v4617, 32
          %v5347 = vpop.permute.xlu0 %5346
          %5348 = vrot.lane.b32.xlu0 %v4619, 32
          %v5349 = vpop.permute.xlu0 %5348
          %5350 = vrot.lane.b32.xlu0 %v4622, 32
          %v5351 = vpop.permute.xlu0 %5350
          %5352 = vrot.lane.b32.xlu0 %v4624, 32
          %v5353 = vpop.permute.xlu0 %5352
          %5354 = vrot.lane.b32.xlu0 %v4627, 32
          %v5355 = vpop.permute.xlu0 %5354
          %5356 = vrot.lane.b32.xlu0 %v4629, 32
          %v5357 = vpop.permute.xlu0 %5356
          %5358 = vrot.lane.b32.xlu0 %v4639, 32
          %v5359 = vpop.permute.xlu0 %5358
          %5360 = vrot.lane.b32.xlu0 %v4641, 32
          %v5361 = vpop.permute.xlu0 %5360
          %5362 = vrot.lane.b32.xlu0 %v4554, 32
          %v5363 = vpop.permute.xlu0 %5362
          %vm5395 = vcmask 31744
          %v5396 = vsel %vm5395, 0.0, %v4643
          %v5397 = vsel %vm5395, %v4411, %v4645
          %v5398 = vsel %vm5395, %v4318, %v4647
          %v5399 = vsel %vm5395, %v4412, %v4649
          %v5400 = vsel %vm5395, %v4321, %v4651
          %v5401 = vsel %vm5395, %v4413, %v4653
          %v5402 = vsel %vm5395, %v4324, %v4655
          %v5403 = vsel %vm5395, %v4414, %v4657
          %v5404 = vsel %vm5395, %v4327, %v4659
          %v5405 = vsel %vm5395, %v4415, %v4661
          %v5406 = vsel %vm5395, %v4330, %v4663
          %v5407 = vsel %vm5395, %v4416, %v4665
          %v5408 = vsel %vm5395, %v4333, %v4667
          %v5409 = vsel %vm5395, %v4417, %v4669
          %v5410 = vsel %vm5395, %v4336, %v4671
          %v5411 = vsel %vm5395, %v4418, %v4673
          %v5412 = vsel %vm5395, %v4339, %v4675
          %v5413 = vsel %vm5395, %v4419, %v4677
          %v5414 = vsel %vm5395, %v4342, %v4679
          %v5415 = vsel %vm5395, %v4420, %v4681
          %v5416 = vsel %vm5395, %v4345, %v4683
          %v5417 = vsel %vm5395, %v4421, %v4685
          %v5418 = vsel %vm5395, %v4348, %v4687
          %v5419 = vsel %vm5395, %v4422, %v4689
          %v5420 = vsel %vm5395, %v4351, %v4691
          %v5421 = vsel %vm5395, %v4423, %v4693
          %v5422 = vsel %vm5395, %v4354, %v4695
          %v5423 = vsel %vm5395, %v4424, %v4697
          %v5424 = vsel %vm5395, %v4357, %v4699
          %v5425 = vsel %vm5395, %v4425, %v4701
          %v5426 = vsel %vm5395, %v4360, %v4703
          %vm5427 = vcmask 64512
          %v5428 = vsel %vm5427, %v5396, %v4736
          %v5429 = vsel %vm5427, %v5397, %v4738
          %v5430 = vsel %vm5427, %v5398, %v4740
          %v5431 = vsel %vm5427, %v5399, %v4742
          %v5432 = vsel %vm5427, %v5400, %v4744
          %v5433 = vsel %vm5427, %v5401, %v4746
          %v5434 = vsel %vm5427, %v5402, %v4748
          %v5435 = vsel %vm5427, %v5403, %v4750
          %v5436 = vsel %vm5427, %v5404, %v4752
          %v5437 = vsel %vm5427, %v5405, %v4754
          %v5438 = vsel %vm5427, %v5406, %v4756
          %v5439 = vsel %vm5427, %v5407, %v4758
          %v5440 = vsel %vm5427, %v5408, %v4760
          %v5441 = vsel %vm5427, %v5409, %v4762
          %v5442 = vsel %vm5427, %v5410, %v4764
          %v5443 = vsel %vm5427, %v5411, %v4766
          %v5444 = vsel %vm5427, %v5412, %v4768
          %v5445 = vsel %vm5427, %v5413, %v4770
          %v5446 = vsel %vm5427, %v5414, %v4772
          %v5447 = vsel %vm5427, %v5415, %v4774
          %v5448 = vsel %vm5427, %v5416, %v4776
          %v5449 = vsel %vm5427, %v5417, %v4778
          %v5450 = vsel %vm5427, %v5418, %v4780
          %v5451 = vsel %vm5427, %v5419, %v4782
          %v5452 = vsel %vm5427, %v5420, %v4784
          %v5453 = vsel %vm5427, %v5421, %v4786
          %v5454 = vsel %vm5427, %v5422, %v4788
          %v5455 = vsel %vm5427, %v5423, %v4790
          %v5456 = vsel %vm5427, %v5424, %v4792
          %v5457 = vsel %vm5427, %v5425, %v4794
          %v5458 = vsel %vm5427, %v5426, %v4796
          %vm5459 = vcmask 97280
          %v5460 = vsel %vm5459, %v5428, %v4829
          %v5461 = vsel %vm5459, %v5428, %v4831
          %v5462 = vsel %vm5459, %v5429, %v4833
          %v5463 = vsel %vm5459, %v5430, %v4835
          %v5464 = vsel %vm5459, %v5431, %v4837
          %v5465 = vsel %vm5459, %v5432, %v4839
          %v5466 = vsel %vm5459, %v5433, %v4841
          %v5467 = vsel %vm5459, %v5434, %v4843
          %v5468 = vsel %vm5459, %v5435, %v4845
          %v5469 = vsel %vm5459, %v5436, %v4847
          %v5470 = vsel %vm5459, %v5437, %v4849
          %v5471 = vsel %vm5459, %v5438, %v4851
          %v5472 = vsel %vm5459, %v5439, %v4853
          %v5473 = vsel %vm5459, %v5440, %v4855
          %v5474 = vsel %vm5459, %v5441, %v4857
          %v5475 = vsel %vm5459, %v5442, %v4859
          %v5476 = vsel %vm5459, %v5443, %v4861
          %v5477 = vsel %vm5459, %v5444, %v4863
          %v5478 = vsel %vm5459, %v5445, %v4865
          %v5479 = vsel %vm5459, %v5446, %v4867
          %v5480 = vsel %vm5459, %v5447, %v4869
          %v5481 = vsel %vm5459, %v5448, %v4871
          %v5482 = vsel %vm5459, %v5449, %v4873
          %v5483 = vsel %vm5459, %v5450, %v4875
          %v5484 = vsel %vm5459, %v5451, %v4877
          %v5485 = vsel %vm5459, %v5452, %v4879
          %v5486 = vsel %vm5459, %v5453, %v4881
          %v5487 = vsel %vm5459, %v5454, %v4883
          %v5488 = vsel %vm5459, %v5455, %v4885
          %v5489 = vsel %vm5459, %v5456, %v4887
          %v5490 = vsel %vm5459, %v5457, %v4889
          %v5491 = vsel %vm5459, %v5458, %v4891
          %vm5492 = vcmask 130048
          %v5493 = vsel %vm5492, %v5460, %v4925
          %v5494 = vsel %vm5492, %v5461, %v4927
          %v5495 = vsel %vm5492, %v5462, %v4929
          %v5496 = vsel %vm5492, %v5463, %v4931
          %v5497 = vsel %vm5492, %v5464, %v4933
          %v5498 = vsel %vm5492, %v5465, %v4935
          %v5499 = vsel %vm5492, %v5466, %v4937
          %v5500 = vsel %vm5492, %v5467, %v4939
          %v5501 = vsel %vm5492, %v5468, %v4941
          %v5502 = vsel %vm5492, %v5469, %v4943
          %v5503 = vsel %vm5492, %v5470, %v4945
          %v5504 = vsel %vm5492, %v5471, %v4947
          %v5505 = vsel %vm5492, %v5472, %v4949
          %v5506 = vsel %vm5492, %v5473, %v4951
          %v5507 = vsel %vm5492, %v5474, %v4953
          %v5508 = vsel %vm5492, %v5475, %v4955
          %v5509 = vsel %vm5492, %v5476, %v4957
          %v5510 = vsel %vm5492, %v5477, %v4959
          %v5511 = vsel %vm5492, %v5478, %v4961
          %v5512 = vsel %vm5492, %v5479, %v4963
          %v5513 = vsel %vm5492, %v5480, %v4965
          %v5514 = vsel %vm5492, %v5481, %v4967
          %v5515 = vsel %vm5492, %v5482, %v4969
          %v5516 = vsel %vm5492, %v5483, %v4971
          %v5517 = vsel %vm5492, %v5484, %v4973
          %v5518 = vsel %vm5492, %v5485, %v4975
          %v5519 = vsel %vm5492, %v5486, %v4977
          %v5520 = vsel %vm5492, %v5487, %v4979
          %v5521 = vsel %vm5492, %v5488, %v4981
          %v5522 = vsel %vm5492, %v5489, %v4983
          %v5523 = vsel %vm5492, %v5490, %v4985
          %v5524 = vsel %vm5492, %v5491, %v4987
          %vm5525 = vcmask 162816
          %v5526 = vsel %vm5525, %v5493, %v5021
          %v5527 = vsel %vm5525, %v5494, %v5023
          %v5528 = vsel %vm5525, %v5495, %v5025
          %v5529 = vsel %vm5525, %v5496, %v5027
          %v5530 = vsel %vm5525, %v5497, %v5029
          %v5531 = vsel %vm5525, %v5498, %v5031
          %v5532 = vsel %vm5525, %v5499, %v5033
          %v5533 = vsel %vm5525, %v5500, %v5035
          %v5534 = vsel %vm5525, %v5501, %v5037
          %v5535 = vsel %vm5525, %v5502, %v5039
          %v5536 = vsel %vm5525, %v5503, %v5041
          %v5537 = vsel %vm5525, %v5504, %v5043
          %v5538 = vsel %vm5525, %v5505, %v5045
          %v5539 = vsel %vm5525, %v5506, %v5047
          %v5540 = vsel %vm5525, %v5507, %v5049
          %v5541 = vsel %vm5525, %v5508, %v5051
          %v5542 = vsel %vm5525, %v5509, %v5053
          %v5543 = vsel %vm5525, %v5510, %v5055
          %v5544 = vsel %vm5525, %v5511, %v5057
          %v5545 = vsel %vm5525, %v5512, %v5059
          %v5546 = vsel %vm5525, %v5513, %v5061
          %v5547 = vsel %vm5525, %v5514, %v5063
          %v5548 = vsel %vm5525, %v5515, %v5065
          %v5549 = vsel %vm5525, %v5516, %v5067
          %v5550 = vsel %vm5525, %v5517, %v5069
          %v5551 = vsel %vm5525, %v5518, %v5071
          %v5552 = vsel %vm5525, %v5519, %v5073
          %v5553 = vsel %vm5525, %v5520, %v5075
          %v5554 = vsel %vm5525, %v5521, %v5077
          %v5555 = vsel %vm5525, %v5522, %v5079
          %v5556 = vsel %vm5525, %v5523, %v5081
          %v5557 = vsel %vm5525, %v5524, %v5083
          %vm5558 = vcmask 195584
          %v5559 = vsel %vm5558, %v5526, %v5117
          %v5560 = vsel %vm5558, %v5527, %v5119
          %v5561 = vsel %vm5558, %v5528, %v5121
          %v5562 = vsel %vm5558, %v5529, %v5123
          %v5563 = vsel %vm5558, %v5530, %v5125
          %v5564 = vsel %vm5558, %v5531, %v5127
          %v5565 = vsel %vm5558, %v5532, %v5129
          %v5566 = vsel %vm5558, %v5533, %v5131
          %v5567 = vsel %vm5558, %v5534, %v5133
          %v5568 = vsel %vm5558, %v5535, %v5135
          %v5569 = vsel %vm5558, %v5536, %v5137
          %v5570 = vsel %vm5558, %v5537, %v5139
          %v5571 = vsel %vm5558, %v5538, %v5141
          %v5572 = vsel %vm5558, %v5539, %v5143
          %v5573 = vsel %vm5558, %v5540, %v5145
          %v5574 = vsel %vm5558, %v5541, %v5147
          %v5575 = vsel %vm5558, %v5542, %v5149
          %v5576 = vsel %vm5558, %v5543, %v5151
          %v5577 = vsel %vm5558, %v5544, %v5153
          %v5578 = vsel %vm5558, %v5545, %v5155
          %v5579 = vsel %vm5558, %v5546, %v5157
          %v5580 = vsel %vm5558, %v5547, %v5159
          %v5581 = vsel %vm5558, %v5548, %v5161
          %v5582 = vsel %vm5558, %v5549, %v5163
          %v5583 = vsel %vm5558, %v5550, %v5165
          %v5584 = vsel %vm5558, %v5551, %v5167
          %v5585 = vsel %vm5558, %v5552, %v5169
          %v5586 = vsel %vm5558, %v5553, %v5171
          %v5587 = vsel %vm5558, %v5554, %v5173
          %v5588 = vsel %vm5558, %v5555, %v5175
          %v5589 = vsel %vm5558, %v5556, %v5177
          %v5590 = vsel %vm5558, %v5557, %v5177
          %vm5591 = vcmask 228352
          %v5592 = vsel %vm5591, %v5559, %v5210
          %v5593 = vsel %vm5591, %v5560, %v5212
          %v5594 = vsel %vm5591, %v5561, %v5214
          %v5595 = vsel %vm5591, %v5562, %v5216
          %v5596 = vsel %vm5591, %v5563, %v5218
          %v5597 = vsel %vm5591, %v5564, %v5220
          %v5598 = vsel %vm5591, %v5565, %v5222
          %v5599 = vsel %vm5591, %v5566, %v5224
          %v5600 = vsel %vm5591, %v5567, %v5226
          %v5601 = vsel %vm5591, %v5568, %v5228
          %v5602 = vsel %vm5591, %v5569, %v5230
          %v5603 = vsel %vm5591, %v5570, %v5232
          %v5604 = vsel %vm5591, %v5571, %v5234
          %v5605 = vsel %vm5591, %v5572, %v5236
          %v5606 = vsel %vm5591, %v5573, %v5238
          %v5607 = vsel %vm5591, %v5574, %v5240
          %v5608 = vsel %vm5591, %v5575, %v5242
          %v5609 = vsel %vm5591, %v5576, %v5244
          %v5610 = vsel %vm5591, %v5577, %v5246
          %v5611 = vsel %vm5591, %v5578, %v5248
          %v5612 = vsel %vm5591, %v5579, %v5250
          %v5613 = vsel %vm5591, %v5580, %v5252
          %v5614 = vsel %vm5591, %v5581, %v5254
          %v5615 = vsel %vm5591, %v5582, %v5256
          %v5616 = vsel %vm5591, %v5583, %v5258
          %v5617 = vsel %vm5591, %v5584, %v5260
          %v5618 = vsel %vm5591, %v5585, %v5262
          %v5619 = vsel %vm5591, %v5586, %v5264
          %v5620 = vsel %vm5591, %v5587, %v5266
          %v5621 = vsel %vm5591, %v5588, %v5268
          %v5622 = vsel %vm5591, %v5589, %v5270
          %v5623 = vsel %vm5591, %v5590, %v5270
          %vm5624 = vcmask 261120
          %v5625 = vsel %vm5624, %v5592, %v5303
          %v5626 = vsel %vm5624, %v5593, %v5305
          %v5627 = vsel %vm5624, %v5594, %v5307
          %v5628 = vsel %vm5624, %v5595, %v5309
          %v5629 = vsel %vm5624, %v5596, %v5311
          %v5630 = vsel %vm5624, %v5597, %v5313
          %v5631 = vsel %vm5624, %v5598, %v5315
          %v5632 = vsel %vm5624, %v5599, %v5317
          %v5633 = vsel %vm5624, %v5600, %v5319
          %v5634 = vsel %vm5624, %v5601, %v5321
          %v5635 = vsel %vm5624, %v5602, %v5323
          %v5636 = vsel %vm5624, %v5603, %v5325
          %v5637 = vsel %vm5624, %v5604, %v5327
          %v5638 = vsel %vm5624, %v5605, %v5329
          %v5639 = vsel %vm5624, %v5606, %v5331
          %v5640 = vsel %vm5624, %v5607, %v5333
          %v5641 = vsel %vm5624, %v5608, %v5335
          %v5642 = vsel %vm5624, %v5609, %v5337
          %v5643 = vsel %vm5624, %v5610, %v5339
          %v5644 = vsel %vm5624, %v5611, %v5341
          %v5645 = vsel %vm5624, %v5612, %v5343
          %v5646 = vsel %vm5624, %v5613, %v5345
          %v5647 = vsel %vm5624, %v5614, %v5347
          %v5648 = vsel %vm5624, %v5615, %v5349
          %v5649 = vsel %vm5624, %v5616, %v5351
          %v5650 = vsel %vm5624, %v5617, %v5353
          %v5651 = vsel %vm5624, %v5618, %v5355
          %v5652 = vsel %vm5624, %v5619, %v5357
          %v5653 = vsel %vm5624, %v5620, %v5359
          %v5654 = vsel %vm5624, %v5621, %v5361
          %v5655 = vsel %vm5624, %v5622, %v5363
          %v5656 = vsel %vm5624, %v5623, %v5363
          %v5657 = vpack.c.bf16 %v5625, %v5625
          %v5658 = vpack.c.bf16 %v5626, %v5626
          %v5659 = vpack.c.bf16 %v5627, %v5627
          %v5660 = vpack.c.bf16 %v5628, %v5628
          %v5661 = vpack.c.bf16 %v5629, %v5629
          %v5662 = vpack.c.bf16 %v5630, %v5630
          %v5663 = vpack.c.bf16 %v5631, %v5631
          %v5664 = vpack.c.bf16 %v5632, %v5632
          %v5665 = vpack.c.bf16 %v5633, %v5633
          %v5666 = vpack.c.bf16 %v5634, %v5634
          %v5667 = vpack.c.bf16 %v5635, %v5635
          %v5668 = vpack.c.bf16 %v5636, %v5636
          %v5669 = vpack.c.bf16 %v5637, %v5637
          %v5670 = vpack.c.bf16 %v5638, %v5638
          %v5671 = vpack.c.bf16 %v5639, %v5639
          %v5672 = vpack.c.bf16 %v5640, %v5640
          %v5673 = vpack.c.bf16 %v5641, %v5641
          %v5674 = vpack.c.bf16 %v5642, %v5642
          %v5675 = vpack.c.bf16 %v5643, %v5643
          %v5676 = vpack.c.bf16 %v5644, %v5644
          %v5677 = vpack.c.bf16 %v5645, %v5645
          %v5678 = vpack.c.bf16 %v5646, %v5646
          %v5679 = vpack.c.bf16 %v5647, %v5647
          %v5680 = vpack.c.bf16 %v5648, %v5648
          %v5681 = vpack.c.bf16 %v5649, %v5649
          %v5682 = vpack.c.bf16 %v5650, %v5650
          %v5683 = vpack.c.bf16 %v5651, %v5651
          %v5684 = vpack.c.bf16 %v5652, %v5652
          %v5685 = vpack.c.bf16 %v5653, %v5653
          %v5686 = vpack.c.bf16 %v5654, %v5654
          %v5687 = vpack.c.bf16 %v5655, %v5655
          %v5688 = vpack.c.bf16 %v5656, %v5656
          %v5689 = vunpack.c.l.bf16 %v5657
          %v5690 = vunpack.c.l.bf16 %v5658
          %v5691 = vunpack.c.l.bf16 %v5659
          %v5692 = vunpack.c.l.bf16 %v5660
          %v5693 = vunpack.c.l.bf16 %v5661
          %v5694 = vunpack.c.l.bf16 %v5662
          %v5695 = vunpack.c.l.bf16 %v5663
          %v5696 = vunpack.c.l.bf16 %v5664
          %v5697 = vunpack.c.l.bf16 %v5665
          %v5698 = vunpack.c.l.bf16 %v5666
          %v5699 = vunpack.c.l.bf16 %v5667
          %v5700 = vunpack.c.l.bf16 %v5668
          %v5701 = vunpack.c.l.bf16 %v5669
          %v5702 = vunpack.c.l.bf16 %v5670
          %v5703 = vunpack.c.l.bf16 %v5671
          %v5704 = vunpack.c.l.bf16 %v5672
          %v5705 = vunpack.c.l.bf16 %v5673
          %v5706 = vunpack.c.l.bf16 %v5674
          %v5707 = vunpack.c.l.bf16 %v5675
          %v5708 = vunpack.c.l.bf16 %v5676
          %v5709 = vunpack.c.l.bf16 %v5677
          %v5710 = vunpack.c.l.bf16 %v5678
          %v5711 = vunpack.c.l.bf16 %v5679
          %v5712 = vunpack.c.l.bf16 %v5680
          %v5713 = vunpack.c.l.bf16 %v5681
          %v5714 = vunpack.c.l.bf16 %v5682
          %v5715 = vunpack.c.l.bf16 %v5683
          %v5716 = vunpack.c.l.bf16 %v5684
          %v5717 = vunpack.c.l.bf16 %v5685
          %v5718 = vunpack.c.l.bf16 %v5686
          %v5719 = vunpack.c.l.bf16 %v5687
          %v5720 = vunpack.c.l.bf16 %v5688
          %v5721 = vsub.f32 %v5625, %v5689
          %v5722 = vsub.f32 %v5626, %v5690
          %v5723 = vsub.f32 %v5627, %v5691
          %v5724 = vsub.f32 %v5628, %v5692
          %v5725 = vsub.f32 %v5629, %v5693
          %v5726 = vsub.f32 %v5630, %v5694
          %v5727 = vsub.f32 %v5631, %v5695
          %v5728 = vsub.f32 %v5632, %v5696
          %v5729 = vsub.f32 %v5633, %v5697
          %v5730 = vsub.f32 %v5634, %v5698
          %v5731 = vsub.f32 %v5635, %v5699
          %v5732 = vsub.f32 %v5636, %v5700
          %v5733 = vsub.f32 %v5637, %v5701
          %v5734 = vsub.f32 %v5638, %v5702
          %v5735 = vsub.f32 %v5639, %v5703
          %v5736 = vsub.f32 %v5640, %v5704
          %v5737 = vsub.f32 %v5641, %v5705
          %v5738 = vsub.f32 %v5642, %v5706
          %v5739 = vsub.f32 %v5643, %v5707
          %v5740 = vsub.f32 %v5644, %v5708
          %v5741 = vsub.f32 %v5645, %v5709
          %v5742 = vsub.f32 %v5646, %v5710
          %v5743 = vsub.f32 %v5647, %v5711
          %v5744 = vsub.f32 %v5648, %v5712
          %v5745 = vsub.f32 %v5649, %v5713
          %v5746 = vsub.f32 %v5650, %v5714
          %v5747 = vsub.f32 %v5651, %v5715
          %v5748 = vsub.f32 %v5652, %v5716
          %v5749 = vsub.f32 %v5653, %v5717
          %v5750 = vsub.f32 %v5654, %v5718
          %v5751 = vsub.f32 %v5655, %v5719
          %v5752 = vsub.f32 %v5656, %v5720
          %v5753 = vpack.c.bf16 %v5722, %v5721
          %v5754 = vpack.c.bf16 %v5724, %v5723
          %v5755 = vpack.c.bf16 %v5726, %v5725
          %v5756 = vpack.c.bf16 %v5728, %v5727
          %v5757 = vpack.c.bf16 %v5730, %v5729
          %v5758 = vpack.c.bf16 %v5732, %v5731
          %v5759 = vpack.c.bf16 %v5734, %v5733
          %v5760 = vpack.c.bf16 %v5736, %v5735
          %v5761 = vpack.c.bf16 %v5738, %v5737
          %v5762 = vpack.c.bf16 %v5740, %v5739
          %v5763 = vpack.c.bf16 %v5742, %v5741
          %v5764 = vpack.c.bf16 %v5744, %v5743
          %v5765 = vpack.c.bf16 %v5746, %v5745
          %v5766 = vpack.c.bf16 %v5748, %v5747
          %v5767 = vpack.c.bf16 %v5750, %v5749
          %v5768 = vpack.c.bf16 %v5752, %v5751
          %v5769 = vld [vmem:[%s3] sm:$0xf]
          %v5770 = vld [vmem:[%s3 + $0x4] sm:$0xf]
          %v5771 = vld [vmem:[%s3 + $0x8] sm:$0xf]
          %v5772 = vld [vmem:[%s3 + $0xc] sm:$0xf]
          %v5773 = vld [vmem:[%s3 + $0x10] sm:$0x3]
          %s5774 = scalar_lea.vmem %s3, 20
          %v5775 = vld [vmem:[%s5774] sm:$0xf]
          %v5776 = vld [vmem:[%s5774 + $0x4] sm:$0xf]
          %v5777 = vld [vmem:[%s5774 + $0x8] sm:$0xf]
          %v5778 = vld [vmem:[%s5774 + $0xc] sm:$0xf]
          %v5779 = vld [vmem:[%s5774 + $0x10] sm:$0x3]
          %v5785 = vunpack.c.l.b16 %v5769
          %v5786 = vunpack.c.l.b16 %v5770
          %v5787 = vunpack.c.l.b16 %v5771
          %v5788 = vunpack.c.l.b16 %v5772
          %v5789 = vunpack.c.l.b16 %v5773
          %v5790 = vpack.c.b16 %v5786, %v5785
          %v5791 = vpack.c.b16 %v5788, %v5787
          %v5792 = vpack.c.b16 %v5789, %v5789
          %vm5795 = vcmask 293888
          %v5797 = vsel %vm5795, %v5753, 0
          %v5800 = vsel %vm5795, %v5754, 0
          %v5803 = vsel %vm5795, %v5755, 0
          %v5806 = vsel %vm5795, %v5756, 0
          %v5809 = vsel %vm5795, %v5757, 0
          %v5812 = vsel %vm5795, %v5758, 0
          %v5815 = vsel %vm5795, %v5759, 0
          %v5818 = vsel %vm5795, %v5760, 0
          %v5821 = vsel %vm5795, %v5761, 0
          %v5824 = vsel %vm5795, %v5762, 0
          %v5827 = vsel %vm5795, %v5763, 0
          %v5830 = vsel %vm5795, %v5764, 0
          %v5833 = vsel %vm5795, %v5765, 0
          %v5836 = vsel %vm5795, %v5766, 0
          %v5839 = vsel %vm5795, %v5767, 0
          %v5842 = vsel %vm5795, %v5768, 0
          %vm5844 = vcmask 1041408
          %v5846 = vsel %vm5844, %v5792, 0
          %5848 = vmatpush.bf16.msra.mxu0 0
          %5849 = vmatpush.bf16.msra.mxu0 0
          %5850 = vmatpush.bf16.msra.mxu0 0
          %5851 = vmatpush.bf16.msra.mxu0 0
          %5852 = vmatpush.bf16.msra.mxu0 0
          %5853 = vmatpush.bf16.msra.mxu0 %v5846
          %5854 = vmatpush.bf16.msra.mxu0 %v5791
          %5855 = vmatpush.bf16.msra.mxu0 %v5790
          %5856 = vmatmul.bf16.gmra.mxu0 %v5797
          %v5857 = vpop.f32.mrf.mxu0
          %v5858 = vadd.f32 0.0, %v5857
          %v5859 = vpop.f32.mrf.mxu0
          %v5860 = vadd.f32 0.0, %v5859
          %5861 = vmatmul.bf16.gmra.mxu0 %v5800
          %v5862 = vpop.f32.mrf.mxu0
          %v5863 = vadd.f32 0.0, %v5862
          %v5864 = vpop.f32.mrf.mxu0
          %v5865 = vadd.f32 0.0, %v5864
          %5866 = vmatmul.bf16.gmra.mxu0 %v5803
          %v5867 = vpop.f32.mrf.mxu0
          %v5868 = vadd.f32 0.0, %v5867
          %v5869 = vpop.f32.mrf.mxu0
          %v5870 = vadd.f32 0.0, %v5869
          %5871 = vmatmul.bf16.gmra.mxu0 %v5806
          %v5872 = vpop.f32.mrf.mxu0
          %v5873 = vadd.f32 0.0, %v5872
          %v5874 = vpop.f32.mrf.mxu0
          %v5875 = vadd.f32 0.0, %v5874
          %5876 = vmatmul.bf16.gmra.mxu0 %v5809
          %v5877 = vpop.f32.mrf.mxu0
          %v5878 = vadd.f32 0.0, %v5877
          %v5879 = vpop.f32.mrf.mxu0
          %v5880 = vadd.f32 0.0, %v5879
          %5881 = vmatmul.bf16.gmra.mxu0 %v5812
          %v5882 = vpop.f32.mrf.mxu0
          %v5883 = vadd.f32 0.0, %v5882
          %v5884 = vpop.f32.mrf.mxu0
          %v5885 = vadd.f32 0.0, %v5884
          %5886 = vmatmul.bf16.gmra.mxu0 %v5815
          %v5887 = vpop.f32.mrf.mxu0
          %v5888 = vadd.f32 0.0, %v5887
          %v5889 = vpop.f32.mrf.mxu0
          %v5890 = vadd.f32 0.0, %v5889
          %5891 = vmatmul.bf16.gmra.mxu0 %v5818
          %v5892 = vpop.f32.mrf.mxu0
          %v5893 = vadd.f32 0.0, %v5892
          %v5894 = vpop.f32.mrf.mxu0
          %v5895 = vadd.f32 0.0, %v5894
          %5896 = vmatmul.bf16.gmra.mxu0 %v5821
          %v5897 = vpop.f32.mrf.mxu0
          %v5898 = vadd.f32 0.0, %v5897
          %v5899 = vpop.f32.mrf.mxu0
          %v5900 = vadd.f32 0.0, %v5899
          %5901 = vmatmul.bf16.gmra.mxu0 %v5824
          %v5902 = vpop.f32.mrf.mxu0
          %v5903 = vadd.f32 0.0, %v5902
          %v5904 = vpop.f32.mrf.mxu0
          %v5905 = vadd.f32 0.0, %v5904
          %5906 = vmatmul.bf16.gmra.mxu0 %v5827
          %v5907 = vpop.f32.mrf.mxu0
          %v5908 = vadd.f32 0.0, %v5907
          %v5909 = vpop.f32.mrf.mxu0
          %v5910 = vadd.f32 0.0, %v5909
          %5911 = vmatmul.bf16.gmra.mxu0 %v5830
          %v5912 = vpop.f32.mrf.mxu0
          %v5913 = vadd.f32 0.0, %v5912
          %v5914 = vpop.f32.mrf.mxu0
          %v5915 = vadd.f32 0.0, %v5914
          %5916 = vmatmul.bf16.gmra.mxu0 %v5833
          %v5917 = vpop.f32.mrf.mxu0
          %v5918 = vadd.f32 0.0, %v5917
          %v5919 = vpop.f32.mrf.mxu0
          %v5920 = vadd.f32 0.0, %v5919
          %5921 = vmatmul.bf16.gmra.mxu0 %v5836
          %v5922 = vpop.f32.mrf.mxu0
          %v5923 = vadd.f32 0.0, %v5922
          %v5924 = vpop.f32.mrf.mxu0
          %v5925 = vadd.f32 0.0, %v5924
          %5926 = vmatmul.bf16.gmra.mxu0 %v5839
          %v5927 = vpop.f32.mrf.mxu0
          %v5928 = vadd.f32 0.0, %v5927
          %v5929 = vpop.f32.mrf.mxu0
          %v5930 = vadd.f32 0.0, %v5929
          %5931 = vmatmul.bf16.gmra.mxu0 %v5842
          %v5932 = vpop.f32.mrf.mxu0
          %v5933 = vadd.f32 0.0, %v5932
          %v5934 = vpop.f32.mrf.mxu0
          %v5935 = vadd.f32 0.0, %v5934
          %5936 = vdwg.mxu0
          %v5969 = vunpack.c.l.b16 %v5657
          %v5970 = vunpack.c.l.b16 %v5658
          %v5971 = vunpack.c.l.b16 %v5659
          %v5972 = vunpack.c.l.b16 %v5660
          %v5973 = vunpack.c.l.b16 %v5661
          %v5974 = vunpack.c.l.b16 %v5662
          %v5975 = vunpack.c.l.b16 %v5663
          %v5976 = vunpack.c.l.b16 %v5664
          %v5977 = vunpack.c.l.b16 %v5665
          %v5978 = vunpack.c.l.b16 %v5666
          %v5979 = vunpack.c.l.b16 %v5667
          %v5980 = vunpack.c.l.b16 %v5668
          %v5981 = vunpack.c.l.b16 %v5669
          %v5982 = vunpack.c.l.b16 %v5670
          %v5983 = vunpack.c.l.b16 %v5671
          %v5984 = vunpack.c.l.b16 %v5672
          %v5985 = vunpack.c.l.b16 %v5673
          %v5986 = vunpack.c.l.b16 %v5674
          %v5987 = vunpack.c.l.b16 %v5675
          %v5988 = vunpack.c.l.b16 %v5676
          %v5989 = vunpack.c.l.b16 %v5677
          %v5990 = vunpack.c.l.b16 %v5678
          %v5991 = vunpack.c.l.b16 %v5679
          %v5992 = vunpack.c.l.b16 %v5680
          %v5993 = vunpack.c.l.b16 %v5681
          %v5994 = vunpack.c.l.b16 %v5682
          %v5995 = vunpack.c.l.b16 %v5683
          %v5996 = vunpack.c.l.b16 %v5684
          %v5997 = vunpack.c.l.b16 %v5685
          %v5998 = vunpack.c.l.b16 %v5686
          %v5999 = vunpack.c.l.b16 %v5687
          %v6000 = vunpack.c.l.b16 %v5688
          %v6001 = vpack.c.b16 %v5970, %v5969
          %v6002 = vpack.c.b16 %v5972, %v5971
          %v6003 = vpack.c.b16 %v5974, %v5973
          %v6004 = vpack.c.b16 %v5976, %v5975
          %v6005 = vpack.c.b16 %v5978, %v5977
          %v6006 = vpack.c.b16 %v5980, %v5979
          %v6007 = vpack.c.b16 %v5982, %v5981
          %v6008 = vpack.c.b16 %v5984, %v5983
          %v6009 = vpack.c.b16 %v5986, %v5985
          %v6010 = vpack.c.b16 %v5988, %v5987
          %v6011 = vpack.c.b16 %v5990, %v5989
          %v6012 = vpack.c.b16 %v5992, %v5991
          %v6013 = vpack.c.b16 %v5994, %v5993
          %v6014 = vpack.c.b16 %v5996, %v5995
          %v6015 = vpack.c.b16 %v5998, %v5997
          %v6016 = vpack.c.b16 %v6000, %v5999
          %v6018 = vsel %vm5795, %v6001, 0
          %v6021 = vsel %vm5795, %v6002, 0
          %v6024 = vsel %vm5795, %v6003, 0
          %v6027 = vsel %vm5795, %v6004, 0
          %v6030 = vsel %vm5795, %v6005, 0
          %v6033 = vsel %vm5795, %v6006, 0
          %v6036 = vsel %vm5795, %v6007, 0
          %v6039 = vsel %vm5795, %v6008, 0
          %v6042 = vsel %vm5795, %v6009, 0
          %v6045 = vsel %vm5795, %v6010, 0
          %v6048 = vsel %vm5795, %v6011, 0
          %v6051 = vsel %vm5795, %v6012, 0
          %v6054 = vsel %vm5795, %v6013, 0
          %v6057 = vsel %vm5795, %v6014, 0
          %v6060 = vsel %vm5795, %v6015, 0
          %v6063 = vsel %vm5795, %v6016, 0
          %6065 = vmatpush.bf16.msra.mxu0 0
          %6066 = vmatpush.bf16.msra.mxu0 0
          %6067 = vmatpush.bf16.msra.mxu0 0
          %6068 = vmatpush.bf16.msra.mxu0 0
          %6069 = vmatpush.bf16.msra.mxu0 0
          %6070 = vmatpush.bf16.msra.mxu0 %v5846
          %6071 = vmatpush.bf16.msra.mxu0 %v5791
          %6072 = vmatpush.bf16.msra.mxu0 %v5790
          %6073 = vmatmul.bf16.gmra.mxu0 %v6018
          %v6074 = vpop.f32.mrf.mxu0
          %v6075 = vadd.f32 %v5858, %v6074
          %v6076 = vpop.f32.mrf.mxu0
          %v6077 = vadd.f32 %v5860, %v6076
          %6078 = vmatmul.bf16.gmra.mxu0 %v6021
          %v6079 = vpop.f32.mrf.mxu0
          %v6080 = vadd.f32 %v5863, %v6079
          %v6081 = vpop.f32.mrf.mxu0
          %v6082 = vadd.f32 %v5865, %v6081
          %6083 = vmatmul.bf16.gmra.mxu0 %v6024
          %v6084 = vpop.f32.mrf.mxu0
          %v6085 = vadd.f32 %v5868, %v6084
          %v6086 = vpop.f32.mrf.mxu0
          %v6087 = vadd.f32 %v5870, %v6086
          %6088 = vmatmul.bf16.gmra.mxu0 %v6027
          %v6089 = vpop.f32.mrf.mxu0
          %v6090 = vadd.f32 %v5873, %v6089
          %v6091 = vpop.f32.mrf.mxu0
          %v6092 = vadd.f32 %v5875, %v6091
          %6093 = vmatmul.bf16.gmra.mxu0 %v6030
          %v6094 = vpop.f32.mrf.mxu0
          %v6095 = vadd.f32 %v5878, %v6094
          %v6096 = vpop.f32.mrf.mxu0
          %v6097 = vadd.f32 %v5880, %v6096
          %6098 = vmatmul.bf16.gmra.mxu0 %v6033
          %v6099 = vpop.f32.mrf.mxu0
          %v6100 = vadd.f32 %v5883, %v6099
          %v6101 = vpop.f32.mrf.mxu0
          %v6102 = vadd.f32 %v5885, %v6101
          %6103 = vmatmul.bf16.gmra.mxu0 %v6036
          %v6104 = vpop.f32.mrf.mxu0
          %v6105 = vadd.f32 %v5888, %v6104
          %v6106 = vpop.f32.mrf.mxu0
          %v6107 = vadd.f32 %v5890, %v6106
          %6108 = vmatmul.bf16.gmra.mxu0 %v6039
          %v6109 = vpop.f32.mrf.mxu0
          %v6110 = vadd.f32 %v5893, %v6109
          %v6111 = vpop.f32.mrf.mxu0
          %v6112 = vadd.f32 %v5895, %v6111
          %6113 = vmatmul.bf16.gmra.mxu0 %v6042
          %v6114 = vpop.f32.mrf.mxu0
          %v6115 = vadd.f32 %v5898, %v6114
          %v6116 = vpop.f32.mrf.mxu0
          %v6117 = vadd.f32 %v5900, %v6116
          %6118 = vmatmul.bf16.gmra.mxu0 %v6045
          %v6119 = vpop.f32.mrf.mxu0
          %v6120 = vadd.f32 %v5903, %v6119
          %v6121 = vpop.f32.mrf.mxu0
          %v6122 = vadd.f32 %v5905, %v6121
          %6123 = vmatmul.bf16.gmra.mxu0 %v6048
          %v6124 = vpop.f32.mrf.mxu0
          %v6125 = vadd.f32 %v5908, %v6124
          %v6126 = vpop.f32.mrf.mxu0
          %v6127 = vadd.f32 %v5910, %v6126
          %6128 = vmatmul.bf16.gmra.mxu0 %v6051
          %v6129 = vpop.f32.mrf.mxu0
          %v6130 = vadd.f32 %v5913, %v6129
          %v6131 = vpop.f32.mrf.mxu0
          %v6132 = vadd.f32 %v5915, %v6131
          %6133 = vmatmul.bf16.gmra.mxu0 %v6054
          %v6134 = vpop.f32.mrf.mxu0
          %v6135 = vadd.f32 %v5918, %v6134
          %v6136 = vpop.f32.mrf.mxu0
          %v6137 = vadd.f32 %v5920, %v6136
          %6138 = vmatmul.bf16.gmra.mxu0 %v6057
          %v6139 = vpop.f32.mrf.mxu0
          %v6140 = vadd.f32 %v5923, %v6139
          %v6141 = vpop.f32.mrf.mxu0
          %v6142 = vadd.f32 %v5925, %v6141
          %6143 = vmatmul.bf16.gmra.mxu0 %v6060
          %v6144 = vpop.f32.mrf.mxu0
          %v6145 = vadd.f32 %v5928, %v6144
          %v6146 = vpop.f32.mrf.mxu0
          %v6147 = vadd.f32 %v5930, %v6146
          %6148 = vmatmul.bf16.gmra.mxu0 %v6063
          %v6149 = vpop.f32.mrf.mxu0
          %v6150 = vadd.f32 %v5933, %v6149
          %v6151 = vpop.f32.mrf.mxu0
          %v6152 = vadd.f32 %v5935, %v6151
          %6153 = vdwg.mxu0
          %v6159 = vunpack.c.l.b16 %v5775
          %v6160 = vunpack.c.l.b16 %v5776
          %v6161 = vunpack.c.l.b16 %v5777
          %v6162 = vunpack.c.l.b16 %v5778
          %v6163 = vunpack.c.l.b16 %v5779
          %v6164 = vpack.c.b16 %v6160, %v6159
          %v6165 = vpack.c.b16 %v6162, %v6161
          %v6166 = vpack.c.b16 %v6163, %v6163
          %v6170 = vsel %vm5844, %v6166, 0
          %6172 = vmatpush.bf16.msra.mxu0 0
          %6173 = vmatpush.bf16.msra.mxu0 0
          %6174 = vmatpush.bf16.msra.mxu0 0
          %6175 = vmatpush.bf16.msra.mxu0 0
          %6176 = vmatpush.bf16.msra.mxu0 0
          %6177 = vmatpush.bf16.msra.mxu0 %v6170
          %6178 = vmatpush.bf16.msra.mxu0 %v6165
          %6179 = vmatpush.bf16.msra.mxu0 %v6164
          %6180 = vmatmul.bf16.gmra.mxu0 %v6018
          %v6181 = vpop.f32.mrf.mxu0
          %v6182 = vadd.f32 0.0, %v6181
          %v6183 = vpop.f32.mrf.mxu0
          %v6184 = vadd.f32 0.0, %v6183
          %6185 = vmatmul.bf16.gmra.mxu0 %v6021
          %v6186 = vpop.f32.mrf.mxu0
          %v6187 = vadd.f32 0.0, %v6186
          %v6188 = vpop.f32.mrf.mxu0
          %v6189 = vadd.f32 0.0, %v6188
          %6190 = vmatmul.bf16.gmra.mxu0 %v6024
          %v6191 = vpop.f32.mrf.mxu0
          %v6192 = vadd.f32 0.0, %v6191
          %v6193 = vpop.f32.mrf.mxu0
          %v6194 = vadd.f32 0.0, %v6193
          %6195 = vmatmul.bf16.gmra.mxu0 %v6027
          %v6196 = vpop.f32.mrf.mxu0
          %v6197 = vadd.f32 0.0, %v6196
          %v6198 = vpop.f32.mrf.mxu0
          %v6199 = vadd.f32 0.0, %v6198
          %6200 = vmatmul.bf16.gmra.mxu0 %v6030
          %v6201 = vpop.f32.mrf.mxu0
          %v6202 = vadd.f32 0.0, %v6201
          %v6203 = vpop.f32.mrf.mxu0
          %v6204 = vadd.f32 0.0, %v6203
          %6205 = vmatmul.bf16.gmra.mxu0 %v6033
          %v6206 = vpop.f32.mrf.mxu0
          %v6207 = vadd.f32 0.0, %v6206
          %v6208 = vpop.f32.mrf.mxu0
          %v6209 = vadd.f32 0.0, %v6208
          %6210 = vmatmul.bf16.gmra.mxu0 %v6036
          %v6211 = vpop.f32.mrf.mxu0
          %v6212 = vadd.f32 0.0, %v6211
          %v6213 = vpop.f32.mrf.mxu0
          %v6214 = vadd.f32 0.0, %v6213
          %6215 = vmatmul.bf16.gmra.mxu0 %v6039
          %v6216 = vpop.f32.mrf.mxu0
          %v6217 = vadd.f32 0.0, %v6216
          %v6218 = vpop.f32.mrf.mxu0
          %v6219 = vadd.f32 0.0, %v6218
          %6220 = vmatmul.bf16.gmra.mxu0 %v6042
          %v6221 = vpop.f32.mrf.mxu0
          %v6222 = vadd.f32 0.0, %v6221
          %v6223 = vpop.f32.mrf.mxu0
          %v6224 = vadd.f32 0.0, %v6223
          %6225 = vmatmul.bf16.gmra.mxu0 %v6045
          %v6226 = vpop.f32.mrf.mxu0
          %v6227 = vadd.f32 0.0, %v6226
          %v6228 = vpop.f32.mrf.mxu0
          %v6229 = vadd.f32 0.0, %v6228
          %6230 = vmatmul.bf16.gmra.mxu0 %v6048
          %v6231 = vpop.f32.mrf.mxu0
          %v6232 = vadd.f32 0.0, %v6231
          %v6233 = vpop.f32.mrf.mxu0
          %v6234 = vadd.f32 0.0, %v6233
          %6235 = vmatmul.bf16.gmra.mxu0 %v6051
          %v6236 = vpop.f32.mrf.mxu0
          %v6237 = vadd.f32 0.0, %v6236
          %v6238 = vpop.f32.mrf.mxu0
          %v6239 = vadd.f32 0.0, %v6238
          %6240 = vmatmul.bf16.gmra.mxu0 %v6054
          %v6241 = vpop.f32.mrf.mxu0
          %v6242 = vadd.f32 0.0, %v6241
          %v6243 = vpop.f32.mrf.mxu0
          %v6244 = vadd.f32 0.0, %v6243
          %6245 = vmatmul.bf16.gmra.mxu0 %v6057
          %v6246 = vpop.f32.mrf.mxu0
          %v6247 = vadd.f32 0.0, %v6246
          %v6248 = vpop.f32.mrf.mxu0
          %v6249 = vadd.f32 0.0, %v6248
          %6250 = vmatmul.bf16.gmra.mxu0 %v6060
          %v6251 = vpop.f32.mrf.mxu0
          %v6252 = vadd.f32 0.0, %v6251
          %v6253 = vpop.f32.mrf.mxu0
          %v6254 = vadd.f32 0.0, %v6253
          %6255 = vmatmul.bf16.gmra.mxu0 %v6063
          %v6256 = vpop.f32.mrf.mxu0
          %v6257 = vadd.f32 0.0, %v6256
          %v6258 = vpop.f32.mrf.mxu0
          %v6259 = vadd.f32 0.0, %v6258
          %6260 = vdwg.mxu0
          %v6261 = vadd.f32 %v6075, %v6182
          %v6262 = vadd.f32 %v6077, %v6184
          %v6263 = vadd.f32 %v6080, %v6187
          %v6264 = vadd.f32 %v6082, %v6189
          %v6265 = vadd.f32 %v6085, %v6192
          %v6266 = vadd.f32 %v6087, %v6194
          %v6267 = vadd.f32 %v6090, %v6197
          %v6268 = vadd.f32 %v6092, %v6199
          %v6269 = vadd.f32 %v6095, %v6202
          %v6270 = vadd.f32 %v6097, %v6204
          %v6271 = vadd.f32 %v6100, %v6207
          %v6272 = vadd.f32 %v6102, %v6209
          %v6273 = vadd.f32 %v6105, %v6212
          %v6274 = vadd.f32 %v6107, %v6214
          %v6275 = vadd.f32 %v6110, %v6217
          %v6276 = vadd.f32 %v6112, %v6219
          %v6277 = vadd.f32 %v6115, %v6222
          %v6278 = vadd.f32 %v6117, %v6224
          %v6279 = vadd.f32 %v6120, %v6227
          %v6280 = vadd.f32 %v6122, %v6229
          %v6281 = vadd.f32 %v6125, %v6232
          %v6282 = vadd.f32 %v6127, %v6234
          %v6283 = vadd.f32 %v6130, %v6237
          %v6284 = vadd.f32 %v6132, %v6239
          %v6285 = vadd.f32 %v6135, %v6242
          %v6286 = vadd.f32 %v6137, %v6244
          %v6287 = vadd.f32 %v6140, %v6247
          %v6288 = vadd.f32 %v6142, %v6249
          %v6289 = vadd.f32 %v6145, %v6252
          %v6290 = vadd.f32 %v6147, %v6254
          %v6291 = vadd.f32 %v6150, %v6257
          %v6292 = vadd.f32 %v6152, %v6259
          %s6293 = scalar_lea.vmem [#allocation3], %s4149
          %6294 = vst [vmem:[%s6293] sm:$0xff] %v6261
          %6295 = vst [vmem:[%s6293 + $0x8] sm:$0xff] %v6262
          %6296 = vst [vmem:[%s6293 + $0x10] sm:$0xff] %v6263
          %6297 = vst [vmem:[%s6293 + $0x18] sm:$0xff] %v6264
          %6298 = vst [vmem:[%s6293 + $0x20] sm:$0xff] %v6265
          %6299 = vst [vmem:[%s6293 + $0x28] sm:$0xff] %v6266
          %6300 = vst [vmem:[%s6293 + $0x30] sm:$0xff] %v6267
          %6301 = vst [vmem:[%s6293 + $0x38] sm:$0xff] %v6268
          %6302 = vst [vmem:[%s6293 + $0x40] sm:$0xff] %v6269
          %6303 = vst [vmem:[%s6293 + $0x48] sm:$0xff] %v6270
          %6304 = vst [vmem:[%s6293 + $0x50] sm:$0xff] %v6271
          %6305 = vst [vmem:[%s6293 + $0x58] sm:$0xff] %v6272
          %6306 = vst [vmem:[%s6293 + $0x60] sm:$0xff] %v6273
          %6307 = vst [vmem:[%s6293 + $0x68] sm:$0xff] %v6274
          %6308 = vst [vmem:[%s6293 + $0x70] sm:$0xff] %v6275
          %6309 = vst [vmem:[%s6293 + $0x78] sm:$0xff] %v6276
          %6310 = vst [vmem:[%s6293 + $0x80] sm:$0xff] %v6277
          %6311 = vst [vmem:[%s6293 + $0x88] sm:$0xff] %v6278
          %6312 = vst [vmem:[%s6293 + $0x90] sm:$0xff] %v6279
          %6313 = vst [vmem:[%s6293 + $0x98] sm:$0xff] %v6280
          %6314 = vst [vmem:[%s6293 + $0xa0] sm:$0xff] %v6281
          %6315 = vst [vmem:[%s6293 + $0xa8] sm:$0xff] %v6282
          %6316 = vst [vmem:[%s6293 + $0xb0] sm:$0xff] %v6283
          %6317 = vst [vmem:[%s6293 + $0xb8] sm:$0xff] %v6284
          %6318 = vst [vmem:[%s6293 + $0xc0] sm:$0xff] %v6285
          %6319 = vst [vmem:[%s6293 + $0xc8] sm:$0xff] %v6286
          %6320 = vst [vmem:[%s6293 + $0xd0] sm:$0xff] %v6287
          %6321 = vst [vmem:[%s6293 + $0xd8] sm:$0xff] %v6288
          %6322 = vst [vmem:[%s6293 + $0xe0] sm:$0xff] %v6289
          %6323 = vst [vmem:[%s6293 + $0xe8] sm:$0xff] %v6290
          %6324 = vst [vmem:[%s6293 + $0xf0] sm:$0xff] %v6291
          %6325 = vst [vmem:[%s6293 + $0xf8] sm:$0xff] %v6292
        $region48: #{tpu_custom_call.1} parent=39 // pred_fallthru
          _
        %p6326 = scmp.eq.s32.totalorder %s21, 2
        // Predicated region
        $region53: #{tpu_custom_call.1} parent=39 // pred_check
          %p6327 = pneg %p6326
        $region54: #{tpu_custom_call.1} parent=39 // pred_check_branch
          %6329 = sbr.rel (%p6327) target = $region56
        $region55: #{tpu_custom_call.1} parent=39 // pred_region
          %p6330 = scmp.eq.s32.totalorder %s22, 0
          // Predicated region
          $region57: #{tpu_custom_call.1} parent=55 // pred_check
            %p6331 = pneg %p6330
          $region58: #{tpu_custom_call.1} parent=55 // pred_check_branch
            %6333 = sbr.rel (%p6331) target = $region60
          $region59: #{tpu_custom_call.1} parent=55 // pred_region
            %v6334 = vld [vmem:[%s4 + $0x2] sm:$0x1]
            %v6335 = vld [vmem:[%s4 + $0x3] sm:$0x1]
            %v6336 = vld [vmem:[#allocation3] sm:$0xff]
            %v6337 = vld [vmem:[#allocation3 + $0x8] sm:$0xff]
            %v6338 = vld [vmem:[#allocation3 + $0x10] sm:$0xff]
            %v6339 = vld [vmem:[#allocation3 + $0x18] sm:$0xff]
            %v6340 = vld [vmem:[#allocation3 + $0x20] sm:$0xff]
            %v6341 = vld [vmem:[#allocation3 + $0x28] sm:$0xff]
            %v6342 = vld [vmem:[#allocation3 + $0x30] sm:$0xff]
            %v6343 = vld [vmem:[#allocation3 + $0x38] sm:$0xff]
            %v6344 = vld [vmem:[#allocation3 + $0x40] sm:$0xff]
            %v6345 = vld [vmem:[#allocation3 + $0x48] sm:$0xff]
            %v6346 = vld [vmem:[#allocation3 + $0x50] sm:$0xff]
            %v6347 = vld [vmem:[#allocation3 + $0x58] sm:$0xff]
            %v6348 = vld [vmem:[#allocation3 + $0x60] sm:$0xff]
            %v6349 = vld [vmem:[#allocation3 + $0x68] sm:$0xff]
            %v6350 = vld [vmem:[#allocation3 + $0x70] sm:$0xff]
            %v6351 = vld [vmem:[#allocation3 + $0x78] sm:$0xff]
            %v6352 = vld [vmem:[#allocation3 + $0x80] sm:$0xff]
            %v6353 = vld [vmem:[#allocation3 + $0x88] sm:$0xff]
            %v6354 = vld [vmem:[#allocation3 + $0x90] sm:$0xff]
            %v6355 = vld [vmem:[#allocation3 + $0x98] sm:$0xff]
            %v6356 = vld [vmem:[#allocation3 + $0xa0] sm:$0xff]
            %v6357 = vld [vmem:[#allocation3 + $0xa8] sm:$0xff]
            %v6358 = vld [vmem:[#allocation3 + $0xb0] sm:$0xff]
            %v6359 = vld [vmem:[#allocation3 + $0xb8] sm:$0xff]
            %v6360 = vld [vmem:[#allocation3 + $0xc0] sm:$0xff]
            %v6361 = vld [vmem:[#allocation3 + $0xc8] sm:$0xff]
            %v6362 = vld [vmem:[#allocation3 + $0xd0] sm:$0xff]
            %v6363 = vld [vmem:[#allocation3 + $0xd8] sm:$0xff]
            %v6364 = vld [vmem:[#allocation3 + $0xe0] sm:$0xff]
            %v6365 = vld [vmem:[#allocation3 + $0xe8] sm:$0xff]
            %v6366 = vld [vmem:[#allocation3 + $0xf0] sm:$0xff]
            %v6367 = vld [vmem:[#allocation3 + $0xf8] sm:$0xff]
            %v6368 = vld [vmem:[#allocation3 + $0x100] sm:$0xff]
            %v6369 = vld [vmem:[#allocation3 + $0x108] sm:$0xff]
            %v6370 = vld [vmem:[#allocation3 + $0x110] sm:$0xff]
            %v6371 = vld [vmem:[#allocation3 + $0x118] sm:$0xff]
            %v6372 = vld [vmem:[#allocation3 + $0x120] sm:$0xff]
            %v6373 = vld [vmem:[#allocation3 + $0x128] sm:$0xff]
            %v6374 = vld [vmem:[#allocation3 + $0x130] sm:$0xff]
            %v6375 = vld [vmem:[#allocation3 + $0x138] sm:$0xff]
            %v6376 = vld [vmem:[#allocation3 + $0x140] sm:$0xff]
            %v6377 = vld [vmem:[#allocation3 + $0x148] sm:$0xff]
            %v6378 = vld [vmem:[#allocation3 + $0x150] sm:$0xff]
            %v6379 = vld [vmem:[#allocation3 + $0x158] sm:$0xff]
            %v6380 = vld [vmem:[#allocation3 + $0x160] sm:$0xff]
            %v6381 = vld [vmem:[#allocation3 + $0x168] sm:$0xff]
            %v6382 = vld [vmem:[#allocation3 + $0x170] sm:$0xff]
            %v6383 = vld [vmem:[#allocation3 + $0x178] sm:$0xff]
            %v6384 = vld [vmem:[#allocation3 + $0x180] sm:$0xff]
            %v6385 = vld [vmem:[#allocation3 + $0x188] sm:$0xff]
            %v6386 = vld [vmem:[#allocation3 + $0x190] sm:$0xff]
            %v6387 = vld [vmem:[#allocation3 + $0x198] sm:$0xff]
            %v6388 = vld [vmem:[#allocation3 + $0x1a0] sm:$0xff]
            %v6389 = vld [vmem:[#allocation3 + $0x1a8] sm:$0xff]
            %v6390 = vld [vmem:[#allocation3 + $0x1b0] sm:$0xff]
            %v6391 = vld [vmem:[#allocation3 + $0x1b8] sm:$0xff]
            %v6392 = vld [vmem:[#allocation3 + $0x1c0] sm:$0xff]
            %v6393 = vld [vmem:[#allocation3 + $0x1c8] sm:$0xff]
            %v6394 = vld [vmem:[#allocation3 + $0x1d0] sm:$0xff]
            %v6395 = vld [vmem:[#allocation3 + $0x1d8] sm:$0xff]
            %v6396 = vld [vmem:[#allocation3 + $0x1e0] sm:$0xff]
            %v6397 = vld [vmem:[#allocation3 + $0x1e8] sm:$0xff]
            %v6398 = vld [vmem:[#allocation3 + $0x1f0] sm:$0xff]
            %v6399 = vld [vmem:[#allocation3 + $0x1f8] sm:$0xff]
            %v6400 = vadd.f32 %v6336, %v6337
            %v6401 = vadd.f32 %v6400, %v6338
            %v6402 = vadd.f32 %v6401, %v6339
            %v6403 = vadd.f32 %v6402, %v6340
            %v6404 = vadd.f32 %v6403, %v6341
            %v6405 = vadd.f32 %v6404, %v6342
            %v6406 = vadd.f32 %v6405, %v6343
            %v6407 = vadd.f32 %v6406, %v6344
            %v6408 = vadd.f32 %v6407, %v6345
            %v6409 = vadd.f32 %v6408, %v6346
            %v6410 = vadd.f32 %v6409, %v6347
            %v6411 = vadd.f32 %v6410, %v6348
            %v6412 = vadd.f32 %v6411, %v6349
            %v6413 = vadd.f32 %v6412, %v6350
            %v6414 = vadd.f32 %v6413, %v6351
            %v6415 = vadd.f32 %v6414, %v6352
            %v6416 = vadd.f32 %v6415, %v6353
            %v6417 = vadd.f32 %v6416, %v6354
            %v6418 = vadd.f32 %v6417, %v6355
            %v6419 = vadd.f32 %v6418, %v6356
            %v6420 = vadd.f32 %v6419, %v6357
            %v6421 = vadd.f32 %v6420, %v6358
            %v6422 = vadd.f32 %v6421, %v6359
            %v6423 = vadd.f32 %v6422, %v6360
            %v6424 = vadd.f32 %v6423, %v6361
            %v6425 = vadd.f32 %v6424, %v6362
            %v6426 = vadd.f32 %v6425, %v6363
            %v6427 = vadd.f32 %v6426, %v6364
            %v6428 = vadd.f32 %v6427, %v6365
            %v6429 = vadd.f32 %v6428, %v6366
            %v6430 = vadd.f32 %v6429, %v6367
            %v6431 = vadd.f32 %v6430, %v6368
            %v6432 = vadd.f32 %v6431, %v6369
            %v6433 = vadd.f32 %v6432, %v6370
            %v6434 = vadd.f32 %v6433, %v6371
            %v6435 = vadd.f32 %v6434, %v6372
            %v6436 = vadd.f32 %v6435, %v6373
            %v6437 = vadd.f32 %v6436, %v6374
            %v6438 = vadd.f32 %v6437, %v6375
            %v6439 = vadd.f32 %v6438, %v6376
            %v6440 = vadd.f32 %v6439, %v6377
            %v6441 = vadd.f32 %v6440, %v6378
            %v6442 = vadd.f32 %v6441, %v6379
            %v6443 = vadd.f32 %v6442, %v6380
            %v6444 = vadd.f32 %v6443, %v6381
            %v6445 = vadd.f32 %v6444, %v6382
            %v6446 = vadd.f32 %v6445, %v6383
            %v6447 = vadd.f32 %v6446, %v6384
            %v6448 = vadd.f32 %v6447, %v6385
            %v6449 = vadd.f32 %v6448, %v6386
            %v6450 = vadd.f32 %v6449, %v6387
            %v6451 = vadd.f32 %v6450, %v6388
            %v6452 = vadd.f32 %v6451, %v6389
            %v6453 = vadd.f32 %v6452, %v6390
            %v6454 = vadd.f32 %v6453, %v6391
            %v6455 = vadd.f32 %v6454, %v6392
            %v6456 = vadd.f32 %v6455, %v6393
            %v6457 = vadd.f32 %v6456, %v6394
            %v6458 = vadd.f32 %v6457, %v6395
            %v6459 = vadd.f32 %v6458, %v6396
            %v6460 = vadd.f32 %v6459, %v6397
            %v6461 = vadd.f32 %v6460, %v6398
            %v6462 = vadd.f32 %v6461, %v6399
            %v6463 = vrot.slane %v6462, 4
            %v6464 = vadd.f32 %v6462, %v6463
            %v6465 = vrot.slane %v6464, 2
            %v6466 = vadd.f32 %v6464, %v6465
            %v6467 = vrot.slane %v6466, 1
            %v6468 = vadd.f32 %v6466, %v6467
            %v6469 = vrcp.pop 512.0
            %v6470 = vmul.f32 512.0, %v6469
            %v6471 = vsub.f32 1.0, %v6470
            %v6472 = vmul.f32 %v6469, %v6471
            %v6473 = vadd.f32 %v6469, %v6472
            %vm6474 = vweird.f32 %v6469
            %v6475 = vsel %vm6474, %v6469, %v6473
            %v6476 = vmul.f32 %v6468, %v6475
            %v6477 = vsub.f32 %v6336, %v6476
            %v6478 = vsub.f32 %v6337, %v6476
            %v6479 = vsub.f32 %v6338, %v6476
            %v6480 = vsub.f32 %v6339, %v6476
            %v6481 = vsub.f32 %v6340, %v6476
            %v6482 = vsub.f32 %v6341, %v6476
            %v6483 = vsub.f32 %v6342, %v6476
            %v6484 = vsub.f32 %v6343, %v6476
            %v6485 = vsub.f32 %v6344, %v6476
            %v6486 = vsub.f32 %v6345, %v6476
            %v6487 = vsub.f32 %v6346, %v6476
            %v6488 = vsub.f32 %v6347, %v6476
            %v6489 = vsub.f32 %v6348, %v6476
            %v6490 = vsub.f32 %v6349, %v6476
            %v6491 = vsub.f32 %v6350, %v6476
            %v6492 = vsub.f32 %v6351, %v6476
            %v6493 = vsub.f32 %v6352, %v6476
            %v6494 = vsub.f32 %v6353, %v6476
            %v6495 = vsub.f32 %v6354, %v6476
            %v6496 = vsub.f32 %v6355, %v6476
            %v6497 = vsub.f32 %v6356, %v6476
            %v6498 = vsub.f32 %v6357, %v6476
            %v6499 = vsub.f32 %v6358, %v6476
            %v6500 = vsub.f32 %v6359, %v6476
            %v6501 = vsub.f32 %v6360, %v6476
            %v6502 = vsub.f32 %v6361, %v6476
            %v6503 = vsub.f32 %v6362, %v6476
            %v6504 = vsub.f32 %v6363, %v6476
            %v6505 = vsub.f32 %v6364, %v6476
            %v6506 = vsub.f32 %v6365, %v6476
            %v6507 = vsub.f32 %v6366, %v6476
            %v6508 = vsub.f32 %v6367, %v6476
            %v6509 = vsub.f32 %v6368, %v6476
            %v6510 = vsub.f32 %v6369, %v6476
            %v6511 = vsub.f32 %v6370, %v6476
            %v6512 = vsub.f32 %v6371, %v6476
            %v6513 = vsub.f32 %v6372, %v6476
            %v6514 = vsub.f32 %v6373, %v6476
            %v6515 = vsub.f32 %v6374, %v6476
            %v6516 = vsub.f32 %v6375, %v6476
            %v6517 = vsub.f32 %v6376, %v6476
            %v6518 = vsub.f32 %v6377, %v6476
            %v6519 = vsub.f32 %v6378, %v6476
            %v6520 = vsub.f32 %v6379, %v6476
            %v6521 = vsub.f32 %v6380, %v6476
            %v6522 = vsub.f32 %v6381, %v6476
            %v6523 = vsub.f32 %v6382, %v6476
            %v6524 = vsub.f32 %v6383, %v6476
            %v6525 = vsub.f32 %v6384, %v6476
            %v6526 = vsub.f32 %v6385, %v6476
            %v6527 = vsub.f32 %v6386, %v6476
            %v6528 = vsub.f32 %v6387, %v6476
            %v6529 = vsub.f32 %v6388, %v6476
            %v6530 = vsub.f32 %v6389, %v6476
            %v6531 = vsub.f32 %v6390, %v6476
            %v6532 = vsub.f32 %v6391, %v6476
            %v6533 = vsub.f32 %v6392, %v6476
            %v6534 = vsub.f32 %v6393, %v6476
            %v6535 = vsub.f32 %v6394, %v6476
            %v6536 = vsub.f32 %v6395, %v6476
            %v6537 = vsub.f32 %v6396, %v6476
            %v6538 = vsub.f32 %v6397, %v6476
            %v6539 = vsub.f32 %v6398, %v6476
            %v6540 = vsub.f32 %v6399, %v6476
            %v6541 = vmul.f32 %v6477, %v6477
            %v6542 = vmul.f32 %v6478, %v6478
            %v6543 = vmul.f32 %v6479, %v6479
            %v6544 = vmul.f32 %v6480, %v6480
            %v6545 = vmul.f32 %v6481, %v6481
            %v6546 = vmul.f32 %v6482, %v6482
            %v6547 = vmul.f32 %v6483, %v6483
            %v6548 = vmul.f32 %v6484, %v6484
            %v6549 = vmul.f32 %v6485, %v6485
            %v6550 = vmul.f32 %v6486, %v6486
            %v6551 = vmul.f32 %v6487, %v6487
            %v6552 = vmul.f32 %v6488, %v6488
            %v6553 = vmul.f32 %v6489, %v6489
            %v6554 = vmul.f32 %v6490, %v6490
            %v6555 = vmul.f32 %v6491, %v6491
            %v6556 = vmul.f32 %v6492, %v6492
            %v6557 = vmul.f32 %v6493, %v6493
            %v6558 = vmul.f32 %v6494, %v6494
            %v6559 = vmul.f32 %v6495, %v6495
            %v6560 = vmul.f32 %v6496, %v6496
            %v6561 = vmul.f32 %v6497, %v6497
            %v6562 = vmul.f32 %v6498, %v6498
            %v6563 = vmul.f32 %v6499, %v6499
            %v6564 = vmul.f32 %v6500, %v6500
            %v6565 = vmul.f32 %v6501, %v6501
            %v6566 = vmul.f32 %v6502, %v6502
            %v6567 = vmul.f32 %v6503, %v6503
            %v6568 = vmul.f32 %v6504, %v6504
            %v6569 = vmul.f32 %v6505, %v6505
            %v6570 = vmul.f32 %v6506, %v6506
            %v6571 = vmul.f32 %v6507, %v6507
            %v6572 = vmul.f32 %v6508, %v6508
            %v6573 = vmul.f32 %v6509, %v6509
            %v6574 = vmul.f32 %v6510, %v6510
            %v6575 = vmul.f32 %v6511, %v6511
            %v6576 = vmul.f32 %v6512, %v6512
            %v6577 = vmul.f32 %v6513, %v6513
            %v6578 = vmul.f32 %v6514, %v6514
            %v6579 = vmul.f32 %v6515, %v6515
            %v6580 = vmul.f32 %v6516, %v6516
            %v6581 = vmul.f32 %v6517, %v6517
            %v6582 = vmul.f32 %v6518, %v6518
            %v6583 = vmul.f32 %v6519, %v6519
            %v6584 = vmul.f32 %v6520, %v6520
            %v6585 = vmul.f32 %v6521, %v6521
            %v6586 = vmul.f32 %v6522, %v6522
            %v6587 = vmul.f32 %v6523, %v6523
            %v6588 = vmul.f32 %v6524, %v6524
            %v6589 = vmul.f32 %v6525, %v6525
            %v6590 = vmul.f32 %v6526, %v6526
            %v6591 = vmul.f32 %v6527, %v6527
            %v6592 = vmul.f32 %v6528, %v6528
            %v6593 = vmul.f32 %v6529, %v6529
            %v6594 = vmul.f32 %v6530, %v6530
            %v6595 = vmul.f32 %v6531, %v6531
            %v6596 = vmul.f32 %v6532, %v6532
            %v6597 = vmul.f32 %v6533, %v6533
            %v6598 = vmul.f32 %v6534, %v6534
            %v6599 = vmul.f32 %v6535, %v6535
            %v6600 = vmul.f32 %v6536, %v6536
            %v6601 = vmul.f32 %v6537, %v6537
            %v6602 = vmul.f32 %v6538, %v6538
            %v6603 = vmul.f32 %v6539, %v6539
            %v6604 = vmul.f32 %v6540, %v6540
            %v6605 = vadd.f32 %v6541, %v6542
            %v6606 = vadd.f32 %v6605, %v6543
            %v6607 = vadd.f32 %v6606, %v6544
            %v6608 = vadd.f32 %v6607, %v6545
            %v6609 = vadd.f32 %v6608, %v6546
            %v6610 = vadd.f32 %v6609, %v6547
            %v6611 = vadd.f32 %v6610, %v6548
            %v6612 = vadd.f32 %v6611, %v6549
            %v6613 = vadd.f32 %v6612, %v6550
            %v6614 = vadd.f32 %v6613, %v6551
            %v6615 = vadd.f32 %v6614, %v6552
            %v6616 = vadd.f32 %v6615, %v6553
            %v6617 = vadd.f32 %v6616, %v6554
            %v6618 = vadd.f32 %v6617, %v6555
            %v6619 = vadd.f32 %v6618, %v6556
            %v6620 = vadd.f32 %v6619, %v6557
            %v6621 = vadd.f32 %v6620, %v6558
            %v6622 = vadd.f32 %v6621, %v6559
            %v6623 = vadd.f32 %v6622, %v6560
            %v6624 = vadd.f32 %v6623, %v6561
            %v6625 = vadd.f32 %v6624, %v6562
            %v6626 = vadd.f32 %v6625, %v6563
            %v6627 = vadd.f32 %v6626, %v6564
            %v6628 = vadd.f32 %v6627, %v6565
            %v6629 = vadd.f32 %v6628, %v6566
            %v6630 = vadd.f32 %v6629, %v6567
            %v6631 = vadd.f32 %v6630, %v6568
            %v6632 = vadd.f32 %v6631, %v6569
            %v6633 = vadd.f32 %v6632, %v6570
            %v6634 = vadd.f32 %v6633, %v6571
            %v6635 = vadd.f32 %v6634, %v6572
            %v6636 = vadd.f32 %v6635, %v6573
            %v6637 = vadd.f32 %v6636, %v6574
            %v6638 = vadd.f32 %v6637, %v6575
            %v6639 = vadd.f32 %v6638, %v6576
            %v6640 = vadd.f32 %v6639, %v6577
            %v6641 = vadd.f32 %v6640, %v6578
            %v6642 = vadd.f32 %v6641, %v6579
            %v6643 = vadd.f32 %v6642, %v6580
            %v6644 = vadd.f32 %v6643, %v6581
            %v6645 = vadd.f32 %v6644, %v6582
            %v6646 = vadd.f32 %v6645, %v6583
            %v6647 = vadd.f32 %v6646, %v6584
            %v6648 = vadd.f32 %v6647, %v6585
            %v6649 = vadd.f32 %v6648, %v6586
            %v6650 = vadd.f32 %v6649, %v6587
            %v6651 = vadd.f32 %v6650, %v6588
            %v6652 = vadd.f32 %v6651, %v6589
            %v6653 = vadd.f32 %v6652, %v6590
            %v6654 = vadd.f32 %v6653, %v6591
            %v6655 = vadd.f32 %v6654, %v6592
            %v6656 = vadd.f32 %v6655, %v6593
            %v6657 = vadd.f32 %v6656, %v6594
            %v6658 = vadd.f32 %v6657, %v6595
            %v6659 = vadd.f32 %v6658, %v6596
            %v6660 = vadd.f32 %v6659, %v6597
            %v6661 = vadd.f32 %v6660, %v6598
            %v6662 = vadd.f32 %v6661, %v6599
            %v6663 = vadd.f32 %v6662, %v6600
            %v6664 = vadd.f32 %v6663, %v6601
            %v6665 = vadd.f32 %v6664, %v6602
            %v6666 = vadd.f32 %v6665, %v6603
            %v6667 = vadd.f32 %v6666, %v6604
            %v6668 = vrot.slane %v6667, 4
            %v6669 = vadd.f32 %v6667, %v6668
            %v6670 = vrot.slane %v6669, 2
            %v6671 = vadd.f32 %v6669, %v6670
            %v6672 = vrot.slane %v6671, 1
            %v6673 = vadd.f32 %v6671, %v6672
            %v6674 = vmul.f32 %v6673, %v6475
            %v6675 = vadd.f32 %v6674, 1e-05
            %v6676 = vrsqrt.pop %v6675
            %v6677 = vmul.f32 %v6676, %v6675
            %v6678 = vmul.f32 %v6677, %v6676
            %v6679 = vmul.f32 0.5, %v6678
            %v6680 = vsub.f32 1.5, %v6679
            %v6681 = vmul.f32 %v6676, %v6680
            %vm6682 = vweird.f32 %v6675
            %vm6683 = vweird.f32 %v6676
            %vm6684 = vmor %vm6682, %vm6683
            %v6685 = vsel %vm6684, %v6676, %v6681
            %v6686 = vmul.f32 %v6334, %v6685
            %v6687 = vmul.f32 %v6476, %v6686
            %v6688 = vsub.f32 %v6335, %v6687
            %6689 = vst [vmem:[#allocation4 + $0x2] sm:$0x1] %v6686
            %6690 = vst [vmem:[#allocation4 + $0x3] sm:$0x1] %v6688
          $region60: #{tpu_custom_call.1} parent=55 // pred_fallthru
            _
          %s6691 = smul.u32 %s22, 256
          %s6692 = scalar_lea.vmem [#allocation3], %s6691
          %v6693 = vld [vmem:[%s6692] sm:$0xff]
          %v6694 = vld [vmem:[%s6692 + $0x8] sm:$0xff]
          %v6695 = vld [vmem:[%s6692 + $0x10] sm:$0xff]
          %v6696 = vld [vmem:[%s6692 + $0x18] sm:$0xff]
          %v6697 = vld [vmem:[%s6692 + $0x20] sm:$0xff]
          %v6698 = vld [vmem:[%s6692 + $0x28] sm:$0xff]
          %v6699 = vld [vmem:[%s6692 + $0x30] sm:$0xff]
          %v6700 = vld [vmem:[%s6692 + $0x38] sm:$0xff]
          %v6701 = vld [vmem:[%s6692 + $0x40] sm:$0xff]
          %v6702 = vld [vmem:[%s6692 + $0x48] sm:$0xff]
          %v6703 = vld [vmem:[%s6692 + $0x50] sm:$0xff]
          %v6704 = vld [vmem:[%s6692 + $0x58] sm:$0xff]
          %v6705 = vld [vmem:[%s6692 + $0x60] sm:$0xff]
          %v6706 = vld [vmem:[%s6692 + $0x68] sm:$0xff]
          %v6707 = vld [vmem:[%s6692 + $0x70] sm:$0xff]
          %v6708 = vld [vmem:[%s6692 + $0x78] sm:$0xff]
          %v6709 = vld [vmem:[%s6692 + $0x80] sm:$0xff]
          %v6710 = vld [vmem:[%s6692 + $0x88] sm:$0xff]
          %v6711 = vld [vmem:[%s6692 + $0x90] sm:$0xff]
          %v6712 = vld [vmem:[%s6692 + $0x98] sm:$0xff]
          %v6713 = vld [vmem:[%s6692 + $0xa0] sm:$0xff]
          %v6714 = vld [vmem:[%s6692 + $0xa8] sm:$0xff]
          %v6715 = vld [vmem:[%s6692 + $0xb0] sm:$0xff]
          %v6716 = vld [vmem:[%s6692 + $0xb8] sm:$0xff]
          %v6717 = vld [vmem:[%s6692 + $0xc0] sm:$0xff]
          %v6718 = vld [vmem:[%s6692 + $0xc8] sm:$0xff]
          %v6719 = vld [vmem:[%s6692 + $0xd0] sm:$0xff]
          %v6720 = vld [vmem:[%s6692 + $0xd8] sm:$0xff]
          %v6721 = vld [vmem:[%s6692 + $0xe0] sm:$0xff]
          %v6722 = vld [vmem:[%s6692 + $0xe8] sm:$0xff]
          %v6723 = vld [vmem:[%s6692 + $0xf0] sm:$0xff]
          %v6724 = vld [vmem:[%s6692 + $0xf8] sm:$0xff]
          %v6725 = vld [vmem:[#allocation4 + $0x2] sm:$0x1]
          %v6726 = vperm.slane %v6725, 0
          %v6727 = vmul.f32 %v6693, %v6726
          %v6728 = vmul.f32 %v6694, %v6726
          %v6729 = vmul.f32 %v6695, %v6726
          %v6730 = vmul.f32 %v6696, %v6726
          %v6731 = vmul.f32 %v6697, %v6726
          %v6732 = vmul.f32 %v6698, %v6726
          %v6733 = vmul.f32 %v6699, %v6726
          %v6734 = vmul.f32 %v6700, %v6726
          %v6735 = vmul.f32 %v6701, %v6726
          %v6736 = vmul.f32 %v6702, %v6726
          %v6737 = vmul.f32 %v6703, %v6726
          %v6738 = vmul.f32 %v6704, %v6726
          %v6739 = vmul.f32 %v6705, %v6726
          %v6740 = vmul.f32 %v6706, %v6726
          %v6741 = vmul.f32 %v6707, %v6726
          %v6742 = vmul.f32 %v6708, %v6726
          %v6743 = vmul.f32 %v6709, %v6726
          %v6744 = vmul.f32 %v6710, %v6726
          %v6745 = vmul.f32 %v6711, %v6726
          %v6746 = vmul.f32 %v6712, %v6726
          %v6747 = vmul.f32 %v6713, %v6726
          %v6748 = vmul.f32 %v6714, %v6726
          %v6749 = vmul.f32 %v6715, %v6726
          %v6750 = vmul.f32 %v6716, %v6726
          %v6751 = vmul.f32 %v6717, %v6726
          %v6752 = vmul.f32 %v6718, %v6726
          %v6753 = vmul.f32 %v6719, %v6726
          %v6754 = vmul.f32 %v6720, %v6726
          %v6755 = vmul.f32 %v6721, %v6726
          %v6756 = vmul.f32 %v6722, %v6726
          %v6757 = vmul.f32 %v6723, %v6726
          %v6758 = vmul.f32 %v6724, %v6726
          %v6759 = vld [vmem:[#allocation4 + $0x3] sm:$0x1]
          %v6760 = vperm.slane %v6759, 0
          %v6761 = vadd.f32 %v6727, %v6760
          %v6762 = vadd.f32 %v6728, %v6760
          %v6763 = vadd.f32 %v6729, %v6760
          %v6764 = vadd.f32 %v6730, %v6760
          %v6765 = vadd.f32 %v6731, %v6760
          %v6766 = vadd.f32 %v6732, %v6760
          %v6767 = vadd.f32 %v6733, %v6760
          %v6768 = vadd.f32 %v6734, %v6760
          %v6769 = vadd.f32 %v6735, %v6760
          %v6770 = vadd.f32 %v6736, %v6760
          %v6771 = vadd.f32 %v6737, %v6760
          %v6772 = vadd.f32 %v6738, %v6760
          %v6773 = vadd.f32 %v6739, %v6760
          %v6774 = vadd.f32 %v6740, %v6760
          %v6775 = vadd.f32 %v6741, %v6760
          %v6776 = vadd.f32 %v6742, %v6760
          %v6777 = vadd.f32 %v6743, %v6760
          %v6778 = vadd.f32 %v6744, %v6760
          %v6779 = vadd.f32 %v6745, %v6760
          %v6780 = vadd.f32 %v6746, %v6760
          %v6781 = vadd.f32 %v6747, %v6760
          %v6782 = vadd.f32 %v6748, %v6760
          %v6783 = vadd.f32 %v6749, %v6760
          %v6784 = vadd.f32 %v6750, %v6760
          %v6785 = vadd.f32 %v6751, %v6760
          %v6786 = vadd.f32 %v6752, %v6760
          %v6787 = vadd.f32 %v6753, %v6760
          %v6788 = vadd.f32 %v6754, %v6760
          %v6789 = vadd.f32 %v6755, %v6760
          %v6790 = vadd.f32 %v6756, %v6760
          %v6791 = vadd.f32 %v6757, %v6760
          %v6792 = vadd.f32 %v6758, %v6760
          %v6793 = vmax.f32 %v6761, 0.0
          %v6794 = vmax.f32 %v6762, 0.0
          %v6795 = vmax.f32 %v6763, 0.0
          %v6796 = vmax.f32 %v6764, 0.0
          %v6797 = vmax.f32 %v6765, 0.0
          %v6798 = vmax.f32 %v6766, 0.0
          %v6799 = vmax.f32 %v6767, 0.0
          %v6800 = vmax.f32 %v6768, 0.0
          %v6801 = vmax.f32 %v6769, 0.0
          %v6802 = vmax.f32 %v6770, 0.0
          %v6803 = vmax.f32 %v6771, 0.0
          %v6804 = vmax.f32 %v6772, 0.0
          %v6805 = vmax.f32 %v6773, 0.0
          %v6806 = vmax.f32 %v6774, 0.0
          %v6807 = vmax.f32 %v6775, 0.0
          %v6808 = vmax.f32 %v6776, 0.0
          %v6809 = vmax.f32 %v6777, 0.0
          %v6810 = vmax.f32 %v6778, 0.0
          %v6811 = vmax.f32 %v6779, 0.0
          %v6812 = vmax.f32 %v6780, 0.0
          %v6813 = vmax.f32 %v6781, 0.0
          %v6814 = vmax.f32 %v6782, 0.0
          %v6815 = vmax.f32 %v6783, 0.0
          %v6816 = vmax.f32 %v6784, 0.0
          %v6817 = vmax.f32 %v6785, 0.0
          %v6818 = vmax.f32 %v6786, 0.0
          %v6819 = vmax.f32 %v6787, 0.0
          %v6820 = vmax.f32 %v6788, 0.0
          %v6821 = vmax.f32 %v6789, 0.0
          %v6822 = vmax.f32 %v6790, 0.0
          %v6823 = vmax.f32 %v6791, 0.0
          %v6824 = vmax.f32 %v6792, 0.0
          %s6825 = scalar_lea.vmem [#allocation5], %s6691
          %6826 = vst [vmem:[%s6825] sm:$0xff] %v6793
          %6827 = vst [vmem:[%s6825 + $0x8] sm:$0xff] %v6794
          %6828 = vst [vmem:[%s6825 + $0x10] sm:$0xff] %v6795
          %6829 = vst [vmem:[%s6825 + $0x18] sm:$0xff] %v6796
          %6830 = vst [vmem:[%s6825 + $0x20] sm:$0xff] %v6797
          %6831 = vst [vmem:[%s6825 + $0x28] sm:$0xff] %v6798
          %6832 = vst [vmem:[%s6825 + $0x30] sm:$0xff] %v6799
          %6833 = vst [vmem:[%s6825 + $0x38] sm:$0xff] %v6800
          %6834 = vst [vmem:[%s6825 + $0x40] sm:$0xff] %v6801
          %6835 = vst [vmem:[%s6825 + $0x48] sm:$0xff] %v6802
          %6836 = vst [vmem:[%s6825 + $0x50] sm:$0xff] %v6803
          %6837 = vst [vmem:[%s6825 + $0x58] sm:$0xff] %v6804
          %6838 = vst [vmem:[%s6825 + $0x60] sm:$0xff] %v6805
          %6839 = vst [vmem:[%s6825 + $0x68] sm:$0xff] %v6806
          %6840 = vst [vmem:[%s6825 + $0x70] sm:$0xff] %v6807
          %6841 = vst [vmem:[%s6825 + $0x78] sm:$0xff] %v6808
          %6842 = vst [vmem:[%s6825 + $0x80] sm:$0xff] %v6809
          %6843 = vst [vmem:[%s6825 + $0x88] sm:$0xff] %v6810
          %6844 = vst [vmem:[%s6825 + $0x90] sm:$0xff] %v6811
          %6845 = vst [vmem:[%s6825 + $0x98] sm:$0xff] %v6812
          %6846 = vst [vmem:[%s6825 + $0xa0] sm:$0xff] %v6813
          %6847 = vst [vmem:[%s6825 + $0xa8] sm:$0xff] %v6814
          %6848 = vst [vmem:[%s6825 + $0xb0] sm:$0xff] %v6815
          %6849 = vst [vmem:[%s6825 + $0xb8] sm:$0xff] %v6816
          %6850 = vst [vmem:[%s6825 + $0xc0] sm:$0xff] %v6817
          %6851 = vst [vmem:[%s6825 + $0xc8] sm:$0xff] %v6818
          %6852 = vst [vmem:[%s6825 + $0xd0] sm:$0xff] %v6819
          %6853 = vst [vmem:[%s6825 + $0xd8] sm:$0xff] %v6820
          %6854 = vst [vmem:[%s6825 + $0xe0] sm:$0xff] %v6821
          %6855 = vst [vmem:[%s6825 + $0xe8] sm:$0xff] %v6822
          %6856 = vst [vmem:[%s6825 + $0xf0] sm:$0xff] %v6823
          %6857 = vst [vmem:[%s6825 + $0xf8] sm:$0xff] %v6824
        $region56: #{tpu_custom_call.1} parent=39 // pred_fallthru
          _
        // Predicated region
        $region61: #{tpu_custom_call.1} parent=39 // pred_check
          %p6858 = pneg %p157
        $region62: #{tpu_custom_call.1} parent=39 // pred_check_branch
          %6860 = sbr.rel (%p6858) target = $region64
        $region63: #{tpu_custom_call.1} parent=39 // pred_region
          %6862 = vsyncadd [#allocation6], 0
          %s6863 = sshll.u32 [#allocation5], 4
          %s6864 = int_to_ptr.vmem [resolvable:$true] %s6863
          %s6865 = sshll.u32 %s5, 4
          %s6866 = int_to_ptr.hbm [resolvable:$true] %s6865
          %6871 = dma.vmem_to_hbm [thread:$0]  %s6864, 8192, %s6866, [#allocation6], 128, 128, 8
        $region64: #{tpu_custom_call.1} parent=39 // pred_fallthru
          _
        // Predicated region
        $region65: #{tpu_custom_call.1} parent=39 // pred_check
          %p6872 = pneg %p157
        $region66: #{tpu_custom_call.1} parent=39 // pred_check_branch
          %6874 = sbr.rel (%p6872) target = $region68
        $region67: #{tpu_custom_call.1} parent=39 // pred_region
          %6876 = dma.done [#allocation6], 8192
        $region68: #{tpu_custom_call.1} parent=39 // pred_fallthru
          _
      $region40: #{tpu_custom_call.1} parent=5 // pred_fallthru
        _
      %p6877 = scmp.le.s32.totalorder 2, %s12
      // Predicated region
      $region69: #{tpu_custom_call.1} parent=5 // pred_check
        %p6878 = pneg %p6877
      $region70: #{tpu_custom_call.1} parent=5 // pred_check_branch
        %6880 = sbr.rel (%p6878) target = $region72
      $region71: #{tpu_custom_call.1} parent=5 // pred_region
        %s6881 = ssub.s32 %s12, 2
      $region72: #{tpu_custom_call.1} parent=5 // pred_fallthru
        _
    $region6: #{tpu_custom_call.1} parent=1 // loop_footer
      %s16 = sadd.s32 1, %s12
    $region7: #{tpu_custom_call.1} parent=1 // loop_footer_branch
      %11 = sbr.rel target = $region3
    $region8: #{tpu_custom_call.1} parent=1 // loop_exit
      _
    %6882 = vsyncpa [#allocation6], 1
    %s6883 = scalar_lea.sflag [#allocation6], 1
    %6884 = vsyncpa %s6883, 1

</llo_original>
